<compile_context>
chip_gen: v7x
topology: tpu7x:2x2x1
jax: 0.10.0
libtpu: 0.0.40
codegen_flags: <defaults>
</compile_context>

<pallas_src>
import jax
import jax.numpy as jnp
from jax.experimental import pallas as pl
from jax.experimental.pallas import tpu as pltpu

LATENT = 32     # latent_dim
HIDDEN = 64     # mlp_hidden_size
COORD = 3       # coordinates_dim
NODE_F = 5      # node_features_dim
EDGE_F = 1      # edge_features_dim (kernel's edge-attr term assumes EDGE_F == 1)
K_MIX = 8       # num_mixture_components
OUT = 3         # out_channels_node
NUM_GNN = 3     # num_gnn_layers

MXU_DTYPE = jnp.bfloat16    # dense *weight* matmuls only; data-path gathers stay f32


def _mm_w(a, w):
    """Dense weight matmul: bf16 operands, f32 accumulation."""
    return jnp.dot(a.astype(MXU_DTYPE), w.astype(MXU_DTYPE),
                   preferred_element_type=jnp.float32)


def _mm_g(onehot, v):
    """Gather/scatter matmul with 0/1 one-hots: f32 operands (no bf16 rounding of data)."""
    return jnp.dot(onehot, v, preferred_element_type=jnp.float32)


# ---------------------------------------------------------------------------
# One fused kernel per graph: mlp_x + mlp_h + NUM_GNN x EGNN + fc_mu
# ---------------------------------------------------------------------------
def _eqgraph_kernel(
        src_ref, dst_ref, dstr_ref, xh_ref, a_ref,                 # per-graph data
        win1_ref, bin1_ref, win2_ref, bin2_ref,                    # fused mlp_x|mlp_h
        we1_ref, wed_ref, wea_ref, be1_ref, we2_ref, be2_ref,      # phi_e
        wx1_ref, bx1_ref, wx2_ref, bx2_ref,                        # phi_x
        wh1_ref, bh1_ref, wh2_ref, bh2_ref,                        # phi_h
        wm1_ref, bm1_ref, wm2_ref, bm2_ref,                        # fc_mu
        mu_ref):
    N = xh_ref.shape[0]
    E = a_ref.shape[0]
    L = LATENT
    L2 = 2 * LATENT

    # ---- fused input MLPs (block-diagonal weights) -> packed slab xh = [x_l | h_l] ----
    z = jax.nn.silu(_mm_w(xh_ref[...], win1_ref[...]) + bin1_ref[...])      # [N, 2H]
    xh = _mm_w(z, win2_ref[...]) + bin2_ref[...]                            # [N, 2L] f32

    # ---- edge one-hots, built once (edge_index is layer-invariant) ----
    iota_en = jax.lax.broadcasted_iota(jnp.int32, (E, N), 1)
    iota_ne = jax.lax.broadcasted_iota(jnp.int32, (N, E), 0)
    g_src = (iota_en == src_ref[...]).astype(jnp.float32)    # [E,N] gathers x_j | h_j
    g_dst = (iota_en == dst_ref[...]).astype(jnp.float32)    # [E,N] gathers x_i | h_i
    s_dst = (iota_ne == dstr_ref[...]).astype(jnp.float32)   # [N,E] pre-transposed scatter-add

    xmask_e = jax.lax.broadcasted_iota(jnp.int32, (E, L2), 1) < L
    xmask_n = jax.lax.broadcasted_iota(jnp.int32, (N, L2), 1) < L
    a_e = a_ref[...]                                          # [E, 1]  (EDGE_F == 1)

    for l in range(NUM_GNN):                                  # unrolled, static weight index
        xi_hi = _mm_g(g_dst, xh)                              # [E,2L] = [x_i | h_i]
        xj_hj = _mm_g(g_src, xh)                              # [E,2L] = [x_j | h_j]
        eij = jnp.concatenate([xi_hi, xj_hj], axis=-1)        # [E,4L] 128-lane edge slab

        diffp = jnp.where(xmask_e, xi_hi - xj_hj, 0.0)        # [x_i - x_j | 0]
        dist = jnp.sum(diffp * diffp, axis=-1, keepdims=True)                 # [E,1]

        # phi_e: lin1 fused to one K=128 matmul; rank-1 dist/edge-attr terms on the VPU
        e_h = jax.nn.silu(_mm_w(eij, we1_ref[l])
                          + dist * wed_ref[l] + a_e * wea_ref[l] + be1_ref[l])
        m64 = jax.nn.silu(_mm_w(e_h, we2_ref[l]) + be2_ref[l])                # [0 | m]

        # phi_x: hidden layer on MXU, final H->1 projection on VPU + lane reduce
        px = jax.nn.silu(_mm_w(m64, wx1_ref[l]) + bx1_ref[l])
        wgt = jnp.sum(px * wx2_ref[l], axis=-1, keepdims=True) + bx2_ref[l]   # [E,1]

        # packed per-edge message, single scatter-add matmul: agg = [x_agg | m_agg]
        sc_in = diffp * wgt + m64
        agg = _mm_g(s_dst, sc_in)                                             # [N,2L]

        # phi_h: lin1 fused to one K=128 matmul over [x_l|h_l|x_agg|m_agg]
        hm = jnp.concatenate([xh, agg], axis=-1)                              # [N,4L]
        h_pre = jax.nn.silu(_mm_w(hm, wh1_ref[l]) + bh1_ref[l])
        delta = _mm_w(h_pre, wh2_ref[l]) + bh2_ref[l]                         # [0 | dh]

        # residual x- and h-updates on the packed, lane-dense carry
        xh = xh + jnp.where(xmask_n, agg, 0.0) + delta

    # ---- fc_mu on packed [x_l | h_l] (torch.cat folded into the weight) ----
    mu_h = jax.nn.silu(_mm_w(xh, wm1_ref[...]) + bm1_ref[...])
    mu_ref[...] = _mm_w(mu_h, wm2_ref[...]) + bm2_ref[...]


# ---------------------------------------------------------------------------
# Parameter init (torch.nn.Linear-style uniform(-1/sqrt(fan_in), .))
# ---------------------------------------------------------------------------
def init_params(key):
    keys = iter(jax.random.split(key, 64))

    def lin(fan_in, fan_out):
        k1, k2 = jax.random.split(next(keys))
        lim = 1.0 / (fan_in ** 0.5)
        w = jax.random.uniform(k1, (fan_in, fan_out), jnp.float32, -lim, lim)
        b = jax.random.uniform(k2, (1, fan_out), jnp.float32, -lim, lim)
        return w, b

    p = {}
    p["mlp_x"] = lin(COORD, HIDDEN) + lin(HIDDEN, LATENT)
    p["mlp_h"] = lin(NODE_F, HIDDEN) + lin(HIDDEN, LATENT)
    p["gnn"] = []
    for _ in range(NUM_GNN):
        p["gnn"].append({
            "phi_e": lin(2 * LATENT + 1 + EDGE_F, HIDDEN) + lin(HIDDEN, LATENT),
            "phi_x": lin(LATENT, HIDDEN) + lin(HIDDEN, 1),
            "phi_h": lin(LATENT + LATENT, HIDDEN) + lin(HIDDEN, LATENT),
        })
    p["fc_mu"] = lin(2 * LATENT, HIDDEN) + lin(HIDDEN, K_MIX * OUT)
    # fc_logvar / fc_mixture exist in __init__ but are unused for stochastic=False.
    return p


# ---------------------------------------------------------------------------
# One-time packing: block-diagonal / zero-padded / stacked / bf16-cast weights so
# the kernel only issues full-width, lane-aligned matmuls on packed slabs.
# ---------------------------------------------------------------------------
def prepare_params(p):
    assert EDGE_F == 1, "edge-attr VPU-broadcast path assumes a single edge feature"
    L, H = LATENT, HIDDEN
    bf = MXU_DTYPE
    zLH = jnp.zeros((L, H), jnp.float32)
    zHL = jnp.zeros((H, L), jnp.float32)
    z1L = jnp.zeros((1, L), jnp.float32)

    # fused mlp_x | mlp_h (block-diagonal); second weight lands [x_l | h_l] directly
    wxa, bxa, wxb, bxb = p["mlp_x"]
    wha, bha, whb, bhb = p["mlp_h"]
    w_in1 = jnp.block([[wxa, jnp.zeros((COORD, H), jnp.float32)],
                       [jnp.zeros((NODE_F, H), jnp.float32), wha]])      # [8, 2H]
    b_in1 = jnp.concatenate([bxa, bha], axis=1)                          # [1, 2H]
    w_in2 = jnp.block([[wxb, jnp.zeros((H, L), jnp.float32)],
                       [jnp.zeros((H, L), jnp.float32), whb]])           # [2H, 2L]
    b_in2 = jnp.concatenate([bxb, bhb], axis=1)                          # [1, 2L]
    in_mlp = (w_in1.astype(bf), b_in1, w_in2.astype(bf), b_in2)

    acc = {k: [] for k in ("we1", "wed", "wea", "be1", "we2", "be2",
                           "wx1", "bx1", "wx2", "bx2",
                           "wh1", "bh1", "wh2", "bh2")}
    for lp in p["gnn"]:
        w1, b1, w2, b2 = lp["phi_e"]          # w1: [2L+1+EDGE_F, H]
        # fused lin1 weight for the [x_i|h_i|x_j|h_j] 128-lane slab
        acc["we1"].append(jnp.concatenate([zLH, w1[:L], zLH, w1[L:2 * L]], axis=0))
        acc["wed"].append(w1[2 * L:2 * L + 1])       # dist (rank-1, VPU)
        acc["wea"].append(w1[2 * L + 1:2 * L + 2])   # edge_attr (rank-1, VPU)
        acc["be1"].append(b1)
        acc["we2"].append(jnp.concatenate([zHL, w2], axis=1))   # m lands in lanes L:2L
        acc["be2"].append(jnp.concatenate([z1L, b2], axis=1))
        wx1, bx1, wx2, bx2 = lp["phi_x"]
        acc["wx1"].append(jnp.concatenate([zLH, wx1], axis=0))  # picks m from lanes L:2L
        acc["bx1"].append(bx1)
        acc["wx2"].append(wx2.T)                                 # [1,H] row for VPU reduce
        acc["bx2"].append(bx2)
        wh1, bh1, wh2, bh2 = lp["phi_h"]
        # fused lin1 weight for the [x_l|h_l|x_agg|m_agg] 128-lane slab
        acc["wh1"].append(jnp.concatenate([zLH, wh1[:L], zLH, wh1[L:]], axis=0))
        acc["bh1"].append(bh1)
        acc["wh2"].append(jnp.concatenate([zHL, wh2], axis=1))   # dh lands in lanes L:2L
        acc["bh2"].append(jnp.concatenate([z1L, bh2], axis=1))

    st = lambda k, dt=jnp.float32: jnp.stack(acc[k]).astype(dt)
    gnn = (st("we1", bf), st("wed"), st("wea"), st("be1"),
           st("we2", bf), st("be2"),
           st("wx1", bf), st("bx1"), st("wx2"), st("bx2"),
           st("wh1", bf), st("bh1"),
           st("wh2", bf), st("bh2"))

    wm1, bm1, wm2, bm2 = p["fc_mu"]
    fc_mu = (wm1.astype(bf), bm1, wm2.astype(bf), bm2)
    return {"in_mlp": in_mlp, "gnn": gnn, "fc_mu": fc_mu}


# ---------------------------------------------------------------------------
# Wrapper: batched graphs -> one pallas_call with a parallel grid over graphs
# ---------------------------------------------------------------------------
def eqgraph_forward(prepared, x, h, edge_attr, edge_index):
    single = (x.ndim == 2)
    if single:
        x, h = x[None], h[None]
        edge_attr, edge_index = edge_attr[None], edge_index[None]
    G, N, _ = x.shape
    E = edge_attr.shape[1]

    xh_in = jnp.concatenate([x, h], axis=-1).astype(jnp.float32)   # [G, N, COORD+NODE_F]
    ei = edge_index.astype(jnp.int32)
    src_col = ei[:, 0, :, None]        # [G, E, 1]  source j (gather layout)
    dst_col = ei[:, 1, :, None]        # [G, E, 1]  target i (gather layout)
    dst_row = ei[:, 1:2, :]            # [G, 1, E]  target i (scatter layout, pre-transposed)
    ea = edge_attr.astype(jnp.float32)

    weight_args = (*prepared["in_mlp"], *prepared["gnn"], *prepared["fc_mu"])

    def _blk(shape):
        return pl.BlockSpec((None,) + shape, lambda g: (g, 0, 0))

    def _full(a):
        if a.ndim == 2:
            return pl.BlockSpec(a.shape, lambda g: (0, 0))
        return pl.BlockSpec(a.shape, lambda g: (0, 0, 0))

    in_specs = ([_blk((E, 1)), _blk((E, 1)), _blk((1, E)),
                 _blk((N, COORD + NODE_F)), _blk((E, EDGE_F))]
                + [_full(w) for w in weight_args])

    # Scoped-VMEM budget: one-hots (3*E*N f32) + edge/node intermediates + weights,
    # with 2x headroom, min 32 MiB, capped at v7x's 64 MiB physical VMEM.
    est = 4 * (3 * E * N + 14 * E * 4 * LATENT + 10 * N * 4 * LATENT) + 4 * 1024 * 1024
    vmem_limit = int(min(64 * 2 ** 20, max(32 * 2 ** 20, 2 * est)))

    mu = pl.pallas_call(
        _eqgraph_kernel,
        grid=(G,),
        out_shape=jax.ShapeDtypeStruct((G, N, K_MIX * OUT), jnp.float32),
        in_specs=in_specs,
        out_specs=pl.BlockSpec((None, N, K_MIX * OUT), lambda g: (g, 0, 0)),
        compiler_params=pltpu.CompilerParams(
            dimension_semantics=("parallel",),      # shards graphs across TCs on v7x
            vmem_limit_bytes=vmem_limit),
    )(src_col, dst_col, dst_row, xh_in, ea, *weight_args)

    mu = mu.reshape(G, N, K_MIX, OUT)   # stochastic=False, K>1: squeeze(1) is a no-op
    return mu[0] if single else mu


if __name__ == "__main__":
    key = jax.random.PRNGKey(0)
    kp, kx, kh, ka, ke = jax.random.split(key, 5)

    G, N, E = 4, 8, 16                  # small batched example: 4 graphs per launch
    params = init_params(kp)
    prepared = prepare_params(params)

    x = jax.random.normal(kx, (G, N, COORD), dtype=jnp.float32)
    h = jax.random.normal(kh, (G, N, NODE_F), dtype=jnp.float32)
    edge_attr = jax.random.normal(ka, (G, E, EDGE_F), dtype=jnp.float32)
    edge_index = jax.random.randint(ke, (G, 2, E), 0, N, dtype=jnp.int32)

    out = eqgraph_forward(prepared, x, h, edge_attr, edge_index)
    out = jax.block_until_ready(out)
    assert out.shape == (G, N, K_MIX, OUT) and out.dtype == jnp.float32
    assert bool(jnp.isfinite(out).all())
    print("KERNEL_OK")
</pallas_src>

<mosaic_0001>
module attributes {stable_mosaic.version = 11 : i64} {
  func.func @_eqgraph_kernel(%arg0: i32, %arg1: memref<1x16x1xi32, #tpu.memory_space<vmem>>, %arg2: memref<1x16x1xi32, #tpu.memory_space<vmem>>, %arg3: memref<1x1x16xi32, #tpu.memory_space<vmem>>, %arg4: memref<1x8x8xf32, #tpu.memory_space<vmem>>, %arg5: memref<1x16x1xf32, #tpu.memory_space<vmem>>, %arg6: memref<8x128xbf16, #tpu.memory_space<vmem>>, %arg7: memref<1x128xf32, #tpu.memory_space<vmem>>, %arg8: memref<128x64xbf16, #tpu.memory_space<vmem>>, %arg9: memref<1x64xf32, #tpu.memory_space<vmem>>, %arg10: memref<3x128x64xbf16, #tpu.memory_space<vmem>>, %arg11: memref<3x1x64xf32, #tpu.memory_space<vmem>>, %arg12: memref<3x1x64xf32, #tpu.memory_space<vmem>>, %arg13: memref<3x1x64xf32, #tpu.memory_space<vmem>>, %arg14: memref<3x64x64xbf16, #tpu.memory_space<vmem>>, %arg15: memref<3x1x64xf32, #tpu.memory_space<vmem>>, %arg16: memref<3x64x64xbf16, #tpu.memory_space<vmem>>, %arg17: memref<3x1x64xf32, #tpu.memory_space<vmem>>, %arg18: memref<3x1x64xf32, #tpu.memory_space<vmem>>, %arg19: memref<3x1x1xf32, #tpu.memory_space<vmem>>, %arg20: memref<3x128x64xbf16, #tpu.memory_space<vmem>>, %arg21: memref<3x1x64xf32, #tpu.memory_space<vmem>>, %arg22: memref<3x64x64xbf16, #tpu.memory_space<vmem>>, %arg23: memref<3x1x64xf32, #tpu.memory_space<vmem>>, %arg24: memref<64x64xbf16, #tpu.memory_space<vmem>>, %arg25: memref<1x64xf32, #tpu.memory_space<vmem>>, %arg26: memref<64x24xbf16, #tpu.memory_space<vmem>>, %arg27: memref<1x24xf32, #tpu.memory_space<vmem>>, %arg28: memref<1x8x24xf32, #tpu.memory_space<vmem>>) attributes {dimension_semantics = [#tpu.dimension_semantics<parallel>], iteration_bounds = array<i64: 4>, scalar_prefetch = 0 : i64, scratch_operands = 0 : i64, tpu.core_type = #tpu.core_type<tc>, window_params = [{transform_indices = @transform_0, window_bounds = array<i64: 1, 16, 1>}, {transform_indices = @transform_1, window_bounds = array<i64: 1, 16, 1>}, {transform_indices = @transform_2, window_bounds = array<i64: 1, 1, 16>}, {transform_indices = @transform_3, window_bounds = array<i64: 1, 8, 8>}, {transform_indices = @transform_4, window_bounds = array<i64: 1, 16, 1>}, {pipeline_mode = #tpu.pipeline_mode<synchronous>, transform_indices = @transform_5, window_bounds = array<i64: 8, 128>}, {pipeline_mode = #tpu.pipeline_mode<synchronous>, transform_indices = @transform_6, window_bounds = array<i64: 1, 128>}, {pipeline_mode = #tpu.pipeline_mode<synchronous>, transform_indices = @transform_7, window_bounds = array<i64: 128, 64>}, {pipeline_mode = #tpu.pipeline_mode<synchronous>, transform_indices = @transform_8, window_bounds = array<i64: 1, 64>}, {pipeline_mode = #tpu.pipeline_mode<synchronous>, transform_indices = @transform_9, window_bounds = array<i64: 3, 128, 64>}, {pipeline_mode = #tpu.pipeline_mode<synchronous>, transform_indices = @transform_10, window_bounds = array<i64: 3, 1, 64>}, {pipeline_mode = #tpu.pipeline_mode<synchronous>, transform_indices = @transform_11, window_bounds = array<i64: 3, 1, 64>}, {pipeline_mode = #tpu.pipeline_mode<synchronous>, transform_indices = @transform_12, window_bounds = array<i64: 3, 1, 64>}, {pipeline_mode = #tpu.pipeline_mode<synchronous>, transform_indices = @transform_13, window_bounds = array<i64: 3, 64, 64>}, {pipeline_mode = #tpu.pipeline_mode<synchronous>, transform_indices = @transform_14, window_bounds = array<i64: 3, 1, 64>}, {pipeline_mode = #tpu.pipeline_mode<synchronous>, transform_indices = @transform_15, window_bounds = array<i64: 3, 64, 64>}, {pipeline_mode = #tpu.pipeline_mode<synchronous>, transform_indices = @transform_16, window_bounds = array<i64: 3, 1, 64>}, {pipeline_mode = #tpu.pipeline_mode<synchronous>, transform_indices = @transform_17, window_bounds = array<i64: 3, 1, 64>}, {pipeline_mode = #tpu.pipeline_mode<synchronous>, transform_indices = @transform_18, window_bounds = array<i64: 3, 1, 1>}, {pipeline_mode = #tpu.pipeline_mode<synchronous>, transform_indices = @transform_19, window_bounds = array<i64: 3, 128, 64>}, {pipeline_mode = #tpu.pipeline_mode<synchronous>, transform_indices = @transform_20, window_bounds = array<i64: 3, 1, 64>}, {pipeline_mode = #tpu.pipeline_mode<synchronous>, transform_indices = @transform_21, window_bounds = array<i64: 3, 64, 64>}, {pipeline_mode = #tpu.pipeline_mode<synchronous>, transform_indices = @transform_22, window_bounds = array<i64: 3, 1, 64>}, {pipeline_mode = #tpu.pipeline_mode<synchronous>, transform_indices = @transform_23, window_bounds = array<i64: 64, 64>}, {pipeline_mode = #tpu.pipeline_mode<synchronous>, transform_indices = @transform_24, window_bounds = array<i64: 1, 64>}, {pipeline_mode = #tpu.pipeline_mode<synchronous>, transform_indices = @transform_25, window_bounds = array<i64: 64, 24>}, {pipeline_mode = #tpu.pipeline_mode<synchronous>, transform_indices = @transform_26, window_bounds = array<i64: 1, 24>}, {transform_indices = @transform_27, window_bounds = array<i64: 1, 8, 24>}]} {
    %c0 = arith.constant 0 : index
    %c0_0 = arith.constant 0 : index
    %c0_1 = arith.constant 0 : index
    %0 = vector.load %arg4[%c0, %c0_0, %c0_1] : memref<1x8x8xf32, #tpu.memory_space<vmem>>, vector<1x8x8xf32>
    %1 = vector.shape_cast %0 : vector<1x8x8xf32> to vector<8x8xf32>
    %c0_2 = arith.constant 0 : index
    %c0_3 = arith.constant 0 : index
    %2 = vector.load %arg6[%c0_2, %c0_3] : memref<8x128xbf16, #tpu.memory_space<vmem>>, vector<8x128xbf16>
    %3 = arith.truncf %1 : vector<8x8xf32> to vector<8x8xbf16>
    %cst = arith.constant dense<0.000000e+00> : vector<8x128xf32>
    %4 = tpu.matmul %3, %2, %cst {dimension_numbers = #tpu.dot_dimension_numbers<[1], [0], [0], [1], [0, 0, 1, 1], [], []>} : vector<8x8xbf16>, vector<8x128xbf16>, vector<8x128xf32> -> vector<8x128xf32>
    %c0_4 = arith.constant 0 : index
    %c0_5 = arith.constant 0 : index
    %5 = vector.load %arg7[%c0_4, %c0_5] : memref<1x128xf32, #tpu.memory_space<vmem>>, vector<1x128xf32>
    %6 = vector.broadcast %5 : vector<1x128xf32> to vector<8x128xf32>
    %7 = arith.addf %4, %6 : vector<8x128xf32>
    %8 = arith.negf %7 : vector<8x128xf32>
    %9 = math.exp %8 : vector<8x128xf32>
    %cst_6 = arith.constant 1.000000e+00 : f32
    %10 = vector.broadcast %cst_6 : f32 to vector<8x128xf32>
    %11 = arith.addf %10, %9 : vector<8x128xf32>
    %12 = arith.divf %10, %11 : vector<8x128xf32>
    %13 = arith.mulf %7, %12 : vector<8x128xf32>
    %c0_7 = arith.constant 0 : index
    %c0_8 = arith.constant 0 : index
    %14 = vector.load %arg8[%c0_7, %c0_8] : memref<128x64xbf16, #tpu.memory_space<vmem>>, vector<128x64xbf16>
    %15 = arith.truncf %13 : vector<8x128xf32> to vector<8x128xbf16>
    %cst_9 = arith.constant dense<0.000000e+00> : vector<8x64xf32>
    %16 = tpu.matmul %15, %14, %cst_9 {dimension_numbers = #tpu.dot_dimension_numbers<[1], [0], [0], [1], [0, 0, 1, 1], [], []>} : vector<8x128xbf16>, vector<128x64xbf16>, vector<8x64xf32> -> vector<8x64xf32>
    %c0_10 = arith.constant 0 : index
    %c0_11 = arith.constant 0 : index
    %17 = vector.load %arg9[%c0_10, %c0_11] : memref<1x64xf32, #tpu.memory_space<vmem>>, vector<1x64xf32>
    %18 = vector.broadcast %17 : vector<1x64xf32> to vector<8x64xf32>
    %19 = arith.addf %16, %18 : vector<8x64xf32>
    %20 = tpu.iota {dimensions = array<i32: 1>} : vector<16x8xi32>
    %21 = tpu.iota {dimensions = array<i32: 0>} : vector<8x16xi32>
    %c0_12 = arith.constant 0 : index
    %c0_13 = arith.constant 0 : index
    %c0_14 = arith.constant 0 : index
    %22 = vector.load %arg1[%c0_12, %c0_13, %c0_14] : memref<1x16x1xi32, #tpu.memory_space<vmem>>, vector<1x16x1xi32>
    %23 = vector.shape_cast %22 : vector<1x16x1xi32> to vector<16x1xi32>
    %24 = vector.broadcast %23 : vector<16x1xi32> to vector<16x8xi32>
    %25 = arith.cmpi eq, %20, %24 : vector<16x8xi32>
    %26 = arith.extui %25 : vector<16x8xi1> to vector<16x8xi32>
    %27 = arith.sitofp %26 : vector<16x8xi32> to vector<16x8xf32>
    %c0_15 = arith.constant 0 : index
    %c0_16 = arith.constant 0 : index
    %c0_17 = arith.constant 0 : index
    %28 = vector.load %arg2[%c0_15, %c0_16, %c0_17] : memref<1x16x1xi32, #tpu.memory_space<vmem>>, vector<1x16x1xi32>
    %29 = vector.shape_cast %28 : vector<1x16x1xi32> to vector<16x1xi32>
    %30 = vector.broadcast %29 : vector<16x1xi32> to vector<16x8xi32>
    %31 = arith.cmpi eq, %20, %30 : vector<16x8xi32>
    %32 = arith.extui %31 : vector<16x8xi1> to vector<16x8xi32>
    %33 = arith.sitofp %32 : vector<16x8xi32> to vector<16x8xf32>
    %c0_18 = arith.constant 0 : index
    %c0_19 = arith.constant 0 : index
    %c0_20 = arith.constant 0 : index
    %34 = vector.load %arg3[%c0_18, %c0_19, %c0_20] : memref<1x1x16xi32, #tpu.memory_space<vmem>>, vector<1x1x16xi32>
    %35 = vector.shape_cast %34 : vector<1x1x16xi32> to vector<1x16xi32>
    %36 = vector.broadcast %35 : vector<1x16xi32> to vector<8x16xi32>
    %37 = arith.cmpi eq, %21, %36 : vector<8x16xi32>
    %38 = arith.extui %37 : vector<8x16xi1> to vector<8x16xi32>
    %39 = arith.sitofp %38 : vector<8x16xi32> to vector<8x16xf32>
    %40 = tpu.iota {dimensions = array<i32: 1>} : vector<16x64xi32>
    %c32_i32 = arith.constant 32 : i32
    %41 = vector.broadcast %c32_i32 : i32 to vector<16x64xi32>
    %42 = arith.cmpi slt, %40, %41 : vector<16x64xi32>
    %43 = tpu.iota {dimensions = array<i32: 1>} : vector<8x64xi32>
    %c32_i32_21 = arith.constant 32 : i32
    %44 = vector.broadcast %c32_i32_21 : i32 to vector<8x64xi32>
    %45 = arith.cmpi slt, %43, %44 : vector<8x64xi32>
    %c0_22 = arith.constant 0 : index
    %c0_23 = arith.constant 0 : index
    %c0_24 = arith.constant 0 : index
    %46 = vector.load %arg5[%c0_22, %c0_23, %c0_24] : memref<1x16x1xf32, #tpu.memory_space<vmem>>, vector<1x16x1xf32>
    %47 = vector.shape_cast %46 : vector<1x16x1xf32> to vector<16x1xf32>
    %cst_25 = arith.constant dense<0.000000e+00> : vector<16x64xf32>
    %48 = tpu.matmul %33, %19, %cst_25 {dimension_numbers = #tpu.dot_dimension_numbers<[1], [0], [0], [1], [0, 0, 1, 1], [], []>} : vector<16x8xf32>, vector<8x64xf32>, vector<16x64xf32> -> vector<16x64xf32>
    %cst_26 = arith.constant dense<0.000000e+00> : vector<16x64xf32>
    %49 = tpu.matmul %27, %19, %cst_26 {dimension_numbers = #tpu.dot_dimension_numbers<[1], [0], [0], [1], [0, 0, 1, 1], [], []>} : vector<16x8xf32>, vector<8x64xf32>, vector<16x64xf32> -> vector<16x64xf32>
    %50 = tpu.concatenate %48, %49 in 1 : vector<16x64xf32>, vector<16x64xf32> -> vector<16x128xf32>
    %51 = arith.subf %48, %49 : vector<16x64xf32>
    %cst_27 = arith.constant 0.000000e+00 : f32
    %52 = vector.broadcast %cst_27 : f32 to vector<16x64xf32>
    %53 = arith.select %42, %51, %52 : vector<16x64xi1>, vector<16x64xf32>
    %54 = arith.mulf %53, %53 : vector<16x64xf32>
    %cst_28 = arith.constant dense<0.000000e+00> : vector<16xf32>
    %55 = vector.multi_reduction <add>, %54, %cst_28 [1] : vector<16x64xf32> to vector<16xf32>
    %56 = vector.shape_cast %55 : vector<16xf32> to vector<16x1xf32>
    %c0_29 = arith.constant 0 : index
    %c0_30 = arith.constant 0 : index
    %c0_31 = arith.constant 0 : index
    %57 = vector.load %arg10[%c0_29, %c0_30, %c0_31] : memref<3x128x64xbf16, #tpu.memory_space<vmem>>, vector<1x128x64xbf16>
    %58 = vector.shape_cast %57 : vector<1x128x64xbf16> to vector<128x64xbf16>
    %59 = arith.truncf %50 : vector<16x128xf32> to vector<16x128xbf16>
    %cst_32 = arith.constant dense<0.000000e+00> : vector<16x64xf32>
    %60 = tpu.matmul %59, %58, %cst_32 {dimension_numbers = #tpu.dot_dimension_numbers<[1], [0], [0], [1], [0, 0, 1, 1], [], []>} : vector<16x128xbf16>, vector<128x64xbf16>, vector<16x64xf32> -> vector<16x64xf32>
    %c0_33 = arith.constant 0 : index
    %c0_34 = arith.constant 0 : index
    %c0_35 = arith.constant 0 : index
    %61 = vector.load %arg11[%c0_33, %c0_34, %c0_35] : memref<3x1x64xf32, #tpu.memory_space<vmem>>, vector<1x1x64xf32>
    %62 = vector.shape_cast %61 : vector<1x1x64xf32> to vector<1x64xf32>
    %63 = vector.broadcast %56 : vector<16x1xf32> to vector<16x64xf32>
    %64 = vector.broadcast %62 : vector<1x64xf32> to vector<16x64xf32>
    %65 = arith.mulf %63, %64 : vector<16x64xf32>
    %66 = arith.addf %60, %65 : vector<16x64xf32>
    %c0_36 = arith.constant 0 : index
    %c0_37 = arith.constant 0 : index
    %c0_38 = arith.constant 0 : index
    %67 = vector.load %arg12[%c0_36, %c0_37, %c0_38] : memref<3x1x64xf32, #tpu.memory_space<vmem>>, vector<1x1x64xf32>
    %68 = vector.shape_cast %67 : vector<1x1x64xf32> to vector<1x64xf32>
    %69 = vector.broadcast %47 : vector<16x1xf32> to vector<16x64xf32>
    %70 = vector.broadcast %68 : vector<1x64xf32> to vector<16x64xf32>
    %71 = arith.mulf %69, %70 : vector<16x64xf32>
    %72 = arith.addf %66, %71 : vector<16x64xf32>
    %c0_39 = arith.constant 0 : index
    %c0_40 = arith.constant 0 : index
    %c0_41 = arith.constant 0 : index
    %73 = vector.load %arg13[%c0_39, %c0_40, %c0_41] : memref<3x1x64xf32, #tpu.memory_space<vmem>>, vector<1x1x64xf32>
    %74 = vector.shape_cast %73 : vector<1x1x64xf32> to vector<1x64xf32>
    %75 = vector.broadcast %74 : vector<1x64xf32> to vector<16x64xf32>
    %76 = arith.addf %72, %75 : vector<16x64xf32>
    %77 = arith.negf %76 : vector<16x64xf32>
    %78 = math.exp %77 : vector<16x64xf32>
    %cst_42 = arith.constant 1.000000e+00 : f32
    %79 = vector.broadcast %cst_42 : f32 to vector<16x64xf32>
    %80 = arith.addf %79, %78 : vector<16x64xf32>
    %81 = arith.divf %79, %80 : vector<16x64xf32>
    %82 = arith.mulf %76, %81 : vector<16x64xf32>
    %c0_43 = arith.constant 0 : index
    %c0_44 = arith.constant 0 : index
    %c0_45 = arith.constant 0 : index
    %83 = vector.load %arg14[%c0_43, %c0_44, %c0_45] : memref<3x64x64xbf16, #tpu.memory_space<vmem>>, vector<1x64x64xbf16>
    %84 = vector.shape_cast %83 : vector<1x64x64xbf16> to vector<64x64xbf16>
    %85 = arith.truncf %82 : vector<16x64xf32> to vector<16x64xbf16>
    %cst_46 = arith.constant dense<0.000000e+00> : vector<16x64xf32>
    %86 = tpu.matmul %85, %84, %cst_46 {dimension_numbers = #tpu.dot_dimension_numbers<[1], [0], [0], [1], [0, 0, 1, 1], [], []>} : vector<16x64xbf16>, vector<64x64xbf16>, vector<16x64xf32> -> vector<16x64xf32>
    %c0_47 = arith.constant 0 : index
    %c0_48 = arith.constant 0 : index
    %c0_49 = arith.constant 0 : index
    %87 = vector.load %arg15[%c0_47, %c0_48, %c0_49] : memref<3x1x64xf32, #tpu.memory_space<vmem>>, vector<1x1x64xf32>
    %88 = vector.shape_cast %87 : vector<1x1x64xf32> to vector<1x64xf32>
    %89 = vector.broadcast %88 : vector<1x64xf32> to vector<16x64xf32>
    %90 = arith.addf %86, %89 : vector<16x64xf32>
    %91 = arith.negf %90 : vector<16x64xf32>
    %92 = math.exp %91 : vector<16x64xf32>
    %cst_50 = arith.constant 1.000000e+00 : f32
    %93 = vector.broadcast %cst_50 : f32 to vector<16x64xf32>
    %94 = arith.addf %93, %92 : vector<16x64xf32>
    %95 = arith.divf %93, %94 : vector<16x64xf32>
    %96 = arith.mulf %90, %95 : vector<16x64xf32>
    %c0_51 = arith.constant 0 : index
    %c0_52 = arith.constant 0 : index
    %c0_53 = arith.constant 0 : index
    %97 = vector.load %arg16[%c0_51, %c0_52, %c0_53] : memref<3x64x64xbf16, #tpu.memory_space<vmem>>, vector<1x64x64xbf16>
    %98 = vector.shape_cast %97 : vector<1x64x64xbf16> to vector<64x64xbf16>
    %99 = arith.truncf %96 : vector<16x64xf32> to vector<16x64xbf16>
    %cst_54 = arith.constant dense<0.000000e+00> : vector<16x64xf32>
    %100 = tpu.matmul %99, %98, %cst_54 {dimension_numbers = #tpu.dot_dimension_numbers<[1], [0], [0], [1], [0, 0, 1, 1], [], []>} : vector<16x64xbf16>, vector<64x64xbf16>, vector<16x64xf32> -> vector<16x64xf32>
    %c0_55 = arith.constant 0 : index
    %c0_56 = arith.constant 0 : index
    %c0_57 = arith.constant 0 : index
    %101 = vector.load %arg17[%c0_55, %c0_56, %c0_57] : memref<3x1x64xf32, #tpu.memory_space<vmem>>, vector<1x1x64xf32>
    %102 = vector.shape_cast %101 : vector<1x1x64xf32> to vector<1x64xf32>
    %103 = vector.broadcast %102 : vector<1x64xf32> to vector<16x64xf32>
    %104 = arith.addf %100, %103 : vector<16x64xf32>
    %105 = arith.negf %104 : vector<16x64xf32>
    %106 = math.exp %105 : vector<16x64xf32>
    %cst_58 = arith.constant 1.000000e+00 : f32
    %107 = vector.broadcast %cst_58 : f32 to vector<16x64xf32>
    %108 = arith.addf %107, %106 : vector<16x64xf32>
    %109 = arith.divf %107, %108 : vector<16x64xf32>
    %110 = arith.mulf %104, %109 : vector<16x64xf32>
    %c0_59 = arith.constant 0 : index
    %c0_60 = arith.constant 0 : index
    %c0_61 = arith.constant 0 : index
    %111 = vector.load %arg18[%c0_59, %c0_60, %c0_61] : memref<3x1x64xf32, #tpu.memory_space<vmem>>, vector<1x1x64xf32>
    %112 = vector.shape_cast %111 : vector<1x1x64xf32> to vector<1x64xf32>
    %113 = vector.broadcast %112 : vector<1x64xf32> to vector<16x64xf32>
    %114 = arith.mulf %110, %113 : vector<16x64xf32>
    %cst_62 = arith.constant dense<0.000000e+00> : vector<16xf32>
    %115 = vector.multi_reduction <add>, %114, %cst_62 [1] : vector<16x64xf32> to vector<16xf32>
    %116 = vector.shape_cast %115 : vector<16xf32> to vector<16x1xf32>
    %c0_63 = arith.constant 0 : index
    %c0_64 = arith.constant 0 : index
    %c0_65 = arith.constant 0 : index
    %117 = vector.load %arg19[%c0_63, %c0_64, %c0_65] : memref<3x1x1xf32, #tpu.memory_space<vmem>>, vector<1x1x1xf32>
    %118 = vector.shape_cast %117 : vector<1x1x1xf32> to vector<1x1xf32>
    %119 = vector.broadcast %118 : vector<1x1xf32> to vector<16x1xf32>
    %120 = arith.addf %116, %119 : vector<16x1xf32>
    %121 = vector.broadcast %120 : vector<16x1xf32> to vector<16x64xf32>
    %122 = arith.mulf %53, %121 : vector<16x64xf32>
    %123 = arith.addf %122, %96 : vector<16x64xf32>
    %cst_66 = arith.constant dense<0.000000e+00> : vector<8x64xf32>
    %124 = tpu.matmul %39, %123, %cst_66 {dimension_numbers = #tpu.dot_dimension_numbers<[1], [0], [0], [1], [0, 0, 1, 1], [], []>} : vector<8x16xf32>, vector<16x64xf32>, vector<8x64xf32> -> vector<8x64xf32>
    %125 = tpu.concatenate %19, %124 in 1 : vector<8x64xf32>, vector<8x64xf32> -> vector<8x128xf32>
    %c0_67 = arith.constant 0 : index
    %c0_68 = arith.constant 0 : index
    %c0_69 = arith.constant 0 : index
    %126 = vector.load %arg20[%c0_67, %c0_68, %c0_69] : memref<3x128x64xbf16, #tpu.memory_space<vmem>>, vector<1x128x64xbf16>
    %127 = vector.shape_cast %126 : vector<1x128x64xbf16> to vector<128x64xbf16>
    %128 = arith.truncf %125 : vector<8x128xf32> to vector<8x128xbf16>
    %cst_70 = arith.constant dense<0.000000e+00> : vector<8x64xf32>
    %129 = tpu.matmul %128, %127, %cst_70 {dimension_numbers = #tpu.dot_dimension_numbers<[1], [0], [0], [1], [0, 0, 1, 1], [], []>} : vector<8x128xbf16>, vector<128x64xbf16>, vector<8x64xf32> -> vector<8x64xf32>
    %c0_71 = arith.constant 0 : index
    %c0_72 = arith.constant 0 : index
    %c0_73 = arith.constant 0 : index
    %130 = vector.load %arg21[%c0_71, %c0_72, %c0_73] : memref<3x1x64xf32, #tpu.memory_space<vmem>>, vector<1x1x64xf32>
    %131 = vector.shape_cast %130 : vector<1x1x64xf32> to vector<1x64xf32>
    %132 = vector.broadcast %131 : vector<1x64xf32> to vector<8x64xf32>
    %133 = arith.addf %129, %132 : vector<8x64xf32>
    %134 = arith.negf %133 : vector<8x64xf32>
    %135 = math.exp %134 : vector<8x64xf32>
    %cst_74 = arith.constant 1.000000e+00 : f32
    %136 = vector.broadcast %cst_74 : f32 to vector<8x64xf32>
    %137 = arith.addf %136, %135 : vector<8x64xf32>
    %138 = arith.divf %136, %137 : vector<8x64xf32>
    %139 = arith.mulf %133, %138 : vector<8x64xf32>
    %c0_75 = arith.constant 0 : index
    %c0_76 = arith.constant 0 : index
    %c0_77 = arith.constant 0 : index
    %140 = vector.load %arg22[%c0_75, %c0_76, %c0_77] : memref<3x64x64xbf16, #tpu.memory_space<vmem>>, vector<1x64x64xbf16>
    %141 = vector.shape_cast %140 : vector<1x64x64xbf16> to vector<64x64xbf16>
    %142 = arith.truncf %139 : vector<8x64xf32> to vector<8x64xbf16>
    %cst_78 = arith.constant dense<0.000000e+00> : vector<8x64xf32>
    %143 = tpu.matmul %142, %141, %cst_78 {dimension_numbers = #tpu.dot_dimension_numbers<[1], [0], [0], [1], [0, 0, 1, 1], [], []>} : vector<8x64xbf16>, vector<64x64xbf16>, vector<8x64xf32> -> vector<8x64xf32>
    %c0_79 = arith.constant 0 : index
    %c0_80 = arith.constant 0 : index
    %c0_81 = arith.constant 0 : index
    %144 = vector.load %arg23[%c0_79, %c0_80, %c0_81] : memref<3x1x64xf32, #tpu.memory_space<vmem>>, vector<1x1x64xf32>
    %145 = vector.shape_cast %144 : vector<1x1x64xf32> to vector<1x64xf32>
    %146 = vector.broadcast %145 : vector<1x64xf32> to vector<8x64xf32>
    %147 = arith.addf %143, %146 : vector<8x64xf32>
    %cst_82 = arith.constant 0.000000e+00 : f32
    %148 = vector.broadcast %cst_82 : f32 to vector<8x64xf32>
    %149 = arith.select %45, %124, %148 : vector<8x64xi1>, vector<8x64xf32>
    %150 = arith.addf %19, %149 : vector<8x64xf32>
    %151 = arith.addf %150, %147 : vector<8x64xf32>
    %cst_83 = arith.constant dense<0.000000e+00> : vector<16x64xf32>
    %152 = tpu.matmul %33, %151, %cst_83 {dimension_numbers = #tpu.dot_dimension_numbers<[1], [0], [0], [1], [0, 0, 1, 1], [], []>} : vector<16x8xf32>, vector<8x64xf32>, vector<16x64xf32> -> vector<16x64xf32>
    %cst_84 = arith.constant dense<0.000000e+00> : vector<16x64xf32>
    %153 = tpu.matmul %27, %151, %cst_84 {dimension_numbers = #tpu.dot_dimension_numbers<[1], [0], [0], [1], [0, 0, 1, 1], [], []>} : vector<16x8xf32>, vector<8x64xf32>, vector<16x64xf32> -> vector<16x64xf32>
    %154 = tpu.concatenate %152, %153 in 1 : vector<16x64xf32>, vector<16x64xf32> -> vector<16x128xf32>
    %155 = arith.subf %152, %153 : vector<16x64xf32>
    %cst_85 = arith.constant 0.000000e+00 : f32
    %156 = vector.broadcast %cst_85 : f32 to vector<16x64xf32>
    %157 = arith.select %42, %155, %156 : vector<16x64xi1>, vector<16x64xf32>
    %158 = arith.mulf %157, %157 : vector<16x64xf32>
    %cst_86 = arith.constant dense<0.000000e+00> : vector<16xf32>
    %159 = vector.multi_reduction <add>, %158, %cst_86 [1] : vector<16x64xf32> to vector<16xf32>
    %160 = vector.shape_cast %159 : vector<16xf32> to vector<16x1xf32>
    %c1 = arith.constant 1 : index
    %c0_87 = arith.constant 0 : index
    %c0_88 = arith.constant 0 : index
    %161 = vector.load %arg10[%c1, %c0_87, %c0_88] : memref<3x128x64xbf16, #tpu.memory_space<vmem>>, vector<1x128x64xbf16>
    %162 = vector.shape_cast %161 : vector<1x128x64xbf16> to vector<128x64xbf16>
    %163 = arith.truncf %154 : vector<16x128xf32> to vector<16x128xbf16>
    %cst_89 = arith.constant dense<0.000000e+00> : vector<16x64xf32>
    %164 = tpu.matmul %163, %162, %cst_89 {dimension_numbers = #tpu.dot_dimension_numbers<[1], [0], [0], [1], [0, 0, 1, 1], [], []>} : vector<16x128xbf16>, vector<128x64xbf16>, vector<16x64xf32> -> vector<16x64xf32>
    %c1_90 = arith.constant 1 : index
    %c0_91 = arith.constant 0 : index
    %c0_92 = arith.constant 0 : index
    %165 = vector.load %arg11[%c1_90, %c0_91, %c0_92] : memref<3x1x64xf32, #tpu.memory_space<vmem>>, vector<1x1x64xf32>
    %166 = vector.shape_cast %165 : vector<1x1x64xf32> to vector<1x64xf32>
    %167 = vector.broadcast %160 : vector<16x1xf32> to vector<16x64xf32>
    %168 = vector.broadcast %166 : vector<1x64xf32> to vector<16x64xf32>
    %169 = arith.mulf %167, %168 : vector<16x64xf32>
    %170 = arith.addf %164, %169 : vector<16x64xf32>
    %c1_93 = arith.constant 1 : index
    %c0_94 = arith.constant 0 : index
    %c0_95 = arith.constant 0 : index
    %171 = vector.load %arg12[%c1_93, %c0_94, %c0_95] : memref<3x1x64xf32, #tpu.memory_space<vmem>>, vector<1x1x64xf32>
    %172 = vector.shape_cast %171 : vector<1x1x64xf32> to vector<1x64xf32>
    %173 = vector.broadcast %47 : vector<16x1xf32> to vector<16x64xf32>
    %174 = vector.broadcast %172 : vector<1x64xf32> to vector<16x64xf32>
    %175 = arith.mulf %173, %174 : vector<16x64xf32>
    %176 = arith.addf %170, %175 : vector<16x64xf32>
    %c1_96 = arith.constant 1 : index
    %c0_97 = arith.constant 0 : index
    %c0_98 = arith.constant 0 : index
    %177 = vector.load %arg13[%c1_96, %c0_97, %c0_98] : memref<3x1x64xf32, #tpu.memory_space<vmem>>, vector<1x1x64xf32>
    %178 = vector.shape_cast %177 : vector<1x1x64xf32> to vector<1x64xf32>
    %179 = vector.broadcast %178 : vector<1x64xf32> to vector<16x64xf32>
    %180 = arith.addf %176, %179 : vector<16x64xf32>
    %181 = arith.negf %180 : vector<16x64xf32>
    %182 = math.exp %181 : vector<16x64xf32>
    %cst_99 = arith.constant 1.000000e+00 : f32
    %183 = vector.broadcast %cst_99 : f32 to vector<16x64xf32>
    %184 = arith.addf %183, %182 : vector<16x64xf32>
    %185 = arith.divf %183, %184 : vector<16x64xf32>
    %186 = arith.mulf %180, %185 : vector<16x64xf32>
    %c1_100 = arith.constant 1 : index
    %c0_101 = arith.constant 0 : index
    %c0_102 = arith.constant 0 : index
    %187 = vector.load %arg14[%c1_100, %c0_101, %c0_102] : memref<3x64x64xbf16, #tpu.memory_space<vmem>>, vector<1x64x64xbf16>
    %188 = vector.shape_cast %187 : vector<1x64x64xbf16> to vector<64x64xbf16>
    %189 = arith.truncf %186 : vector<16x64xf32> to vector<16x64xbf16>
    %cst_103 = arith.constant dense<0.000000e+00> : vector<16x64xf32>
    %190 = tpu.matmul %189, %188, %cst_103 {dimension_numbers = #tpu.dot_dimension_numbers<[1], [0], [0], [1], [0, 0, 1, 1], [], []>} : vector<16x64xbf16>, vector<64x64xbf16>, vector<16x64xf32> -> vector<16x64xf32>
    %c1_104 = arith.constant 1 : index
    %c0_105 = arith.constant 0 : index
    %c0_106 = arith.constant 0 : index
    %191 = vector.load %arg15[%c1_104, %c0_105, %c0_106] : memref<3x1x64xf32, #tpu.memory_space<vmem>>, vector<1x1x64xf32>
    %192 = vector.shape_cast %191 : vector<1x1x64xf32> to vector<1x64xf32>
    %193 = vector.broadcast %192 : vector<1x64xf32> to vector<16x64xf32>
    %194 = arith.addf %190, %193 : vector<16x64xf32>
    %195 = arith.negf %194 : vector<16x64xf32>
    %196 = math.exp %195 : vector<16x64xf32>
    %cst_107 = arith.constant 1.000000e+00 : f32
    %197 = vector.broadcast %cst_107 : f32 to vector<16x64xf32>
    %198 = arith.addf %197, %196 : vector<16x64xf32>
    %199 = arith.divf %197, %198 : vector<16x64xf32>
    %200 = arith.mulf %194, %199 : vector<16x64xf32>
    %c1_108 = arith.constant 1 : index
    %c0_109 = arith.constant 0 : index
    %c0_110 = arith.constant 0 : index
    %201 = vector.load %arg16[%c1_108, %c0_109, %c0_110] : memref<3x64x64xbf16, #tpu.memory_space<vmem>>, vector<1x64x64xbf16>
    %202 = vector.shape_cast %201 : vector<1x64x64xbf16> to vector<64x64xbf16>
    %203 = arith.truncf %200 : vector<16x64xf32> to vector<16x64xbf16>
    %cst_111 = arith.constant dense<0.000000e+00> : vector<16x64xf32>
    %204 = tpu.matmul %203, %202, %cst_111 {dimension_numbers = #tpu.dot_dimension_numbers<[1], [0], [0], [1], [0, 0, 1, 1], [], []>} : vector<16x64xbf16>, vector<64x64xbf16>, vector<16x64xf32> -> vector<16x64xf32>
    %c1_112 = arith.constant 1 : index
    %c0_113 = arith.constant 0 : index
    %c0_114 = arith.constant 0 : index
    %205 = vector.load %arg17[%c1_112, %c0_113, %c0_114] : memref<3x1x64xf32, #tpu.memory_space<vmem>>, vector<1x1x64xf32>
    %206 = vector.shape_cast %205 : vector<1x1x64xf32> to vector<1x64xf32>
    %207 = vector.broadcast %206 : vector<1x64xf32> to vector<16x64xf32>
    %208 = arith.addf %204, %207 : vector<16x64xf32>
    %209 = arith.negf %208 : vector<16x64xf32>
    %210 = math.exp %209 : vector<16x64xf32>
    %cst_115 = arith.constant 1.000000e+00 : f32
    %211 = vector.broadcast %cst_115 : f32 to vector<16x64xf32>
    %212 = arith.addf %211, %210 : vector<16x64xf32>
    %213 = arith.divf %211, %212 : vector<16x64xf32>
    %214 = arith.mulf %208, %213 : vector<16x64xf32>
    %c1_116 = arith.constant 1 : index
    %c0_117 = arith.constant 0 : index
    %c0_118 = arith.constant 0 : index
    %215 = vector.load %arg18[%c1_116, %c0_117, %c0_118] : memref<3x1x64xf32, #tpu.memory_space<vmem>>, vector<1x1x64xf32>
    %216 = vector.shape_cast %215 : vector<1x1x64xf32> to vector<1x64xf32>
    %217 = vector.broadcast %216 : vector<1x64xf32> to vector<16x64xf32>
    %218 = arith.mulf %214, %217 : vector<16x64xf32>
    %cst_119 = arith.constant dense<0.000000e+00> : vector<16xf32>
    %219 = vector.multi_reduction <add>, %218, %cst_119 [1] : vector<16x64xf32> to vector<16xf32>
    %220 = vector.shape_cast %219 : vector<16xf32> to vector<16x1xf32>
    %c1_120 = arith.constant 1 : index
    %c0_121 = arith.constant 0 : index
    %c0_122 = arith.constant 0 : index
    %221 = vector.load %arg19[%c1_120, %c0_121, %c0_122] : memref<3x1x1xf32, #tpu.memory_space<vmem>>, vector<1x1x1xf32>
    %222 = vector.shape_cast %221 : vector<1x1x1xf32> to vector<1x1xf32>
    %223 = vector.broadcast %222 : vector<1x1xf32> to vector<16x1xf32>
    %224 = arith.addf %220, %223 : vector<16x1xf32>
    %225 = vector.broadcast %224 : vector<16x1xf32> to vector<16x64xf32>
    %226 = arith.mulf %157, %225 : vector<16x64xf32>
    %227 = arith.addf %226, %200 : vector<16x64xf32>
    %cst_123 = arith.constant dense<0.000000e+00> : vector<8x64xf32>
    %228 = tpu.matmul %39, %227, %cst_123 {dimension_numbers = #tpu.dot_dimension_numbers<[1], [0], [0], [1], [0, 0, 1, 1], [], []>} : vector<8x16xf32>, vector<16x64xf32>, vector<8x64xf32> -> vector<8x64xf32>
    %229 = tpu.concatenate %151, %228 in 1 : vector<8x64xf32>, vector<8x64xf32> -> vector<8x128xf32>
    %c1_124 = arith.constant 1 : index
    %c0_125 = arith.constant 0 : index
    %c0_126 = arith.constant 0 : index
    %230 = vector.load %arg20[%c1_124, %c0_125, %c0_126] : memref<3x128x64xbf16, #tpu.memory_space<vmem>>, vector<1x128x64xbf16>
    %231 = vector.shape_cast %230 : vector<1x128x64xbf16> to vector<128x64xbf16>
    %232 = arith.truncf %229 : vector<8x128xf32> to vector<8x128xbf16>
    %cst_127 = arith.constant dense<0.000000e+00> : vector<8x64xf32>
    %233 = tpu.matmul %232, %231, %cst_127 {dimension_numbers = #tpu.dot_dimension_numbers<[1], [0], [0], [1], [0, 0, 1, 1], [], []>} : vector<8x128xbf16>, vector<128x64xbf16>, vector<8x64xf32> -> vector<8x64xf32>
    %c1_128 = arith.constant 1 : index
    %c0_129 = arith.constant 0 : index
    %c0_130 = arith.constant 0 : index
    %234 = vector.load %arg21[%c1_128, %c0_129, %c0_130] : memref<3x1x64xf32, #tpu.memory_space<vmem>>, vector<1x1x64xf32>
    %235 = vector.shape_cast %234 : vector<1x1x64xf32> to vector<1x64xf32>
    %236 = vector.broadcast %235 : vector<1x64xf32> to vector<8x64xf32>
    %237 = arith.addf %233, %236 : vector<8x64xf32>
    %238 = arith.negf %237 : vector<8x64xf32>
    %239 = math.exp %238 : vector<8x64xf32>
    %cst_131 = arith.constant 1.000000e+00 : f32
    %240 = vector.broadcast %cst_131 : f32 to vector<8x64xf32>
    %241 = arith.addf %240, %239 : vector<8x64xf32>
    %242 = arith.divf %240, %241 : vector<8x64xf32>
    %243 = arith.mulf %237, %242 : vector<8x64xf32>
    %c1_132 = arith.constant 1 : index
    %c0_133 = arith.constant 0 : index
    %c0_134 = arith.constant 0 : index
    %244 = vector.load %arg22[%c1_132, %c0_133, %c0_134] : memref<3x64x64xbf16, #tpu.memory_space<vmem>>, vector<1x64x64xbf16>
    %245 = vector.shape_cast %244 : vector<1x64x64xbf16> to vector<64x64xbf16>
    %246 = arith.truncf %243 : vector<8x64xf32> to vector<8x64xbf16>
    %cst_135 = arith.constant dense<0.000000e+00> : vector<8x64xf32>
    %247 = tpu.matmul %246, %245, %cst_135 {dimension_numbers = #tpu.dot_dimension_numbers<[1], [0], [0], [1], [0, 0, 1, 1], [], []>} : vector<8x64xbf16>, vector<64x64xbf16>, vector<8x64xf32> -> vector<8x64xf32>
    %c1_136 = arith.constant 1 : index
    %c0_137 = arith.constant 0 : index
    %c0_138 = arith.constant 0 : index
    %248 = vector.load %arg23[%c1_136, %c0_137, %c0_138] : memref<3x1x64xf32, #tpu.memory_space<vmem>>, vector<1x1x64xf32>
    %249 = vector.shape_cast %248 : vector<1x1x64xf32> to vector<1x64xf32>
    %250 = vector.broadcast %249 : vector<1x64xf32> to vector<8x64xf32>
    %251 = arith.addf %247, %250 : vector<8x64xf32>
    %cst_139 = arith.constant 0.000000e+00 : f32
    %252 = vector.broadcast %cst_139 : f32 to vector<8x64xf32>
    %253 = arith.select %45, %228, %252 : vector<8x64xi1>, vector<8x64xf32>
    %254 = arith.addf %151, %253 : vector<8x64xf32>
    %255 = arith.addf %254, %251 : vector<8x64xf32>
    %cst_140 = arith.constant dense<0.000000e+00> : vector<16x64xf32>
    %256 = tpu.matmul %33, %255, %cst_140 {dimension_numbers = #tpu.dot_dimension_numbers<[1], [0], [0], [1], [0, 0, 1, 1], [], []>} : vector<16x8xf32>, vector<8x64xf32>, vector<16x64xf32> -> vector<16x64xf32>
    %cst_141 = arith.constant dense<0.000000e+00> : vector<16x64xf32>
    %257 = tpu.matmul %27, %255, %cst_141 {dimension_numbers = #tpu.dot_dimension_numbers<[1], [0], [0], [1], [0, 0, 1, 1], [], []>} : vector<16x8xf32>, vector<8x64xf32>, vector<16x64xf32> -> vector<16x64xf32>
    %258 = tpu.concatenate %256, %257 in 1 : vector<16x64xf32>, vector<16x64xf32> -> vector<16x128xf32>
    %259 = arith.subf %256, %257 : vector<16x64xf32>
    %cst_142 = arith.constant 0.000000e+00 : f32
    %260 = vector.broadcast %cst_142 : f32 to vector<16x64xf32>
    %261 = arith.select %42, %259, %260 : vector<16x64xi1>, vector<16x64xf32>
    %262 = arith.mulf %261, %261 : vector<16x64xf32>
    %cst_143 = arith.constant dense<0.000000e+00> : vector<16xf32>
    %263 = vector.multi_reduction <add>, %262, %cst_143 [1] : vector<16x64xf32> to vector<16xf32>
    %264 = vector.shape_cast %263 : vector<16xf32> to vector<16x1xf32>
    %c2 = arith.constant 2 : index
    %c0_144 = arith.constant 0 : index
    %c0_145 = arith.constant 0 : index
    %265 = vector.load %arg10[%c2, %c0_144, %c0_145] : memref<3x128x64xbf16, #tpu.memory_space<vmem>>, vector<1x128x64xbf16>
    %266 = vector.shape_cast %265 : vector<1x128x64xbf16> to vector<128x64xbf16>
    %267 = arith.truncf %258 : vector<16x128xf32> to vector<16x128xbf16>
    %cst_146 = arith.constant dense<0.000000e+00> : vector<16x64xf32>
    %268 = tpu.matmul %267, %266, %cst_146 {dimension_numbers = #tpu.dot_dimension_numbers<[1], [0], [0], [1], [0, 0, 1, 1], [], []>} : vector<16x128xbf16>, vector<128x64xbf16>, vector<16x64xf32> -> vector<16x64xf32>
    %c2_147 = arith.constant 2 : index
    %c0_148 = arith.constant 0 : index
    %c0_149 = arith.constant 0 : index
    %269 = vector.load %arg11[%c2_147, %c0_148, %c0_149] : memref<3x1x64xf32, #tpu.memory_space<vmem>>, vector<1x1x64xf32>
    %270 = vector.shape_cast %269 : vector<1x1x64xf32> to vector<1x64xf32>
    %271 = vector.broadcast %264 : vector<16x1xf32> to vector<16x64xf32>
    %272 = vector.broadcast %270 : vector<1x64xf32> to vector<16x64xf32>
    %273 = arith.mulf %271, %272 : vector<16x64xf32>
    %274 = arith.addf %268, %273 : vector<16x64xf32>
    %c2_150 = arith.constant 2 : index
    %c0_151 = arith.constant 0 : index
    %c0_152 = arith.constant 0 : index
    %275 = vector.load %arg12[%c2_150, %c0_151, %c0_152] : memref<3x1x64xf32, #tpu.memory_space<vmem>>, vector<1x1x64xf32>
    %276 = vector.shape_cast %275 : vector<1x1x64xf32> to vector<1x64xf32>
    %277 = vector.broadcast %47 : vector<16x1xf32> to vector<16x64xf32>
    %278 = vector.broadcast %276 : vector<1x64xf32> to vector<16x64xf32>
    %279 = arith.mulf %277, %278 : vector<16x64xf32>
    %280 = arith.addf %274, %279 : vector<16x64xf32>
    %c2_153 = arith.constant 2 : index
    %c0_154 = arith.constant 0 : index
    %c0_155 = arith.constant 0 : index
    %281 = vector.load %arg13[%c2_153, %c0_154, %c0_155] : memref<3x1x64xf32, #tpu.memory_space<vmem>>, vector<1x1x64xf32>
    %282 = vector.shape_cast %281 : vector<1x1x64xf32> to vector<1x64xf32>
    %283 = vector.broadcast %282 : vector<1x64xf32> to vector<16x64xf32>
    %284 = arith.addf %280, %283 : vector<16x64xf32>
    %285 = arith.negf %284 : vector<16x64xf32>
    %286 = math.exp %285 : vector<16x64xf32>
    %cst_156 = arith.constant 1.000000e+00 : f32
    %287 = vector.broadcast %cst_156 : f32 to vector<16x64xf32>
    %288 = arith.addf %287, %286 : vector<16x64xf32>
    %289 = arith.divf %287, %288 : vector<16x64xf32>
    %290 = arith.mulf %284, %289 : vector<16x64xf32>
    %c2_157 = arith.constant 2 : index
    %c0_158 = arith.constant 0 : index
    %c0_159 = arith.constant 0 : index
    %291 = vector.load %arg14[%c2_157, %c0_158, %c0_159] : memref<3x64x64xbf16, #tpu.memory_space<vmem>>, vector<1x64x64xbf16>
    %292 = vector.shape_cast %291 : vector<1x64x64xbf16> to vector<64x64xbf16>
    %293 = arith.truncf %290 : vector<16x64xf32> to vector<16x64xbf16>
    %cst_160 = arith.constant dense<0.000000e+00> : vector<16x64xf32>
    %294 = tpu.matmul %293, %292, %cst_160 {dimension_numbers = #tpu.dot_dimension_numbers<[1], [0], [0], [1], [0, 0, 1, 1], [], []>} : vector<16x64xbf16>, vector<64x64xbf16>, vector<16x64xf32> -> vector<16x64xf32>
    %c2_161 = arith.constant 2 : index
    %c0_162 = arith.constant 0 : index
    %c0_163 = arith.constant 0 : index
    %295 = vector.load %arg15[%c2_161, %c0_162, %c0_163] : memref<3x1x64xf32, #tpu.memory_space<vmem>>, vector<1x1x64xf32>
    %296 = vector.shape_cast %295 : vector<1x1x64xf32> to vector<1x64xf32>
    %297 = vector.broadcast %296 : vector<1x64xf32> to vector<16x64xf32>
    %298 = arith.addf %294, %297 : vector<16x64xf32>
    %299 = arith.negf %298 : vector<16x64xf32>
    %300 = math.exp %299 : vector<16x64xf32>
    %cst_164 = arith.constant 1.000000e+00 : f32
    %301 = vector.broadcast %cst_164 : f32 to vector<16x64xf32>
    %302 = arith.addf %301, %300 : vector<16x64xf32>
    %303 = arith.divf %301, %302 : vector<16x64xf32>
    %304 = arith.mulf %298, %303 : vector<16x64xf32>
    %c2_165 = arith.constant 2 : index
    %c0_166 = arith.constant 0 : index
    %c0_167 = arith.constant 0 : index
    %305 = vector.load %arg16[%c2_165, %c0_166, %c0_167] : memref<3x64x64xbf16, #tpu.memory_space<vmem>>, vector<1x64x64xbf16>
    %306 = vector.shape_cast %305 : vector<1x64x64xbf16> to vector<64x64xbf16>
    %307 = arith.truncf %304 : vector<16x64xf32> to vector<16x64xbf16>
    %cst_168 = arith.constant dense<0.000000e+00> : vector<16x64xf32>
    %308 = tpu.matmul %307, %306, %cst_168 {dimension_numbers = #tpu.dot_dimension_numbers<[1], [0], [0], [1], [0, 0, 1, 1], [], []>} : vector<16x64xbf16>, vector<64x64xbf16>, vector<16x64xf32> -> vector<16x64xf32>
    %c2_169 = arith.constant 2 : index
    %c0_170 = arith.constant 0 : index
    %c0_171 = arith.constant 0 : index
    %309 = vector.load %arg17[%c2_169, %c0_170, %c0_171] : memref<3x1x64xf32, #tpu.memory_space<vmem>>, vector<1x1x64xf32>
    %310 = vector.shape_cast %309 : vector<1x1x64xf32> to vector<1x64xf32>
    %311 = vector.broadcast %310 : vector<1x64xf32> to vector<16x64xf32>
    %312 = arith.addf %308, %311 : vector<16x64xf32>
    %313 = arith.negf %312 : vector<16x64xf32>
    %314 = math.exp %313 : vector<16x64xf32>
    %cst_172 = arith.constant 1.000000e+00 : f32
    %315 = vector.broadcast %cst_172 : f32 to vector<16x64xf32>
    %316 = arith.addf %315, %314 : vector<16x64xf32>
    %317 = arith.divf %315, %316 : vector<16x64xf32>
    %318 = arith.mulf %312, %317 : vector<16x64xf32>
    %c2_173 = arith.constant 2 : index
    %c0_174 = arith.constant 0 : index
    %c0_175 = arith.constant 0 : index
    %319 = vector.load %arg18[%c2_173, %c0_174, %c0_175] : memref<3x1x64xf32, #tpu.memory_space<vmem>>, vector<1x1x64xf32>
    %320 = vector.shape_cast %319 : vector<1x1x64xf32> to vector<1x64xf32>
    %321 = vector.broadcast %320 : vector<1x64xf32> to vector<16x64xf32>
    %322 = arith.mulf %318, %321 : vector<16x64xf32>
    %cst_176 = arith.constant dense<0.000000e+00> : vector<16xf32>
    %323 = vector.multi_reduction <add>, %322, %cst_176 [1] : vector<16x64xf32> to vector<16xf32>
    %324 = vector.shape_cast %323 : vector<16xf32> to vector<16x1xf32>
    %c2_177 = arith.constant 2 : index
    %c0_178 = arith.constant 0 : index
    %c0_179 = arith.constant 0 : index
    %325 = vector.load %arg19[%c2_177, %c0_178, %c0_179] : memref<3x1x1xf32, #tpu.memory_space<vmem>>, vector<1x1x1xf32>
    %326 = vector.shape_cast %325 : vector<1x1x1xf32> to vector<1x1xf32>
    %327 = vector.broadcast %326 : vector<1x1xf32> to vector<16x1xf32>
    %328 = arith.addf %324, %327 : vector<16x1xf32>
    %329 = vector.broadcast %328 : vector<16x1xf32> to vector<16x64xf32>
    %330 = arith.mulf %261, %329 : vector<16x64xf32>
    %331 = arith.addf %330, %304 : vector<16x64xf32>
    %cst_180 = arith.constant dense<0.000000e+00> : vector<8x64xf32>
    %332 = tpu.matmul %39, %331, %cst_180 {dimension_numbers = #tpu.dot_dimension_numbers<[1], [0], [0], [1], [0, 0, 1, 1], [], []>} : vector<8x16xf32>, vector<16x64xf32>, vector<8x64xf32> -> vector<8x64xf32>
    %333 = tpu.concatenate %255, %332 in 1 : vector<8x64xf32>, vector<8x64xf32> -> vector<8x128xf32>
    %c2_181 = arith.constant 2 : index
    %c0_182 = arith.constant 0 : index
    %c0_183 = arith.constant 0 : index
    %334 = vector.load %arg20[%c2_181, %c0_182, %c0_183] : memref<3x128x64xbf16, #tpu.memory_space<vmem>>, vector<1x128x64xbf16>
    %335 = vector.shape_cast %334 : vector<1x128x64xbf16> to vector<128x64xbf16>
    %336 = arith.truncf %333 : vector<8x128xf32> to vector<8x128xbf16>
    %cst_184 = arith.constant dense<0.000000e+00> : vector<8x64xf32>
    %337 = tpu.matmul %336, %335, %cst_184 {dimension_numbers = #tpu.dot_dimension_numbers<[1], [0], [0], [1], [0, 0, 1, 1], [], []>} : vector<8x128xbf16>, vector<128x64xbf16>, vector<8x64xf32> -> vector<8x64xf32>
    %c2_185 = arith.constant 2 : index
    %c0_186 = arith.constant 0 : index
    %c0_187 = arith.constant 0 : index
    %338 = vector.load %arg21[%c2_185, %c0_186, %c0_187] : memref<3x1x64xf32, #tpu.memory_space<vmem>>, vector<1x1x64xf32>
    %339 = vector.shape_cast %338 : vector<1x1x64xf32> to vector<1x64xf32>
    %340 = vector.broadcast %339 : vector<1x64xf32> to vector<8x64xf32>
    %341 = arith.addf %337, %340 : vector<8x64xf32>
    %342 = arith.negf %341 : vector<8x64xf32>
    %343 = math.exp %342 : vector<8x64xf32>
    %cst_188 = arith.constant 1.000000e+00 : f32
    %344 = vector.broadcast %cst_188 : f32 to vector<8x64xf32>
    %345 = arith.addf %344, %343 : vector<8x64xf32>
    %346 = arith.divf %344, %345 : vector<8x64xf32>
    %347 = arith.mulf %341, %346 : vector<8x64xf32>
    %c2_189 = arith.constant 2 : index
    %c0_190 = arith.constant 0 : index
    %c0_191 = arith.constant 0 : index
    %348 = vector.load %arg22[%c2_189, %c0_190, %c0_191] : memref<3x64x64xbf16, #tpu.memory_space<vmem>>, vector<1x64x64xbf16>
    %349 = vector.shape_cast %348 : vector<1x64x64xbf16> to vector<64x64xbf16>
    %350 = arith.truncf %347 : vector<8x64xf32> to vector<8x64xbf16>
    %cst_192 = arith.constant dense<0.000000e+00> : vector<8x64xf32>
    %351 = tpu.matmul %350, %349, %cst_192 {dimension_numbers = #tpu.dot_dimension_numbers<[1], [0], [0], [1], [0, 0, 1, 1], [], []>} : vector<8x64xbf16>, vector<64x64xbf16>, vector<8x64xf32> -> vector<8x64xf32>
    %c2_193 = arith.constant 2 : index
    %c0_194 = arith.constant 0 : index
    %c0_195 = arith.constant 0 : index
    %352 = vector.load %arg23[%c2_193, %c0_194, %c0_195] : memref<3x1x64xf32, #tpu.memory_space<vmem>>, vector<1x1x64xf32>
    %353 = vector.shape_cast %352 : vector<1x1x64xf32> to vector<1x64xf32>
    %354 = vector.broadcast %353 : vector<1x64xf32> to vector<8x64xf32>
    %355 = arith.addf %351, %354 : vector<8x64xf32>
    %cst_196 = arith.constant 0.000000e+00 : f32
    %356 = vector.broadcast %cst_196 : f32 to vector<8x64xf32>
    %357 = arith.select %45, %332, %356 : vector<8x64xi1>, vector<8x64xf32>
    %358 = arith.addf %255, %357 : vector<8x64xf32>
    %359 = arith.addf %358, %355 : vector<8x64xf32>
    %c0_197 = arith.constant 0 : index
    %c0_198 = arith.constant 0 : index
    %360 = vector.load %arg24[%c0_197, %c0_198] : memref<64x64xbf16, #tpu.memory_space<vmem>>, vector<64x64xbf16>
    %361 = arith.truncf %359 : vector<8x64xf32> to vector<8x64xbf16>
    %cst_199 = arith.constant dense<0.000000e+00> : vector<8x64xf32>
    %362 = tpu.matmul %361, %360, %cst_199 {dimension_numbers = #tpu.dot_dimension_numbers<[1], [0], [0], [1], [0, 0, 1, 1], [], []>} : vector<8x64xbf16>, vector<64x64xbf16>, vector<8x64xf32> -> vector<8x64xf32>
    %c0_200 = arith.constant 0 : index
    %c0_201 = arith.constant 0 : index
    %363 = vector.load %arg25[%c0_200, %c0_201] : memref<1x64xf32, #tpu.memory_space<vmem>>, vector<1x64xf32>
    %364 = vector.broadcast %363 : vector<1x64xf32> to vector<8x64xf32>
    %365 = arith.addf %362, %364 : vector<8x64xf32>
    %366 = arith.negf %365 : vector<8x64xf32>
    %367 = math.exp %366 : vector<8x64xf32>
    %cst_202 = arith.constant 1.000000e+00 : f32
    %368 = vector.broadcast %cst_202 : f32 to vector<8x64xf32>
    %369 = arith.addf %368, %367 : vector<8x64xf32>
    %370 = arith.divf %368, %369 : vector<8x64xf32>
    %371 = arith.mulf %365, %370 : vector<8x64xf32>
    %c0_203 = arith.constant 0 : index
    %c0_204 = arith.constant 0 : index
    %372 = vector.load %arg26[%c0_203, %c0_204] : memref<64x24xbf16, #tpu.memory_space<vmem>>, vector<64x24xbf16>
    %373 = arith.truncf %371 : vector<8x64xf32> to vector<8x64xbf16>
    %cst_205 = arith.constant dense<0.000000e+00> : vector<8x24xf32>
    %374 = tpu.matmul %373, %372, %cst_205 {dimension_numbers = #tpu.dot_dimension_numbers<[1], [0], [0], [1], [0, 0, 1, 1], [], []>} : vector<8x64xbf16>, vector<64x24xbf16>, vector<8x24xf32> -> vector<8x24xf32>
    %c0_206 = arith.constant 0 : index
    %c0_207 = arith.constant 0 : index
    %375 = vector.load %arg27[%c0_206, %c0_207] : memref<1x24xf32, #tpu.memory_space<vmem>>, vector<1x24xf32>
    %376 = vector.broadcast %375 : vector<1x24xf32> to vector<8x24xf32>
    %377 = arith.addf %374, %376 : vector<8x24xf32>
    %c0_208 = arith.constant 0 : index
    %c0_209 = arith.constant 0 : index
    %c0_210 = arith.constant 0 : index
    %378 = vector.load %arg28[%c0_208, %c0_209, %c0_210] : memref<1x8x24xf32, #tpu.memory_space<vmem>>, vector<1x8x24xf32>
    %379 = vector.shape_cast %378 : vector<1x8x24xf32> to vector<8x24xf32>
    %380 = vector.shape_cast %377 : vector<8x24xf32> to vector<1x8x24xf32>
    tpu.vector_store %arg28[%c0_208, %c0_209, %c0_210], %380 {strides = array<i32>} : memref<1x8x24xf32, #tpu.memory_space<vmem>>, vector<1x8x24xf32>,
    return
  }
  func.func @transform_0(%arg0: i32) -> (i32, i32, i32) {
    %c0_i32 = arith.constant 0 : i32
    %c0_i32_0 = arith.constant 0 : i32
    %c0_i32_1 = arith.constant 0 : i32
    return %arg0, %c0_i32, %c0_i32_0 : i32, i32, i32
  }
  func.func @transform_1(%arg0: i32) -> (i32, i32, i32) {
    %c0_i32 = arith.constant 0 : i32
    %c0_i32_0 = arith.constant 0 : i32
    %c0_i32_1 = arith.constant 0 : i32
    return %arg0, %c0_i32, %c0_i32_0 : i32, i32, i32
  }
  func.func @transform_2(%arg0: i32) -> (i32, i32, i32) {
    %c0_i32 = arith.constant 0 : i32
    %c0_i32_0 = arith.constant 0 : i32
    %c0_i32_1 = arith.constant 0 : i32
    return %arg0, %c0_i32, %c0_i32_0 : i32, i32, i32
  }
  func.func @transform_3(%arg0: i32) -> (i32, i32, i32) {
    %c0_i32 = arith.constant 0 : i32
    %c0_i32_0 = arith.constant 0 : i32
    %c0_i32_1 = arith.constant 0 : i32
    return %arg0, %c0_i32, %c0_i32_0 : i32, i32, i32
  }
  func.func @transform_4(%arg0: i32) -> (i32, i32, i32) {
    %c0_i32 = arith.constant 0 : i32
    %c0_i32_0 = arith.constant 0 : i32
    %c0_i32_1 = arith.constant 0 : i32
    return %arg0, %c0_i32, %c0_i32_0 : i32, i32, i32
  }
  func.func @transform_5(%arg0: i32) -> (i32, i32) {
    %c0_i32 = arith.constant 0 : i32
    %c0_i32_0 = arith.constant 0 : i32
    %c0_i32_1 = arith.constant 0 : i32
    return %c0_i32, %c0_i32_0 : i32, i32
  }
  func.func @transform_6(%arg0: i32) -> (i32, i32) {
    %c0_i32 = arith.constant 0 : i32
    %c0_i32_0 = arith.constant 0 : i32
    %c0_i32_1 = arith.constant 0 : i32
    return %c0_i32, %c0_i32_0 : i32, i32
  }
  func.func @transform_7(%arg0: i32) -> (i32, i32) {
    %c0_i32 = arith.constant 0 : i32
    %c0_i32_0 = arith.constant 0 : i32
    %c0_i32_1 = arith.constant 0 : i32
    return %c0_i32, %c0_i32_0 : i32, i32
  }
  func.func @transform_8(%arg0: i32) -> (i32, i32) {
    %c0_i32 = arith.constant 0 : i32
    %c0_i32_0 = arith.constant 0 : i32
    %c0_i32_1 = arith.constant 0 : i32
    return %c0_i32, %c0_i32_0 : i32, i32
  }
  func.func @transform_9(%arg0: i32) -> (i32, i32, i32) {
    %c0_i32 = arith.constant 0 : i32
    %c0_i32_0 = arith.constant 0 : i32
    %c0_i32_1 = arith.constant 0 : i32
    %c0_i32_2 = arith.constant 0 : i32
    return %c0_i32, %c0_i32_0, %c0_i32_1 : i32, i32, i32
  }
  func.func @transform_10(%arg0: i32) -> (i32, i32, i32) {
    %c0_i32 = arith.constant 0 : i32
    %c0_i32_0 = arith.constant 0 : i32
    %c0_i32_1 = arith.constant 0 : i32
    %c0_i32_2 = arith.constant 0 : i32
    return %c0_i32, %c0_i32_0, %c0_i32_1 : i32, i32, i32
  }
  func.func @transform_11(%arg0: i32) -> (i32, i32, i32) {
    %c0_i32 = arith.constant 0 : i32
    %c0_i32_0 = arith.constant 0 : i32
    %c0_i32_1 = arith.constant 0 : i32
    %c0_i32_2 = arith.constant 0 : i32
    return %c0_i32, %c0_i32_0, %c0_i32_1 : i32, i32, i32
  }
  func.func @transform_12(%arg0: i32) -> (i32, i32, i32) {
    %c0_i32 = arith.constant 0 : i32
    %c0_i32_0 = arith.constant 0 : i32
    %c0_i32_1 = arith.constant 0 : i32
    %c0_i32_2 = arith.constant 0 : i32
    return %c0_i32, %c0_i32_0, %c0_i32_1 : i32, i32, i32
  }
  func.func @transform_13(%arg0: i32) -> (i32, i32, i32) {
    %c0_i32 = arith.constant 0 : i32
    %c0_i32_0 = arith.constant 0 : i32
    %c0_i32_1 = arith.constant 0 : i32
    %c0_i32_2 = arith.constant 0 : i32
    return %c0_i32, %c0_i32_0, %c0_i32_1 : i32, i32, i32
  }
  func.func @transform_14(%arg0: i32) -> (i32, i32, i32) {
    %c0_i32 = arith.constant 0 : i32
    %c0_i32_0 = arith.constant 0 : i32
    %c0_i32_1 = arith.constant 0 : i32
    %c0_i32_2 = arith.constant 0 : i32
    return %c0_i32, %c0_i32_0, %c0_i32_1 : i32, i32, i32
  }
  func.func @transform_15(%arg0: i32) -> (i32, i32, i32) {
    %c0_i32 = arith.constant 0 : i32
    %c0_i32_0 = arith.constant 0 : i32
    %c0_i32_1 = arith.constant 0 : i32
    %c0_i32_2 = arith.constant 0 : i32
    return %c0_i32, %c0_i32_0, %c0_i32_1 : i32, i32, i32
  }
  func.func @transform_16(%arg0: i32) -> (i32, i32, i32) {
    %c0_i32 = arith.constant 0 : i32
    %c0_i32_0 = arith.constant 0 : i32
    %c0_i32_1 = arith.constant 0 : i32
    %c0_i32_2 = arith.constant 0 : i32
    return %c0_i32, %c0_i32_0, %c0_i32_1 : i32, i32, i32
  }
  func.func @transform_17(%arg0: i32) -> (i32, i32, i32) {
    %c0_i32 = arith.constant 0 : i32
    %c0_i32_0 = arith.constant 0 : i32
    %c0_i32_1 = arith.constant 0 : i32
    %c0_i32_2 = arith.constant 0 : i32
    return %c0_i32, %c0_i32_0, %c0_i32_1 : i32, i32, i32
  }
  func.func @transform_18(%arg0: i32) -> (i32, i32, i32) {
    %c0_i32 = arith.constant 0 : i32
    %c0_i32_0 = arith.constant 0 : i32
    %c0_i32_1 = arith.constant 0 : i32
    %c0_i32_2 = arith.constant 0 : i32
    return %c0_i32, %c0_i32_0, %c0_i32_1 : i32, i32, i32
  }
  func.func @transform_19(%arg0: i32) -> (i32, i32, i32) {
    %c0_i32 = arith.constant 0 : i32
    %c0_i32_0 = arith.constant 0 : i32
    %c0_i32_1 = arith.constant 0 : i32
    %c0_i32_2 = arith.constant 0 : i32
    return %c0_i32, %c0_i32_0, %c0_i32_1 : i32, i32, i32
  }
  func.func @transform_20(%arg0: i32) -> (i32, i32, i32) {
    %c0_i32 = arith.constant 0 : i32
    %c0_i32_0 = arith.constant 0 : i32
    %c0_i32_1 = arith.constant 0 : i32
    %c0_i32_2 = arith.constant 0 : i32
    return %c0_i32, %c0_i32_0, %c0_i32_1 : i32, i32, i32
  }
  func.func @transform_21(%arg0: i32) -> (i32, i32, i32) {
    %c0_i32 = arith.constant 0 : i32
    %c0_i32_0 = arith.constant 0 : i32
    %c0_i32_1 = arith.constant 0 : i32
    %c0_i32_2 = arith.constant 0 : i32
    return %c0_i32, %c0_i32_0, %c0_i32_1 : i32, i32, i32
  }
  func.func @transform_22(%arg0: i32) -> (i32, i32, i32) {
    %c0_i32 = arith.constant 0 : i32
    %c0_i32_0 = arith.constant 0 : i32
    %c0_i32_1 = arith.constant 0 : i32
    %c0_i32_2 = arith.constant 0 : i32
    return %c0_i32, %c0_i32_0, %c0_i32_1 : i32, i32, i32
  }
  func.func @transform_23(%arg0: i32) -> (i32, i32) {
    %c0_i32 = arith.constant 0 : i32
    %c0_i32_0 = arith.constant 0 : i32
    %c0_i32_1 = arith.constant 0 : i32
    return %c0_i32, %c0_i32_0 : i32, i32
  }
  func.func @transform_24(%arg0: i32) -> (i32, i32) {
    %c0_i32 = arith.constant 0 : i32
    %c0_i32_0 = arith.constant 0 : i32
    %c0_i32_1 = arith.constant 0 : i32
    return %c0_i32, %c0_i32_0 : i32, i32
  }
  func.func @transform_25(%arg0: i32) -> (i32, i32) {
    %c0_i32 = arith.constant 0 : i32
    %c0_i32_0 = arith.constant 0 : i32
    %c0_i32_1 = arith.constant 0 : i32
    return %c0_i32, %c0_i32_0 : i32, i32
  }
  func.func @transform_26(%arg0: i32) -> (i32, i32) {
    %c0_i32 = arith.constant 0 : i32
    %c0_i32_0 = arith.constant 0 : i32
    %c0_i32_1 = arith.constant 0 : i32
    return %c0_i32, %c0_i32_0 : i32, i32
  }
  func.func @transform_27(%arg0: i32) -> (i32, i32, i32) {
    %c0_i32 = arith.constant 0 : i32
    %c0_i32_0 = arith.constant 0 : i32
    %c0_i32_1 = arith.constant 0 : i32
    return %arg0, %c0_i32, %c0_i32_0 : i32, i32, i32
  }
}

</mosaic_0001>

<llo_original>
// kernel: tpu_custom_call.1
$region0: #{tpu_custom_call.1}
  #allocation0 [shape = 'u32[]', space=smem, size = 0x4, offset = 0x4, fixed_abs, tag = 'smem constant byte address 0x4 - core index']
  #allocation1 [shape = 'u32[144,128]{1,0:T(1,128)}', space=vmem, size = 0x12000, scoped, tag = 'internal scratch']
  %s0 = inlined_call_operand.vmem [shape: s32[4,16,1], index: 0, kind: input, shape index: {}]
  %s1 = inlined_call_operand.vmem [shape: s32[4,16,1], index: 1, kind: input, shape index: {}]
  %s2 = inlined_call_operand.vmem [shape: s32[4,1,16], index: 2, kind: input, shape index: {}]
  %s3 = inlined_call_operand.vmem [shape: f32[4,8,8], index: 3, kind: input, shape index: {}]
  %s4 = inlined_call_operand.vmem [shape: f32[4,16,1], index: 4, kind: input, shape index: {}]
  %s5 = inlined_call_operand.vmem [shape: bf16[8,128], index: 5, kind: input, shape index: {}]
  %s6 = inlined_call_operand.vmem [shape: f32[1,128], index: 6, kind: input, shape index: {}]
  %s7 = inlined_call_operand.vmem [shape: bf16[128,64], index: 7, kind: input, shape index: {}]
  %s8 = inlined_call_operand.vmem [shape: f32[1,64], index: 8, kind: input, shape index: {}]
  %s9 = inlined_call_operand.vmem [shape: bf16[3,128,64], index: 9, kind: input, shape index: {}]
  %s10 = inlined_call_operand.vmem [shape: f32[3,1,64], index: 10, kind: input, shape index: {}]
  %s11 = inlined_call_operand.vmem [shape: f32[3,1,64], index: 11, kind: input, shape index: {}]
  %s12 = inlined_call_operand.vmem [shape: f32[3,1,64], index: 12, kind: input, shape index: {}]
  %s13 = inlined_call_operand.vmem [shape: bf16[3,64,64], index: 13, kind: input, shape index: {}]
  %s14 = inlined_call_operand.vmem [shape: f32[3,1,64], index: 14, kind: input, shape index: {}]
  %s15 = inlined_call_operand.vmem [shape: bf16[3,64,64], index: 15, kind: input, shape index: {}]
  %s16 = inlined_call_operand.vmem [shape: f32[3,1,64], index: 16, kind: input, shape index: {}]
  %s17 = inlined_call_operand.vmem [shape: f32[3,1,64], index: 17, kind: input, shape index: {}]
  %s18 = inlined_call_operand.vmem [shape: f32[3,1,1], index: 18, kind: input, shape index: {}]
  %s19 = inlined_call_operand.vmem [shape: bf16[3,128,64], index: 19, kind: input, shape index: {}]
  %s20 = inlined_call_operand.vmem [shape: f32[3,1,64], index: 20, kind: input, shape index: {}]
  %s21 = inlined_call_operand.vmem [shape: bf16[3,64,64], index: 21, kind: input, shape index: {}]
  %s22 = inlined_call_operand.vmem [shape: f32[3,1,64], index: 22, kind: input, shape index: {}]
  %s23 = inlined_call_operand.vmem [shape: bf16[64,64], index: 23, kind: input, shape index: {}]
  %s24 = inlined_call_operand.vmem [shape: f32[1,64], index: 24, kind: input, shape index: {}]
  %s25 = inlined_call_operand.vmem [shape: bf16[64,24], index: 25, kind: input, shape index: {}]
  %s26 = inlined_call_operand.vmem [shape: f32[1,24], index: 26, kind: input, shape index: {}]
  %s27 = inlined_call_operand.hbm [shape: f32[4,8,24], index: 27, kind: output, shape index: {}]
  %s28 = sld [smem:[#allocation0]]
  $region141: #{tpu_custom_call.1} parent=0
    _
  %s30 = ssub.s32 1, %s28
  %s31 = scalar_select 0, %s30, %s28
  $region1: #{tpu_custom_call.1} parent=0
    #allocation2 [shape = 'u8[8192]{0}', space=vmem, size = 0x2000, scoped, tag = 'output window, operand 0']
    #allocation3 [shape = 's32[2]{0}', space=sflag, size = 0x8, scoped, tag = 'scoped memory for tpu_custom_call.1']
    %32 = vsyncpa [#allocation3], 0
    %s33 = scalar_lea.sflag [#allocation3], 1
    %34 = vsyncpa %s33, 0
    loop: start=0, step=1, limit=6
    $region2: #{tpu_custom_call.1} parent=1 // loop_pre_header
      _
    $region3: #{tpu_custom_call.1} parent=1 // loop_header
      %s36 = sphi 0, %s40
      %p37 = scmp.ge.s32.totalorder %s36, 6
      %s46 = sphi 0, %s48
      %s49 = sphi 0, %s46
      %s50 = sphi 0, %s49
      %s66 = sphi 0, %s50
      %s72 = sphi 0, %s74
      %s75 = sphi 0, %s72
      %s76 = sphi 0, %s75
      %s92 = sphi 0, %s76
      %s98 = sphi 0, %s100
      %s101 = sphi 0, %s98
      %s102 = sphi 0, %s101
      %s118 = sphi 0, %s102
      %s124 = sphi 0, %s126
      %s127 = sphi 0, %s124
      %s128 = sphi 0, %s127
      %s144 = sphi 0, %s128
      %s150 = sphi 0, %s152
      %s153 = sphi 0, %s150
      %s154 = sphi 0, %s153
      %s170 = sphi 0, %s154
      %s174 = sphi 0, %s174
      %s176 = sphi 0, %s174
      %s177 = sphi 0, %s176
      %s191 = sphi 0, %s177
      %s195 = sphi 0, %s195
      %s197 = sphi 0, %s195
      %s198 = sphi 0, %s197
      %s212 = sphi 0, %s198
      %s216 = sphi 0, %s216
      %s218 = sphi 0, %s216
      %s219 = sphi 0, %s218
      %s233 = sphi 0, %s219
      %s237 = sphi 0, %s237
      %s239 = sphi 0, %s237
      %s240 = sphi 0, %s239
      %s254 = sphi 0, %s240
      %s258 = sphi 0, %s258
      %s260 = sphi 0, %s258
      %s261 = sphi 0, %s260
      %s275 = sphi 0, %s261
      %s279 = sphi 0, %s279
      %s281 = sphi 0, %s279
      %s282 = sphi 0, %s281
      %s296 = sphi 0, %s282
      %s300 = sphi 0, %s300
      %s302 = sphi 0, %s300
      %s303 = sphi 0, %s302
      %s317 = sphi 0, %s303
      %s321 = sphi 0, %s321
      %s323 = sphi 0, %s321
      %s324 = sphi 0, %s323
      %s338 = sphi 0, %s324
      %s342 = sphi 0, %s342
      %s344 = sphi 0, %s342
      %s345 = sphi 0, %s344
      %s359 = sphi 0, %s345
      %s363 = sphi 0, %s363
      %s365 = sphi 0, %s363
      %s366 = sphi 0, %s365
      %s380 = sphi 0, %s366
      %s384 = sphi 0, %s384
      %s386 = sphi 0, %s384
      %s387 = sphi 0, %s386
      %s401 = sphi 0, %s387
      %s405 = sphi 0, %s405
      %s407 = sphi 0, %s405
      %s408 = sphi 0, %s407
      %s422 = sphi 0, %s408
      %s426 = sphi 0, %s426
      %s428 = sphi 0, %s426
      %s429 = sphi 0, %s428
      %s443 = sphi 0, %s429
      %s447 = sphi 0, %s447
      %s449 = sphi 0, %s447
      %s450 = sphi 0, %s449
      %s464 = sphi 0, %s450
      %s468 = sphi 0, %s468
      %s470 = sphi 0, %s468
      %s471 = sphi 0, %s470
      %s485 = sphi 0, %s471
      %s489 = sphi 0, %s489
      %s491 = sphi 0, %s489
      %s492 = sphi 0, %s491
      %s506 = sphi 0, %s492
      %s510 = sphi 0, %s510
      %s512 = sphi 0, %s510
      %s513 = sphi 0, %s512
      %s527 = sphi 0, %s513
      %s531 = sphi 0, %s531
      %s533 = sphi 0, %s531
      %s534 = sphi 0, %s533
      %s548 = sphi 0, %s534
      %s552 = sphi 0, %s552
      %s554 = sphi 0, %s552
      %s555 = sphi 0, %s554
      %s569 = sphi 0, %s555
      %s573 = sphi 0, %s573
      %s575 = sphi 0, %s573
      %s576 = sphi 0, %s575
      %s590 = sphi 0, %s576
      %s594 = sphi 0, %s594
      %s596 = sphi 0, %s594
      %s597 = sphi 0, %s596
      %s611 = sphi 0, %s597
      %s615 = sphi 0, %s615
      %s617 = sphi 0, %s615
      %s618 = sphi 0, %s617
      %s632 = sphi 0, %s618
      %s638 = sphi 0, %s640
      %s641 = sphi 0, %s638
      %s642 = sphi 0, %s641
      %s658 = sphi 0, %s642
    $region4: #{tpu_custom_call.1} parent=1 // loop_header_branch
      %39 = sbr.rel (%p37) target = $region8
    $region5: #{tpu_custom_call.1} parent=1 // loop_body
      %s41 = ssub.s32 %s36, 1
      %s42 = ssub.s32 %s36, 2
      %s43 = sadd.s32 %s36, 1
      %s44 = ssub.s32 %s36, %s43
      %p45 = scmp.eq.s32.totalorder %s44, 0
      %s47 = sadd.s32 %s46, 1
      %s48 = scalar_select %p45, %s46, %s47
      %p51 = pneg %p45
      %p52 = scmp.eq.s32.totalorder %s36, 3
      %p53 = por %p51, %p52
      %p54 = scmp.ne.s32.totalorder %s46, %s49
      %p55 = scmp.eq.s32.totalorder %s36, 0
      %p56 = por %p54, %p55
      %p57 = scmp.ne.s32.totalorder %s46, %s49
      %p58 = scmp.eq.s32.totalorder %s41, 3
      %p59 = por %p57, %p58
      %p60 = scmp.ne.s32.totalorder %s49, %s50
      %p61 = scmp.eq.s32.totalorder %s41, 0
      %p62 = por %p60, %p61
      %p63 = scmp.ne.s32.totalorder %s49, %s50
      %p64 = scmp.eq.s32.totalorder %s42, 3
      %p65 = por %p63, %p64
      %p67 = scmp.ne.s32.totalorder %s50, %s66
      %p68 = scmp.eq.s32.totalorder %s42, 0
      %p69 = por %p67, %p68
      %s70 = ssub.s32 %s36, %s43
      %p71 = scmp.eq.s32.totalorder %s70, 0
      %s73 = sadd.s32 %s72, 1
      %s74 = scalar_select %p71, %s72, %s73
      %p77 = pneg %p71
      %p78 = scmp.eq.s32.totalorder %s36, 3
      %p79 = por %p77, %p78
      %p80 = scmp.ne.s32.totalorder %s72, %s75
      %p81 = scmp.eq.s32.totalorder %s36, 0
      %p82 = por %p80, %p81
      %p83 = scmp.ne.s32.totalorder %s72, %s75
      %p84 = scmp.eq.s32.totalorder %s41, 3
      %p85 = por %p83, %p84
      %p86 = scmp.ne.s32.totalorder %s75, %s76
      %p87 = scmp.eq.s32.totalorder %s41, 0
      %p88 = por %p86, %p87
      %p89 = scmp.ne.s32.totalorder %s75, %s76
      %p90 = scmp.eq.s32.totalorder %s42, 3
      %p91 = por %p89, %p90
      %p93 = scmp.ne.s32.totalorder %s76, %s92
      %p94 = scmp.eq.s32.totalorder %s42, 0
      %p95 = por %p93, %p94
      %s96 = ssub.s32 %s36, %s43
      %p97 = scmp.eq.s32.totalorder %s96, 0
      %s99 = sadd.s32 %s98, 1
      %s100 = scalar_select %p97, %s98, %s99
      %p103 = pneg %p97
      %p104 = scmp.eq.s32.totalorder %s36, 3
      %p105 = por %p103, %p104
      %p106 = scmp.ne.s32.totalorder %s98, %s101
      %p107 = scmp.eq.s32.totalorder %s36, 0
      %p108 = por %p106, %p107
      %p109 = scmp.ne.s32.totalorder %s98, %s101
      %p110 = scmp.eq.s32.totalorder %s41, 3
      %p111 = por %p109, %p110
      %p112 = scmp.ne.s32.totalorder %s101, %s102
      %p113 = scmp.eq.s32.totalorder %s41, 0
      %p114 = por %p112, %p113
      %p115 = scmp.ne.s32.totalorder %s101, %s102
      %p116 = scmp.eq.s32.totalorder %s42, 3
      %p117 = por %p115, %p116
      %p119 = scmp.ne.s32.totalorder %s102, %s118
      %p120 = scmp.eq.s32.totalorder %s42, 0
      %p121 = por %p119, %p120
      %s122 = ssub.s32 %s36, %s43
      %p123 = scmp.eq.s32.totalorder %s122, 0
      %s125 = sadd.s32 %s124, 1
      %s126 = scalar_select %p123, %s124, %s125
      %p129 = pneg %p123
      %p130 = scmp.eq.s32.totalorder %s36, 3
      %p131 = por %p129, %p130
      %p132 = scmp.ne.s32.totalorder %s124, %s127
      %p133 = scmp.eq.s32.totalorder %s36, 0
      %p134 = por %p132, %p133
      %p135 = scmp.ne.s32.totalorder %s124, %s127
      %p136 = scmp.eq.s32.totalorder %s41, 3
      %p137 = por %p135, %p136
      %p138 = scmp.ne.s32.totalorder %s127, %s128
      %p139 = scmp.eq.s32.totalorder %s41, 0
      %p140 = por %p138, %p139
      %p141 = scmp.ne.s32.totalorder %s127, %s128
      %p142 = scmp.eq.s32.totalorder %s42, 3
      %p143 = por %p141, %p142
      %p145 = scmp.ne.s32.totalorder %s128, %s144
      %p146 = scmp.eq.s32.totalorder %s42, 0
      %p147 = por %p145, %p146
      %s148 = ssub.s32 %s36, %s43
      %p149 = scmp.eq.s32.totalorder %s148, 0
      %s151 = sadd.s32 %s150, 1
      %s152 = scalar_select %p149, %s150, %s151
      %p155 = pneg %p149
      %p156 = scmp.eq.s32.totalorder %s36, 3
      %p157 = por %p155, %p156
      %p158 = scmp.ne.s32.totalorder %s150, %s153
      %p159 = scmp.eq.s32.totalorder %s36, 0
      %p160 = por %p158, %p159
      %p161 = scmp.ne.s32.totalorder %s150, %s153
      %p162 = scmp.eq.s32.totalorder %s41, 3
      %p163 = por %p161, %p162
      %p164 = scmp.ne.s32.totalorder %s153, %s154
      %p165 = scmp.eq.s32.totalorder %s41, 0
      %p166 = por %p164, %p165
      %p167 = scmp.ne.s32.totalorder %s153, %s154
      %p168 = scmp.eq.s32.totalorder %s42, 3
      %p169 = por %p167, %p168
      %p171 = scmp.ne.s32.totalorder %s154, %s170
      %p172 = scmp.eq.s32.totalorder %s42, 0
      %p173 = por %p171, %p172
      %s175 = sadd.s32 %s174, 1
      %p178 = scmp.eq.s32.totalorder %s36, 3
      %p179 = scmp.ne.s32.totalorder %s174, %s176
      %p180 = scmp.eq.s32.totalorder %s36, 0
      %p181 = por %p179, %p180
      %p182 = scmp.ne.s32.totalorder %s174, %s176
      %p183 = scmp.eq.s32.totalorder %s41, 3
      %p184 = por %p182, %p183
      %p185 = scmp.ne.s32.totalorder %s176, %s177
      %p186 = scmp.eq.s32.totalorder %s41, 0
      %p187 = por %p185, %p186
      %p188 = scmp.ne.s32.totalorder %s176, %s177
      %p189 = scmp.eq.s32.totalorder %s42, 3
      %p190 = por %p188, %p189
      %p192 = scmp.ne.s32.totalorder %s177, %s191
      %p193 = scmp.eq.s32.totalorder %s42, 0
      %p194 = por %p192, %p193
      %s196 = sadd.s32 %s195, 1
      %p199 = scmp.eq.s32.totalorder %s36, 3
      %p200 = scmp.ne.s32.totalorder %s195, %s197
      %p201 = scmp.eq.s32.totalorder %s36, 0
      %p202 = por %p200, %p201
      %p203 = scmp.ne.s32.totalorder %s195, %s197
      %p204 = scmp.eq.s32.totalorder %s41, 3
      %p205 = por %p203, %p204
      %p206 = scmp.ne.s32.totalorder %s197, %s198
      %p207 = scmp.eq.s32.totalorder %s41, 0
      %p208 = por %p206, %p207
      %p209 = scmp.ne.s32.totalorder %s197, %s198
      %p210 = scmp.eq.s32.totalorder %s42, 3
      %p211 = por %p209, %p210
      %p213 = scmp.ne.s32.totalorder %s198, %s212
      %p214 = scmp.eq.s32.totalorder %s42, 0
      %p215 = por %p213, %p214
      %s217 = sadd.s32 %s216, 1
      %p220 = scmp.eq.s32.totalorder %s36, 3
      %p221 = scmp.ne.s32.totalorder %s216, %s218
      %p222 = scmp.eq.s32.totalorder %s36, 0
      %p223 = por %p221, %p222
      %p224 = scmp.ne.s32.totalorder %s216, %s218
      %p225 = scmp.eq.s32.totalorder %s41, 3
      %p226 = por %p224, %p225
      %p227 = scmp.ne.s32.totalorder %s218, %s219
      %p228 = scmp.eq.s32.totalorder %s41, 0
      %p229 = por %p227, %p228
      %p230 = scmp.ne.s32.totalorder %s218, %s219
      %p231 = scmp.eq.s32.totalorder %s42, 3
      %p232 = por %p230, %p231
      %p234 = scmp.ne.s32.totalorder %s219, %s233
      %p235 = scmp.eq.s32.totalorder %s42, 0
      %p236 = por %p234, %p235
      %s238 = sadd.s32 %s237, 1
      %p241 = scmp.eq.s32.totalorder %s36, 3
      %p242 = scmp.ne.s32.totalorder %s237, %s239
      %p243 = scmp.eq.s32.totalorder %s36, 0
      %p244 = por %p242, %p243
      %p245 = scmp.ne.s32.totalorder %s237, %s239
      %p246 = scmp.eq.s32.totalorder %s41, 3
      %p247 = por %p245, %p246
      %p248 = scmp.ne.s32.totalorder %s239, %s240
      %p249 = scmp.eq.s32.totalorder %s41, 0
      %p250 = por %p248, %p249
      %p251 = scmp.ne.s32.totalorder %s239, %s240
      %p252 = scmp.eq.s32.totalorder %s42, 3
      %p253 = por %p251, %p252
      %p255 = scmp.ne.s32.totalorder %s240, %s254
      %p256 = scmp.eq.s32.totalorder %s42, 0
      %p257 = por %p255, %p256
      %s259 = sadd.s32 %s258, 1
      %p262 = scmp.eq.s32.totalorder %s36, 3
      %p263 = scmp.ne.s32.totalorder %s258, %s260
      %p264 = scmp.eq.s32.totalorder %s36, 0
      %p265 = por %p263, %p264
      %p266 = scmp.ne.s32.totalorder %s258, %s260
      %p267 = scmp.eq.s32.totalorder %s41, 3
      %p268 = por %p266, %p267
      %p269 = scmp.ne.s32.totalorder %s260, %s261
      %p270 = scmp.eq.s32.totalorder %s41, 0
      %p271 = por %p269, %p270
      %p272 = scmp.ne.s32.totalorder %s260, %s261
      %p273 = scmp.eq.s32.totalorder %s42, 3
      %p274 = por %p272, %p273
      %p276 = scmp.ne.s32.totalorder %s261, %s275
      %p277 = scmp.eq.s32.totalorder %s42, 0
      %p278 = por %p276, %p277
      %s280 = sadd.s32 %s279, 1
      %p283 = scmp.eq.s32.totalorder %s36, 3
      %p284 = scmp.ne.s32.totalorder %s279, %s281
      %p285 = scmp.eq.s32.totalorder %s36, 0
      %p286 = por %p284, %p285
      %p287 = scmp.ne.s32.totalorder %s279, %s281
      %p288 = scmp.eq.s32.totalorder %s41, 3
      %p289 = por %p287, %p288
      %p290 = scmp.ne.s32.totalorder %s281, %s282
      %p291 = scmp.eq.s32.totalorder %s41, 0
      %p292 = por %p290, %p291
      %p293 = scmp.ne.s32.totalorder %s281, %s282
      %p294 = scmp.eq.s32.totalorder %s42, 3
      %p295 = por %p293, %p294
      %p297 = scmp.ne.s32.totalorder %s282, %s296
      %p298 = scmp.eq.s32.totalorder %s42, 0
      %p299 = por %p297, %p298
      %s301 = sadd.s32 %s300, 1
      %p304 = scmp.eq.s32.totalorder %s36, 3
      %p305 = scmp.ne.s32.totalorder %s300, %s302
      %p306 = scmp.eq.s32.totalorder %s36, 0
      %p307 = por %p305, %p306
      %p308 = scmp.ne.s32.totalorder %s300, %s302
      %p309 = scmp.eq.s32.totalorder %s41, 3
      %p310 = por %p308, %p309
      %p311 = scmp.ne.s32.totalorder %s302, %s303
      %p312 = scmp.eq.s32.totalorder %s41, 0
      %p313 = por %p311, %p312
      %p314 = scmp.ne.s32.totalorder %s302, %s303
      %p315 = scmp.eq.s32.totalorder %s42, 3
      %p316 = por %p314, %p315
      %p318 = scmp.ne.s32.totalorder %s303, %s317
      %p319 = scmp.eq.s32.totalorder %s42, 0
      %p320 = por %p318, %p319
      %s322 = sadd.s32 %s321, 1
      %p325 = scmp.eq.s32.totalorder %s36, 3
      %p326 = scmp.ne.s32.totalorder %s321, %s323
      %p327 = scmp.eq.s32.totalorder %s36, 0
      %p328 = por %p326, %p327
      %p329 = scmp.ne.s32.totalorder %s321, %s323
      %p330 = scmp.eq.s32.totalorder %s41, 3
      %p331 = por %p329, %p330
      %p332 = scmp.ne.s32.totalorder %s323, %s324
      %p333 = scmp.eq.s32.totalorder %s41, 0
      %p334 = por %p332, %p333
      %p335 = scmp.ne.s32.totalorder %s323, %s324
      %p336 = scmp.eq.s32.totalorder %s42, 3
      %p337 = por %p335, %p336
      %p339 = scmp.ne.s32.totalorder %s324, %s338
      %p340 = scmp.eq.s32.totalorder %s42, 0
      %p341 = por %p339, %p340
      %s343 = sadd.s32 %s342, 1
      %p346 = scmp.eq.s32.totalorder %s36, 3
      %p347 = scmp.ne.s32.totalorder %s342, %s344
      %p348 = scmp.eq.s32.totalorder %s36, 0
      %p349 = por %p347, %p348
      %p350 = scmp.ne.s32.totalorder %s342, %s344
      %p351 = scmp.eq.s32.totalorder %s41, 3
      %p352 = por %p350, %p351
      %p353 = scmp.ne.s32.totalorder %s344, %s345
      %p354 = scmp.eq.s32.totalorder %s41, 0
      %p355 = por %p353, %p354
      %p356 = scmp.ne.s32.totalorder %s344, %s345
      %p357 = scmp.eq.s32.totalorder %s42, 3
      %p358 = por %p356, %p357
      %p360 = scmp.ne.s32.totalorder %s345, %s359
      %p361 = scmp.eq.s32.totalorder %s42, 0
      %p362 = por %p360, %p361
      %s364 = sadd.s32 %s363, 1
      %p367 = scmp.eq.s32.totalorder %s36, 3
      %p368 = scmp.ne.s32.totalorder %s363, %s365
      %p369 = scmp.eq.s32.totalorder %s36, 0
      %p370 = por %p368, %p369
      %p371 = scmp.ne.s32.totalorder %s363, %s365
      %p372 = scmp.eq.s32.totalorder %s41, 3
      %p373 = por %p371, %p372
      %p374 = scmp.ne.s32.totalorder %s365, %s366
      %p375 = scmp.eq.s32.totalorder %s41, 0
      %p376 = por %p374, %p375
      %p377 = scmp.ne.s32.totalorder %s365, %s366
      %p378 = scmp.eq.s32.totalorder %s42, 3
      %p379 = por %p377, %p378
      %p381 = scmp.ne.s32.totalorder %s366, %s380
      %p382 = scmp.eq.s32.totalorder %s42, 0
      %p383 = por %p381, %p382
      %s385 = sadd.s32 %s384, 1
      %p388 = scmp.eq.s32.totalorder %s36, 3
      %p389 = scmp.ne.s32.totalorder %s384, %s386
      %p390 = scmp.eq.s32.totalorder %s36, 0
      %p391 = por %p389, %p390
      %p392 = scmp.ne.s32.totalorder %s384, %s386
      %p393 = scmp.eq.s32.totalorder %s41, 3
      %p394 = por %p392, %p393
      %p395 = scmp.ne.s32.totalorder %s386, %s387
      %p396 = scmp.eq.s32.totalorder %s41, 0
      %p397 = por %p395, %p396
      %p398 = scmp.ne.s32.totalorder %s386, %s387
      %p399 = scmp.eq.s32.totalorder %s42, 3
      %p400 = por %p398, %p399
      %p402 = scmp.ne.s32.totalorder %s387, %s401
      %p403 = scmp.eq.s32.totalorder %s42, 0
      %p404 = por %p402, %p403
      %s406 = sadd.s32 %s405, 1
      %p409 = scmp.eq.s32.totalorder %s36, 3
      %p410 = scmp.ne.s32.totalorder %s405, %s407
      %p411 = scmp.eq.s32.totalorder %s36, 0
      %p412 = por %p410, %p411
      %p413 = scmp.ne.s32.totalorder %s405, %s407
      %p414 = scmp.eq.s32.totalorder %s41, 3
      %p415 = por %p413, %p414
      %p416 = scmp.ne.s32.totalorder %s407, %s408
      %p417 = scmp.eq.s32.totalorder %s41, 0
      %p418 = por %p416, %p417
      %p419 = scmp.ne.s32.totalorder %s407, %s408
      %p420 = scmp.eq.s32.totalorder %s42, 3
      %p421 = por %p419, %p420
      %p423 = scmp.ne.s32.totalorder %s408, %s422
      %p424 = scmp.eq.s32.totalorder %s42, 0
      %p425 = por %p423, %p424
      %s427 = sadd.s32 %s426, 1
      %p430 = scmp.eq.s32.totalorder %s36, 3
      %p431 = scmp.ne.s32.totalorder %s426, %s428
      %p432 = scmp.eq.s32.totalorder %s36, 0
      %p433 = por %p431, %p432
      %p434 = scmp.ne.s32.totalorder %s426, %s428
      %p435 = scmp.eq.s32.totalorder %s41, 3
      %p436 = por %p434, %p435
      %p437 = scmp.ne.s32.totalorder %s428, %s429
      %p438 = scmp.eq.s32.totalorder %s41, 0
      %p439 = por %p437, %p438
      %p440 = scmp.ne.s32.totalorder %s428, %s429
      %p441 = scmp.eq.s32.totalorder %s42, 3
      %p442 = por %p440, %p441
      %p444 = scmp.ne.s32.totalorder %s429, %s443
      %p445 = scmp.eq.s32.totalorder %s42, 0
      %p446 = por %p444, %p445
      %s448 = sadd.s32 %s447, 1
      %p451 = scmp.eq.s32.totalorder %s36, 3
      %p452 = scmp.ne.s32.totalorder %s447, %s449
      %p453 = scmp.eq.s32.totalorder %s36, 0
      %p454 = por %p452, %p453
      %p455 = scmp.ne.s32.totalorder %s447, %s449
      %p456 = scmp.eq.s32.totalorder %s41, 3
      %p457 = por %p455, %p456
      %p458 = scmp.ne.s32.totalorder %s449, %s450
      %p459 = scmp.eq.s32.totalorder %s41, 0
      %p460 = por %p458, %p459
      %p461 = scmp.ne.s32.totalorder %s449, %s450
      %p462 = scmp.eq.s32.totalorder %s42, 3
      %p463 = por %p461, %p462
      %p465 = scmp.ne.s32.totalorder %s450, %s464
      %p466 = scmp.eq.s32.totalorder %s42, 0
      %p467 = por %p465, %p466
      %s469 = sadd.s32 %s468, 1
      %p472 = scmp.eq.s32.totalorder %s36, 3
      %p473 = scmp.ne.s32.totalorder %s468, %s470
      %p474 = scmp.eq.s32.totalorder %s36, 0
      %p475 = por %p473, %p474
      %p476 = scmp.ne.s32.totalorder %s468, %s470
      %p477 = scmp.eq.s32.totalorder %s41, 3
      %p478 = por %p476, %p477
      %p479 = scmp.ne.s32.totalorder %s470, %s471
      %p480 = scmp.eq.s32.totalorder %s41, 0
      %p481 = por %p479, %p480
      %p482 = scmp.ne.s32.totalorder %s470, %s471
      %p483 = scmp.eq.s32.totalorder %s42, 3
      %p484 = por %p482, %p483
      %p486 = scmp.ne.s32.totalorder %s471, %s485
      %p487 = scmp.eq.s32.totalorder %s42, 0
      %p488 = por %p486, %p487
      %s490 = sadd.s32 %s489, 1
      %p493 = scmp.eq.s32.totalorder %s36, 3
      %p494 = scmp.ne.s32.totalorder %s489, %s491
      %p495 = scmp.eq.s32.totalorder %s36, 0
      %p496 = por %p494, %p495
      %p497 = scmp.ne.s32.totalorder %s489, %s491
      %p498 = scmp.eq.s32.totalorder %s41, 3
      %p499 = por %p497, %p498
      %p500 = scmp.ne.s32.totalorder %s491, %s492
      %p501 = scmp.eq.s32.totalorder %s41, 0
      %p502 = por %p500, %p501
      %p503 = scmp.ne.s32.totalorder %s491, %s492
      %p504 = scmp.eq.s32.totalorder %s42, 3
      %p505 = por %p503, %p504
      %p507 = scmp.ne.s32.totalorder %s492, %s506
      %p508 = scmp.eq.s32.totalorder %s42, 0
      %p509 = por %p507, %p508
      %s511 = sadd.s32 %s510, 1
      %p514 = scmp.eq.s32.totalorder %s36, 3
      %p515 = scmp.ne.s32.totalorder %s510, %s512
      %p516 = scmp.eq.s32.totalorder %s36, 0
      %p517 = por %p515, %p516
      %p518 = scmp.ne.s32.totalorder %s510, %s512
      %p519 = scmp.eq.s32.totalorder %s41, 3
      %p520 = por %p518, %p519
      %p521 = scmp.ne.s32.totalorder %s512, %s513
      %p522 = scmp.eq.s32.totalorder %s41, 0
      %p523 = por %p521, %p522
      %p524 = scmp.ne.s32.totalorder %s512, %s513
      %p525 = scmp.eq.s32.totalorder %s42, 3
      %p526 = por %p524, %p525
      %p528 = scmp.ne.s32.totalorder %s513, %s527
      %p529 = scmp.eq.s32.totalorder %s42, 0
      %p530 = por %p528, %p529
      %s532 = sadd.s32 %s531, 1
      %p535 = scmp.eq.s32.totalorder %s36, 3
      %p536 = scmp.ne.s32.totalorder %s531, %s533
      %p537 = scmp.eq.s32.totalorder %s36, 0
      %p538 = por %p536, %p537
      %p539 = scmp.ne.s32.totalorder %s531, %s533
      %p540 = scmp.eq.s32.totalorder %s41, 3
      %p541 = por %p539, %p540
      %p542 = scmp.ne.s32.totalorder %s533, %s534
      %p543 = scmp.eq.s32.totalorder %s41, 0
      %p544 = por %p542, %p543
      %p545 = scmp.ne.s32.totalorder %s533, %s534
      %p546 = scmp.eq.s32.totalorder %s42, 3
      %p547 = por %p545, %p546
      %p549 = scmp.ne.s32.totalorder %s534, %s548
      %p550 = scmp.eq.s32.totalorder %s42, 0
      %p551 = por %p549, %p550
      %s553 = sadd.s32 %s552, 1
      %p556 = scmp.eq.s32.totalorder %s36, 3
      %p557 = scmp.ne.s32.totalorder %s552, %s554
      %p558 = scmp.eq.s32.totalorder %s36, 0
      %p559 = por %p557, %p558
      %p560 = scmp.ne.s32.totalorder %s552, %s554
      %p561 = scmp.eq.s32.totalorder %s41, 3
      %p562 = por %p560, %p561
      %p563 = scmp.ne.s32.totalorder %s554, %s555
      %p564 = scmp.eq.s32.totalorder %s41, 0
      %p565 = por %p563, %p564
      %p566 = scmp.ne.s32.totalorder %s554, %s555
      %p567 = scmp.eq.s32.totalorder %s42, 3
      %p568 = por %p566, %p567
      %p570 = scmp.ne.s32.totalorder %s555, %s569
      %p571 = scmp.eq.s32.totalorder %s42, 0
      %p572 = por %p570, %p571
      %s574 = sadd.s32 %s573, 1
      %p577 = scmp.eq.s32.totalorder %s36, 3
      %p578 = scmp.ne.s32.totalorder %s573, %s575
      %p579 = scmp.eq.s32.totalorder %s36, 0
      %p580 = por %p578, %p579
      %p581 = scmp.ne.s32.totalorder %s573, %s575
      %p582 = scmp.eq.s32.totalorder %s41, 3
      %p583 = por %p581, %p582
      %p584 = scmp.ne.s32.totalorder %s575, %s576
      %p585 = scmp.eq.s32.totalorder %s41, 0
      %p586 = por %p584, %p585
      %p587 = scmp.ne.s32.totalorder %s575, %s576
      %p588 = scmp.eq.s32.totalorder %s42, 3
      %p589 = por %p587, %p588
      %p591 = scmp.ne.s32.totalorder %s576, %s590
      %p592 = scmp.eq.s32.totalorder %s42, 0
      %p593 = por %p591, %p592
      %s595 = sadd.s32 %s594, 1
      %p598 = scmp.eq.s32.totalorder %s36, 3
      %p599 = scmp.ne.s32.totalorder %s594, %s596
      %p600 = scmp.eq.s32.totalorder %s36, 0
      %p601 = por %p599, %p600
      %p602 = scmp.ne.s32.totalorder %s594, %s596
      %p603 = scmp.eq.s32.totalorder %s41, 3
      %p604 = por %p602, %p603
      %p605 = scmp.ne.s32.totalorder %s596, %s597
      %p606 = scmp.eq.s32.totalorder %s41, 0
      %p607 = por %p605, %p606
      %p608 = scmp.ne.s32.totalorder %s596, %s597
      %p609 = scmp.eq.s32.totalorder %s42, 3
      %p610 = por %p608, %p609
      %p612 = scmp.ne.s32.totalorder %s597, %s611
      %p613 = scmp.eq.s32.totalorder %s42, 0
      %p614 = por %p612, %p613
      %s616 = sadd.s32 %s615, 1
      %p619 = scmp.eq.s32.totalorder %s36, 3
      %p620 = scmp.ne.s32.totalorder %s615, %s617
      %p621 = scmp.eq.s32.totalorder %s36, 0
      %p622 = por %p620, %p621
      %p623 = scmp.ne.s32.totalorder %s615, %s617
      %p624 = scmp.eq.s32.totalorder %s41, 3
      %p625 = por %p623, %p624
      %p626 = scmp.ne.s32.totalorder %s617, %s618
      %p627 = scmp.eq.s32.totalorder %s41, 0
      %p628 = por %p626, %p627
      %p629 = scmp.ne.s32.totalorder %s617, %s618
      %p630 = scmp.eq.s32.totalorder %s42, 3
      %p631 = por %p629, %p630
      %p633 = scmp.ne.s32.totalorder %s618, %s632
      %p634 = scmp.eq.s32.totalorder %s42, 0
      %p635 = por %p633, %p634
      %s636 = ssub.s32 %s36, %s43
      %p637 = scmp.eq.s32.totalorder %s636, 0
      %s639 = sadd.s32 %s638, 1
      %s640 = scalar_select %p637, %s638, %s639
      %p643 = pneg %p637
      %p644 = scmp.eq.s32.totalorder %s36, 3
      %p645 = por %p643, %p644
      %p646 = scmp.ne.s32.totalorder %s638, %s641
      %p647 = scmp.eq.s32.totalorder %s36, 0
      %p648 = por %p646, %p647
      %p649 = scmp.ne.s32.totalorder %s638, %s641
      %p650 = scmp.eq.s32.totalorder %s41, 3
      %p651 = por %p649, %p650
      %p652 = scmp.ne.s32.totalorder %s641, %s642
      %p653 = scmp.eq.s32.totalorder %s41, 0
      %p654 = por %p652, %p653
      %p655 = scmp.ne.s32.totalorder %s641, %s642
      %p656 = scmp.eq.s32.totalorder %s42, 3
      %p657 = por %p655, %p656
      %p659 = scmp.ne.s32.totalorder %s642, %s658
      %p660 = scmp.eq.s32.totalorder %s42, 0
      %p661 = por %p659, %p660
      %p662 = scmp.le.s32.totalorder 1, %s36
      %p663 = scmp.lt.s32.totalorder %s36, 5
      %p664 = pnand %p662, %p663
      %p665 = pneg %p664
      // Predicated region
      $region9: #{tpu_custom_call.1} parent=5 // pred_check
        _
      $region10: #{tpu_custom_call.1} parent=5 // pred_check_branch
        %667 = sbr.rel (%p664) target = $region12
      $region11: #{tpu_custom_call.1} parent=5 // pred_region
        %s668 = ssub.s32 %s36, 1
        // Predicated region
        $region13: #{tpu_custom_call.1} parent=11 // pred_check
          %p669 = pneg %p187
        $region14: #{tpu_custom_call.1} parent=11 // pred_check_branch
          %671 = sbr.rel (%p669) target = $region16
        $region15: #{tpu_custom_call.1} parent=11 // pred_region
          _
        $region16: #{tpu_custom_call.1} parent=11 // pred_fallthru
          _
        // Predicated region
        $region17: #{tpu_custom_call.1} parent=11 // pred_check
          %p672 = pneg %p208
        $region18: #{tpu_custom_call.1} parent=11 // pred_check_branch
          %674 = sbr.rel (%p672) target = $region20
        $region19: #{tpu_custom_call.1} parent=11 // pred_region
          _
        $region20: #{tpu_custom_call.1} parent=11 // pred_fallthru
          _
        // Predicated region
        $region21: #{tpu_custom_call.1} parent=11 // pred_check
          %p675 = pneg %p229
        $region22: #{tpu_custom_call.1} parent=11 // pred_check_branch
          %677 = sbr.rel (%p675) target = $region24
        $region23: #{tpu_custom_call.1} parent=11 // pred_region
          _
        $region24: #{tpu_custom_call.1} parent=11 // pred_fallthru
          _
        // Predicated region
        $region25: #{tpu_custom_call.1} parent=11 // pred_check
          %p678 = pneg %p250
        $region26: #{tpu_custom_call.1} parent=11 // pred_check_branch
          %680 = sbr.rel (%p678) target = $region28
        $region27: #{tpu_custom_call.1} parent=11 // pred_region
          _
        $region28: #{tpu_custom_call.1} parent=11 // pred_fallthru
          _
        // Predicated region
        $region29: #{tpu_custom_call.1} parent=11 // pred_check
          %p681 = pneg %p271
        $region30: #{tpu_custom_call.1} parent=11 // pred_check_branch
          %683 = sbr.rel (%p681) target = $region32
        $region31: #{tpu_custom_call.1} parent=11 // pred_region
          _
        $region32: #{tpu_custom_call.1} parent=11 // pred_fallthru
          _
        // Predicated region
        $region33: #{tpu_custom_call.1} parent=11 // pred_check
          %p684 = pneg %p292
        $region34: #{tpu_custom_call.1} parent=11 // pred_check_branch
          %686 = sbr.rel (%p684) target = $region36
        $region35: #{tpu_custom_call.1} parent=11 // pred_region
          _
        $region36: #{tpu_custom_call.1} parent=11 // pred_fallthru
          _
        // Predicated region
        $region37: #{tpu_custom_call.1} parent=11 // pred_check
          %p687 = pneg %p313
        $region38: #{tpu_custom_call.1} parent=11 // pred_check_branch
          %689 = sbr.rel (%p687) target = $region40
        $region39: #{tpu_custom_call.1} parent=11 // pred_region
          _
        $region40: #{tpu_custom_call.1} parent=11 // pred_fallthru
          _
        // Predicated region
        $region41: #{tpu_custom_call.1} parent=11 // pred_check
          %p690 = pneg %p334
        $region42: #{tpu_custom_call.1} parent=11 // pred_check_branch
          %692 = sbr.rel (%p690) target = $region44
        $region43: #{tpu_custom_call.1} parent=11 // pred_region
          _
        $region44: #{tpu_custom_call.1} parent=11 // pred_fallthru
          _
        // Predicated region
        $region45: #{tpu_custom_call.1} parent=11 // pred_check
          %p693 = pneg %p355
        $region46: #{tpu_custom_call.1} parent=11 // pred_check_branch
          %695 = sbr.rel (%p693) target = $region48
        $region47: #{tpu_custom_call.1} parent=11 // pred_region
          _
        $region48: #{tpu_custom_call.1} parent=11 // pred_fallthru
          _
        // Predicated region
        $region49: #{tpu_custom_call.1} parent=11 // pred_check
          %p696 = pneg %p376
        $region50: #{tpu_custom_call.1} parent=11 // pred_check_branch
          %698 = sbr.rel (%p696) target = $region52
        $region51: #{tpu_custom_call.1} parent=11 // pred_region
          _
        $region52: #{tpu_custom_call.1} parent=11 // pred_fallthru
          _
        // Predicated region
        $region53: #{tpu_custom_call.1} parent=11 // pred_check
          %p699 = pneg %p397
        $region54: #{tpu_custom_call.1} parent=11 // pred_check_branch
          %701 = sbr.rel (%p699) target = $region56
        $region55: #{tpu_custom_call.1} parent=11 // pred_region
          _
        $region56: #{tpu_custom_call.1} parent=11 // pred_fallthru
          _
        // Predicated region
        $region57: #{tpu_custom_call.1} parent=11 // pred_check
          %p702 = pneg %p418
        $region58: #{tpu_custom_call.1} parent=11 // pred_check_branch
          %704 = sbr.rel (%p702) target = $region60
        $region59: #{tpu_custom_call.1} parent=11 // pred_region
          _
        $region60: #{tpu_custom_call.1} parent=11 // pred_fallthru
          _
        // Predicated region
        $region61: #{tpu_custom_call.1} parent=11 // pred_check
          %p705 = pneg %p439
        $region62: #{tpu_custom_call.1} parent=11 // pred_check_branch
          %707 = sbr.rel (%p705) target = $region64
        $region63: #{tpu_custom_call.1} parent=11 // pred_region
          _
        $region64: #{tpu_custom_call.1} parent=11 // pred_fallthru
          _
        // Predicated region
        $region65: #{tpu_custom_call.1} parent=11 // pred_check
          %p708 = pneg %p460
        $region66: #{tpu_custom_call.1} parent=11 // pred_check_branch
          %710 = sbr.rel (%p708) target = $region68
        $region67: #{tpu_custom_call.1} parent=11 // pred_region
          _
        $region68: #{tpu_custom_call.1} parent=11 // pred_fallthru
          _
        // Predicated region
        $region69: #{tpu_custom_call.1} parent=11 // pred_check
          %p711 = pneg %p481
        $region70: #{tpu_custom_call.1} parent=11 // pred_check_branch
          %713 = sbr.rel (%p711) target = $region72
        $region71: #{tpu_custom_call.1} parent=11 // pred_region
          _
        $region72: #{tpu_custom_call.1} parent=11 // pred_fallthru
          _
        // Predicated region
        $region73: #{tpu_custom_call.1} parent=11 // pred_check
          %p714 = pneg %p502
        $region74: #{tpu_custom_call.1} parent=11 // pred_check_branch
          %716 = sbr.rel (%p714) target = $region76
        $region75: #{tpu_custom_call.1} parent=11 // pred_region
          _
        $region76: #{tpu_custom_call.1} parent=11 // pred_fallthru
          _
        // Predicated region
        $region77: #{tpu_custom_call.1} parent=11 // pred_check
          %p717 = pneg %p523
        $region78: #{tpu_custom_call.1} parent=11 // pred_check_branch
          %719 = sbr.rel (%p717) target = $region80
        $region79: #{tpu_custom_call.1} parent=11 // pred_region
          _
        $region80: #{tpu_custom_call.1} parent=11 // pred_fallthru
          _
        // Predicated region
        $region81: #{tpu_custom_call.1} parent=11 // pred_check
          %p720 = pneg %p544
        $region82: #{tpu_custom_call.1} parent=11 // pred_check_branch
          %722 = sbr.rel (%p720) target = $region84
        $region83: #{tpu_custom_call.1} parent=11 // pred_region
          _
        $region84: #{tpu_custom_call.1} parent=11 // pred_fallthru
          _
        // Predicated region
        $region85: #{tpu_custom_call.1} parent=11 // pred_check
          %p723 = pneg %p565
        $region86: #{tpu_custom_call.1} parent=11 // pred_check_branch
          %725 = sbr.rel (%p723) target = $region88
        $region87: #{tpu_custom_call.1} parent=11 // pred_region
          _
        $region88: #{tpu_custom_call.1} parent=11 // pred_fallthru
          _
        // Predicated region
        $region89: #{tpu_custom_call.1} parent=11 // pred_check
          %p726 = pneg %p586
        $region90: #{tpu_custom_call.1} parent=11 // pred_check_branch
          %728 = sbr.rel (%p726) target = $region92
        $region91: #{tpu_custom_call.1} parent=11 // pred_region
          _
        $region92: #{tpu_custom_call.1} parent=11 // pred_fallthru
          _
        // Predicated region
        $region93: #{tpu_custom_call.1} parent=11 // pred_check
          %p729 = pneg %p607
        $region94: #{tpu_custom_call.1} parent=11 // pred_check_branch
          %731 = sbr.rel (%p729) target = $region96
        $region95: #{tpu_custom_call.1} parent=11 // pred_region
          _
        $region96: #{tpu_custom_call.1} parent=11 // pred_fallthru
          _
        // Predicated region
        $region97: #{tpu_custom_call.1} parent=11 // pred_check
          %p732 = pneg %p628
        $region98: #{tpu_custom_call.1} parent=11 // pred_check_branch
          %734 = sbr.rel (%p732) target = $region100
        $region99: #{tpu_custom_call.1} parent=11 // pred_region
          _
        $region100: #{tpu_custom_call.1} parent=11 // pred_fallthru
          _
      $region12: #{tpu_custom_call.1} parent=5 // pred_fallthru
        _
      %p735 = scmp.lt.s32.totalorder %s36, 4
      // Predicated region
      $region101: #{tpu_custom_call.1} parent=5 // pred_check
        %p736 = pneg %p735
      $region102: #{tpu_custom_call.1} parent=5 // pred_check_branch
        %738 = sbr.rel (%p736) target = $region104
      $region103: #{tpu_custom_call.1} parent=5 // pred_region
        // Predicated region
        $region105: #{tpu_custom_call.1} parent=103 // pred_check
          %p739 = pneg %p56
        $region106: #{tpu_custom_call.1} parent=103 // pred_check_branch
          %741 = sbr.rel (%p739) target = $region108
        $region107: #{tpu_custom_call.1} parent=103 // pred_region
          %p742 = scmp.lt.s32.totalorder %s36, 3
          %s743 = scalar_select %p742, %s36, 3
          %s744 = smul.addr %s743, 2
          %s745 = smul.addr %s744, 8
          %s746 = scalar_lea.vmem %s0, %s745
        $region108: #{tpu_custom_call.1} parent=103 // pred_fallthru
          _
        // Predicated region
        $region109: #{tpu_custom_call.1} parent=103 // pred_check
          %p747 = pneg %p82
        $region110: #{tpu_custom_call.1} parent=103 // pred_check_branch
          %749 = sbr.rel (%p747) target = $region112
        $region111: #{tpu_custom_call.1} parent=103 // pred_region
          %p750 = scmp.lt.s32.totalorder %s36, 3
          %s751 = scalar_select %p750, %s36, 3
          %s752 = smul.addr %s751, 2
          %s753 = smul.addr %s752, 8
          %s754 = scalar_lea.vmem %s1, %s753
        $region112: #{tpu_custom_call.1} parent=103 // pred_fallthru
          _
        // Predicated region
        $region113: #{tpu_custom_call.1} parent=103 // pred_check
          %p755 = pneg %p108
        $region114: #{tpu_custom_call.1} parent=103 // pred_check_branch
          %757 = sbr.rel (%p755) target = $region116
        $region115: #{tpu_custom_call.1} parent=103 // pred_region
          %p758 = scmp.lt.s32.totalorder %s36, 3
          %s759 = scalar_select %p758, %s36, 3
          %s760 = scalar_lea.vmem %s2, %s759
        $region116: #{tpu_custom_call.1} parent=103 // pred_fallthru
          _
        // Predicated region
        $region117: #{tpu_custom_call.1} parent=103 // pred_check
          %p761 = pneg %p134
        $region118: #{tpu_custom_call.1} parent=103 // pred_check_branch
          %763 = sbr.rel (%p761) target = $region120
        $region119: #{tpu_custom_call.1} parent=103 // pred_region
          %p764 = scmp.lt.s32.totalorder %s36, 3
          %s765 = scalar_select %p764, %s36, 3
          %s766 = smul.addr %s765, 8
          %s767 = scalar_lea.vmem %s3, %s766
        $region120: #{tpu_custom_call.1} parent=103 // pred_fallthru
          _
        // Predicated region
        $region121: #{tpu_custom_call.1} parent=103 // pred_check
          %p768 = pneg %p160
        $region122: #{tpu_custom_call.1} parent=103 // pred_check_branch
          %770 = sbr.rel (%p768) target = $region124
        $region123: #{tpu_custom_call.1} parent=103 // pred_region
          %p771 = scmp.lt.s32.totalorder %s36, 3
          %s772 = scalar_select %p771, %s36, 3
          %s773 = smul.addr %s772, 2
          %s774 = smul.addr %s773, 8
          %s775 = scalar_lea.vmem %s4, %s774
        $region124: #{tpu_custom_call.1} parent=103 // pred_fallthru
          _
      $region104: #{tpu_custom_call.1} parent=5 // pred_fallthru
        _
      %p776 = scmp.le.s32.totalorder 1, %s36
      %p777 = scmp.lt.s32.totalorder %s36, 5
      %p778 = pnand %p776, %p777
      %p779 = pneg %p778
      // Predicated region
      $region125: #{tpu_custom_call.1} parent=5 // pred_check
        _
      $region126: #{tpu_custom_call.1} parent=5 // pred_check_branch
        %781 = sbr.rel (%p778) target = $region128
      $region127: #{tpu_custom_call.1} parent=5 // pred_region
        %s782 = ssub.s32 %s36, 1
        %p783 = scmp.lt.s32.totalorder %s41, 3
        %s784 = scalar_select %p783, %s41, 3
        %s785 = smul.addr %s784, 2
        %s786 = smul.addr %s785, 8
        %s787 = scalar_lea.vmem %s0, %s786
        %p788 = pneg %p62
        %p789 = pneg %p59
        %p790 = scmp.lt.s32.totalorder %s41, 3
        %s791 = scalar_select %p790, %s41, 3
        %s792 = smul.addr %s791, 2
        %s793 = smul.addr %s792, 8
        %s794 = scalar_lea.vmem %s1, %s793
        %p795 = pneg %p88
        %p796 = pneg %p85
        %p797 = scmp.lt.s32.totalorder %s41, 3
        %s798 = scalar_select %p797, %s41, 3
        %s799 = scalar_lea.vmem %s2, %s798
        %p800 = pneg %p114
        %p801 = pneg %p111
        %p802 = scmp.lt.s32.totalorder %s41, 3
        %s803 = scalar_select %p802, %s41, 3
        %s804 = smul.addr %s803, 8
        %s805 = scalar_lea.vmem %s3, %s804
        %p806 = pneg %p140
        %p807 = pneg %p137
        %p808 = scmp.lt.s32.totalorder %s41, 3
        %s809 = scalar_select %p808, %s41, 3
        %s810 = smul.addr %s809, 2
        %s811 = smul.addr %s810, 8
        %s812 = scalar_lea.vmem %s4, %s811
        %p813 = pneg %p166
        %p814 = pneg %p163
        %p815 = pneg %p187
        %p816 = pneg %p184
        %p817 = pneg %p208
        %p818 = pneg %p205
        %p819 = pneg %p229
        %p820 = pneg %p226
        %p821 = pneg %p250
        %p822 = pneg %p247
        %p823 = pneg %p271
        %p824 = pneg %p268
        %p825 = pneg %p292
        %p826 = pneg %p289
        %p827 = pneg %p313
        %p828 = pneg %p310
        %p829 = pneg %p334
        %p830 = pneg %p331
        %p831 = pneg %p355
        %p832 = pneg %p352
        %p833 = pneg %p376
        %p834 = pneg %p373
        %p835 = pneg %p397
        %p836 = pneg %p394
        %p837 = pneg %p418
        %p838 = pneg %p415
        %p839 = pneg %p439
        %p840 = pneg %p436
        %p841 = pneg %p460
        %p842 = pneg %p457
        %p843 = pneg %p481
        %p844 = pneg %p478
        %p845 = pneg %p502
        %p846 = pneg %p499
        %p847 = pneg %p523
        %p848 = pneg %p520
        %p849 = pneg %p544
        %p850 = pneg %p541
        %p851 = pneg %p565
        %p852 = pneg %p562
        %p853 = pneg %p586
        %p854 = pneg %p583
        %p855 = pneg %p607
        %p856 = pneg %p604
        %p857 = pneg %p628
        %p858 = pneg %p625
        %p859 = pneg %p654
        %p860 = pneg %p651
        %s861 = sand.u32 %s641, 1
        %s862 = scalar_lea.sflag [#allocation3], %s861
        %s863 = sand.u32 %s641, 1
        %s864 = smul.addr %s863, 8
        %s865 = scalar_lea.vmem [#allocation2], %s864
        %p866 = scmp.lt.s32.totalorder %s41, 3
        %s867 = scalar_select %p866, %s41, 3
        %s868 = smul.addr %s867, 2
        %s869 = smul.addr %s868, 8
        %s870 = scalar_lea.vmem %s0, %s869
        %p871 = scmp.lt.s32.totalorder %s41, 3
        %s872 = scalar_select %p871, %s41, 3
        %s873 = smul.addr %s872, 2
        %s874 = smul.addr %s873, 8
        %s875 = scalar_lea.vmem %s1, %s874
        %p876 = scmp.lt.s32.totalorder %s41, 3
        %s877 = scalar_select %p876, %s41, 3
        %s878 = scalar_lea.vmem %s2, %s877
        %p879 = scmp.lt.s32.totalorder %s41, 3
        %s880 = scalar_select %p879, %s41, 3
        %s881 = smul.addr %s880, 8
        %s882 = scalar_lea.vmem %s3, %s881
        %p883 = scmp.lt.s32.totalorder %s41, 3
        %s884 = scalar_select %p883, %s41, 3
        %s885 = smul.addr %s884, 2
        %s886 = smul.addr %s885, 8
        %s887 = scalar_lea.vmem %s4, %s886
        %v889 = vld [vmem:[%s882] sm:$0xff]
        %v890 = vld [vmem:[%s5] sm:$0xf]
        %v891 = vpack.c.bf16 %v889, %v889
        %v892 = vld [vmem:[%s6] sm:$0x1]
        %v894 = vlaneseq
        %v895 = vshrl.u32 %v894, 7
        %v896 = vsub.s32 0, %v895
        %v897 = vrot.slane %v892, %v896
        %vm899 = vcmask 64512
        %v901 = vsel %vm899, %v891, 0
        %vm903 = vcmask 1043456
        %v905 = vsel %vm903, %v890, 0
        %907 = vmatprep.subr.bf16.mxu0 0
        %908 = vmatpush1.bf16.msra.mxu0 %v905
        %909 = vmatprep.subr.bf16.mxu0 0
        %910 = vmatpush1.bf16.msra.mxu0 0
        %911 = vmatprep.subr.bf16.mxu0 0
        %912 = vmatpush1.bf16.msra.mxu0 0
        %913 = vmatprep.subr.bf16.mxu0 0
        %914 = vmatpush1.bf16.msra.mxu0 0
        %915 = vmatprep.subr.bf16.mxu0 0
        %916 = vmatpush1.bf16.msra.mxu0 0
        %917 = vmatprep.subr.bf16.mxu0 0
        %918 = vmatpush1.bf16.msra.mxu0 0
        %919 = vmatprep.subr.bf16.mxu0 0
        %920 = vmatpush1.bf16.msra.mxu0 0
        %921 = vmatprep.subr.bf16.mxu0 0
        %922 = vmatpush1.bf16.msra.mxu0 0
        %923 = vmatprep.subr.bf16.mxu0 0
        %924 = vmatpush1.bf16.msra.mxu0 0
        %925 = vmatprep.subr.bf16.mxu0 0
        %926 = vmatpush1.bf16.msra.mxu0 0
        %927 = vmatprep.subr.bf16.mxu0 0
        %928 = vmatpush1.bf16.msra.mxu0 0
        %929 = vmatprep.subr.bf16.mxu0 0
        %930 = vmatpush1.bf16.msra.mxu0 0
        %931 = vmatprep.subr.bf16.mxu0 0
        %932 = vmatpush1.bf16.msra.mxu0 0
        %933 = vmatprep.subr.bf16.mxu0 0
        %934 = vmatpush1.bf16.msra.mxu0 0
        %935 = vmatprep.subr.bf16.mxu0 0
        %936 = vmatpush1.bf16.msra.mxu0 0
        %937 = vmatprep.subr.bf16.mxu0 0
        %938 = vmatpush1.bf16.msra.mxu0 0
        %939 = vmatprep.mubr.bf16.mxu0 0
        %940 = vmatmul.mubr.bf16.gmra.mrb[0].mxu0 %v901
        %v941 = vpop.f32.mrb[0].mxu0
        %v942 = vadd.f32 %v897, %v941
        %v943 = vpop.f32.mrb[0].mxu0
        %v944 = vpop.f32.mrb[0].mxu0
        %v945 = vpop.f32.mrb[0].mxu0
        %946 = vdwg.mxu0
        %v947 = vxor.u32 %v942, 2147483648
        %v948 = vmul.f32 %v947, 1.442695
        %v949 = vpow.pop %v948
        %v950 = vadd.f32 %v949, 1.0
        %v951 = vrcp.pop %v950
        %v952 = vmul.f32 1.0, %v951
        %v953 = vmul.f32 %v942, %v952
        %v954 = vld [vmem:[%s7] sm:$0xf]
        %v955 = vld [vmem:[%s7 + $0x4] sm:$0xf]
        %v956 = vld [vmem:[%s7 + $0x8] sm:$0xf]
        %v957 = vld [vmem:[%s7 + $0xc] sm:$0xf]
        %v958 = vld [vmem:[%s7 + $0x10] sm:$0xf]
        %v959 = vld [vmem:[%s7 + $0x14] sm:$0xf]
        %v960 = vld [vmem:[%s7 + $0x18] sm:$0xf]
        %v961 = vld [vmem:[%s7 + $0x1c] sm:$0xf]
        %v962 = vld [vmem:[%s7 + $0x20] sm:$0xf]
        %v963 = vld [vmem:[%s7 + $0x24] sm:$0xf]
        %v964 = vld [vmem:[%s7 + $0x28] sm:$0xf]
        %v965 = vld [vmem:[%s7 + $0x2c] sm:$0xf]
        %v966 = vld [vmem:[%s7 + $0x30] sm:$0xf]
        %v967 = vld [vmem:[%s7 + $0x34] sm:$0xf]
        %v968 = vld [vmem:[%s7 + $0x38] sm:$0xf]
        %v969 = vld [vmem:[%s7 + $0x3c] sm:$0xf]
        %v970 = vpack.c.bf16 %v953, %v953
        %v971 = vld [vmem:[%s8] sm:$0x1]
        %v973 = vlaneseq
        %v974 = vshrl.u32 %v973, 7
        %v975 = vsub.s32 0, %v974
        %v976 = vrot.slane %v971, %v975
        %v994 = vunpack.c.l.b16 %v954
        %v995 = vunpack.c.l.b16 %v955
        %v996 = vunpack.c.l.b16 %v956
        %v997 = vunpack.c.l.b16 %v957
        %v998 = vunpack.c.l.b16 %v958
        %v999 = vunpack.c.l.b16 %v959
        %v1000 = vunpack.c.l.b16 %v960
        %v1001 = vunpack.c.l.b16 %v961
        %v1002 = vunpack.c.l.b16 %v962
        %v1003 = vunpack.c.l.b16 %v963
        %v1004 = vunpack.c.l.b16 %v964
        %v1005 = vunpack.c.l.b16 %v965
        %v1006 = vunpack.c.l.b16 %v966
        %v1007 = vunpack.c.l.b16 %v967
        %v1008 = vunpack.c.l.b16 %v968
        %v1009 = vunpack.c.l.b16 %v969
        %v1010 = vpack.c.b16 %v995, %v994
        %v1011 = vpack.c.b16 %v997, %v996
        %v1012 = vpack.c.b16 %v999, %v998
        %v1013 = vpack.c.b16 %v1001, %v1000
        %v1014 = vpack.c.b16 %v1003, %v1002
        %v1015 = vpack.c.b16 %v1005, %v1004
        %v1016 = vpack.c.b16 %v1007, %v1006
        %v1017 = vpack.c.b16 %v1009, %v1008
        %1026 = vmatprep.subr.bf16.mxu0 0
        %1027 = vmatpush1.bf16.msra.mxu0 %v1010
        %1028 = vmatprep.subr.bf16.mxu0 0
        %1029 = vmatpush1.bf16.msra.mxu0 %v1011
        %1030 = vmatprep.subr.bf16.mxu0 0
        %1031 = vmatpush1.bf16.msra.mxu0 %v1012
        %1032 = vmatprep.subr.bf16.mxu0 0
        %1033 = vmatpush1.bf16.msra.mxu0 %v1013
        %1034 = vmatprep.subr.bf16.mxu0 0
        %1035 = vmatpush1.bf16.msra.mxu0 %v1014
        %1036 = vmatprep.subr.bf16.mxu0 0
        %1037 = vmatpush1.bf16.msra.mxu0 %v1015
        %1038 = vmatprep.subr.bf16.mxu0 0
        %1039 = vmatpush1.bf16.msra.mxu0 %v1016
        %1040 = vmatprep.subr.bf16.mxu0 0
        %1041 = vmatpush1.bf16.msra.mxu0 %v1017
        %1042 = vmatprep.subr.bf16.mxu0 0
        %1043 = vmatpush1.bf16.msra.mxu0 0
        %1044 = vmatprep.subr.bf16.mxu0 0
        %1045 = vmatpush1.bf16.msra.mxu0 0
        %1046 = vmatprep.subr.bf16.mxu0 0
        %1047 = vmatpush1.bf16.msra.mxu0 0
        %1048 = vmatprep.subr.bf16.mxu0 0
        %1049 = vmatpush1.bf16.msra.mxu0 0
        %1050 = vmatprep.subr.bf16.mxu0 0
        %1051 = vmatpush1.bf16.msra.mxu0 0
        %1052 = vmatprep.subr.bf16.mxu0 0
        %1053 = vmatpush1.bf16.msra.mxu0 0
        %1054 = vmatprep.subr.bf16.mxu0 0
        %1055 = vmatpush1.bf16.msra.mxu0 0
        %1056 = vmatprep.subr.bf16.mxu0 0
        %1057 = vmatpush1.bf16.msra.mxu0 0
        %1058 = vmatprep.mubr.bf16.mxu0 0
        %1059 = vmatmul.mubr.bf16.gmra.mrb[0].mxu0 %v970
        %v1060 = vpop.f32.mrb[0].mxu0
        %v1061 = vadd.f32 %v976, %v1060
        %v1062 = vpop.f32.mrb[0].mxu0
        %v1063 = vpop.f32.mrb[0].mxu0
        %v1064 = vpop.f32.mrb[0].mxu0
        %1065 = vdwg.mxu0
        %v1066 = vlaneseq
        %v1067 = vand.u32 %v1066, 127
        %v1068 = vlaneseq
        %v1069 = vshrl.u32 %v1068, 7
        %v1070 = vld [vmem:[%s870] sm:$0xff]
        %v1071 = vld [vmem:[%s870 + $0x8] sm:$0xff]
        %1072 = vset.pattern.permute.xlu0 0
        %1073 = vperm.xlu0 %1072, %v1070
        %v1074 = vpop.permute.xlu0 %1073
        %1075 = vset.pattern.permute.xlu0 0
        %1076 = vperm.xlu0 %1075, %v1071
        %v1077 = vpop.permute.xlu0 %1076
        %vm1078 = vcmp.eq.s32.totalorder %v1067, %v1074
        %vm1079 = vcmp.eq.s32.totalorder %v1067, %v1077
        %v1080 = vsel %vm1078, 1, 0
        %v1081 = vsel %vm1079, 1, 0
        %v1082 = vcvt.s32.f32 %v1080
        %v1083 = vcvt.s32.f32 %v1081
        %v1084 = vld [vmem:[%s875] sm:$0xff]
        %v1085 = vld [vmem:[%s875 + $0x8] sm:$0xff]
        %1086 = vset.pattern.permute.xlu0 0
        %1087 = vperm.xlu0 %1086, %v1084
        %v1088 = vpop.permute.xlu0 %1087
        %1089 = vset.pattern.permute.xlu0 0
        %1090 = vperm.xlu0 %1089, %v1085
        %v1091 = vpop.permute.xlu0 %1090
        %vm1092 = vcmp.eq.s32.totalorder %v1067, %v1088
        %vm1093 = vcmp.eq.s32.totalorder %v1067, %v1091
        %v1094 = vsel %vm1092, 1, 0
        %v1095 = vsel %vm1093, 1, 0
        %v1096 = vcvt.s32.f32 %v1094
        %v1097 = vcvt.s32.f32 %v1095
        %v1098 = vld [vmem:[%s878] sm:$0x1]
        %v1099 = vlaneseq
        %v1100 = vshrl.u32 %v1099, 7
        %v1101 = vsub.s32 0, %v1100
        %v1102 = vrot.slane %v1098, %v1101
        %vm1103 = vcmp.eq.s32.totalorder %v1069, %v1102
        %v1104 = vsel %vm1103, 1, 0
        %v1105 = vcvt.s32.f32 %v1104
        %vm1106 = vcmp.lt.s32.totalorder %v1067, 32
        %v1107 = vld [vmem:[%s887] sm:$0xff]
        %v1108 = vld [vmem:[%s887 + $0x8] sm:$0xff]
        %v1110 = vsel %vm899, %v1096, 0
        %v1113 = vsel %vm899, %v1097, 0
        %1115 = vmatprep.subr.mxu0 0.0
        %1116 = vmatpush1.msra.mxu0 %v1061
        %1117 = vmatprep.subr.mxu0 0.0
        %1118 = vmatpush1.msra.mxu0 0.0
        %1119 = vmatprep.subr.mxu0 0.0
        %1120 = vmatpush1.msra.mxu0 0.0
        %1121 = vmatprep.subr.mxu0 0.0
        %1122 = vmatpush1.msra.mxu0 0.0
        %1123 = vmatprep.subr.mxu0 0.0
        %1124 = vmatpush1.msra.mxu0 0.0
        %1125 = vmatprep.subr.mxu0 0.0
        %1126 = vmatpush1.msra.mxu0 0.0
        %1127 = vmatprep.subr.mxu0 0.0
        %1128 = vmatpush1.msra.mxu0 0.0
        %1129 = vmatprep.subr.mxu0 0.0
        %1130 = vmatpush1.msra.mxu0 0.0
        %1131 = vmatprep.subr.mxu0 0.0
        %1132 = vmatpush1.msra.mxu0 0.0
        %1133 = vmatprep.subr.mxu0 0.0
        %1134 = vmatpush1.msra.mxu0 0.0
        %1135 = vmatprep.subr.mxu0 0.0
        %1136 = vmatpush1.msra.mxu0 0.0
        %1137 = vmatprep.subr.mxu0 0.0
        %1138 = vmatpush1.msra.mxu0 0.0
        %1139 = vmatprep.subr.mxu0 0.0
        %1140 = vmatpush1.msra.mxu0 0.0
        %1141 = vmatprep.subr.mxu0 0.0
        %1142 = vmatpush1.msra.mxu0 0.0
        %1143 = vmatprep.subr.mxu0 0.0
        %1144 = vmatpush1.msra.mxu0 0.0
        %1145 = vmatprep.subr.mxu0 0.0
        %1146 = vmatpush1.msra.mxu0 0.0
        %1147 = vmatprep.subr.mxu0 0.0
        %1148 = vmatpush1.msra.mxu0 0.0
        %1149 = vmatprep.subr.mxu0 0.0
        %1150 = vmatpush1.msra.mxu0 0.0
        %1151 = vmatprep.subr.mxu0 0.0
        %1152 = vmatpush1.msra.mxu0 0.0
        %1153 = vmatprep.subr.mxu0 0.0
        %1154 = vmatpush1.msra.mxu0 0.0
        %1155 = vmatprep.subr.mxu0 0.0
        %1156 = vmatpush1.msra.mxu0 0.0
        %1157 = vmatprep.subr.mxu0 0.0
        %1158 = vmatpush1.msra.mxu0 0.0
        %1159 = vmatprep.subr.mxu0 0.0
        %1160 = vmatpush1.msra.mxu0 0.0
        %1161 = vmatprep.subr.mxu0 0.0
        %1162 = vmatpush1.msra.mxu0 0.0
        %1163 = vmatprep.subr.mxu0 0.0
        %1164 = vmatpush1.msra.mxu0 0.0
        %1165 = vmatprep.subr.mxu0 0.0
        %1166 = vmatpush1.msra.mxu0 0.0
        %1167 = vmatprep.subr.mxu0 0.0
        %1168 = vmatpush1.msra.mxu0 0.0
        %1169 = vmatprep.subr.mxu0 0.0
        %1170 = vmatpush1.msra.mxu0 0.0
        %1171 = vmatprep.subr.mxu0 0.0
        %1172 = vmatpush1.msra.mxu0 0.0
        %1173 = vmatprep.subr.mxu0 0.0
        %1174 = vmatpush1.msra.mxu0 0.0
        %1175 = vmatprep.subr.mxu0 0.0
        %1176 = vmatpush1.msra.mxu0 0.0
        %1177 = vmatprep.subr.mxu0 0.0
        %1178 = vmatpush1.msra.mxu0 0.0
        %1179 = vmatprep.mubr.f32.mxu0 0.0
        %1180 = vmatmul.mubr.f32.gmra.mrb[0].mxu0 %v1110
        %v1181 = vpop.f32.mrb[0].mxu0
        %v1182 = vadd.f32 0.0, %v1181
        %v1183 = vpop.f32.mrb[0].mxu0
        %1184 = vmatprep.mubr.f32.mxu0 0.0
        %1185 = vmatmul.mubr.f32.gmra.mrb[0].mxu0 %v1113
        %v1186 = vpop.f32.mrb[0].mxu0
        %v1187 = vadd.f32 0.0, %v1186
        %v1188 = vpop.f32.mrb[0].mxu0
        %1189 = vdwg.mxu0
        %v1191 = vsel %vm899, %v1082, 0
        %v1194 = vsel %vm899, %v1083, 0
        %1196 = vmatprep.subr.mxu0 0.0
        %1197 = vmatpush1.msra.mxu0 %v1061
        %1198 = vmatprep.subr.mxu0 0.0
        %1199 = vmatpush1.msra.mxu0 0.0
        %1200 = vmatprep.subr.mxu0 0.0
        %1201 = vmatpush1.msra.mxu0 0.0
        %1202 = vmatprep.subr.mxu0 0.0
        %1203 = vmatpush1.msra.mxu0 0.0
        %1204 = vmatprep.subr.mxu0 0.0
        %1205 = vmatpush1.msra.mxu0 0.0
        %1206 = vmatprep.subr.mxu0 0.0
        %1207 = vmatpush1.msra.mxu0 0.0
        %1208 = vmatprep.subr.mxu0 0.0
        %1209 = vmatpush1.msra.mxu0 0.0
        %1210 = vmatprep.subr.mxu0 0.0
        %1211 = vmatpush1.msra.mxu0 0.0
        %1212 = vmatprep.subr.mxu0 0.0
        %1213 = vmatpush1.msra.mxu0 0.0
        %1214 = vmatprep.subr.mxu0 0.0
        %1215 = vmatpush1.msra.mxu0 0.0
        %1216 = vmatprep.subr.mxu0 0.0
        %1217 = vmatpush1.msra.mxu0 0.0
        %1218 = vmatprep.subr.mxu0 0.0
        %1219 = vmatpush1.msra.mxu0 0.0
        %1220 = vmatprep.subr.mxu0 0.0
        %1221 = vmatpush1.msra.mxu0 0.0
        %1222 = vmatprep.subr.mxu0 0.0
        %1223 = vmatpush1.msra.mxu0 0.0
        %1224 = vmatprep.subr.mxu0 0.0
        %1225 = vmatpush1.msra.mxu0 0.0
        %1226 = vmatprep.subr.mxu0 0.0
        %1227 = vmatpush1.msra.mxu0 0.0
        %1228 = vmatprep.subr.mxu0 0.0
        %1229 = vmatpush1.msra.mxu0 0.0
        %1230 = vmatprep.subr.mxu0 0.0
        %1231 = vmatpush1.msra.mxu0 0.0
        %1232 = vmatprep.subr.mxu0 0.0
        %1233 = vmatpush1.msra.mxu0 0.0
        %1234 = vmatprep.subr.mxu0 0.0
        %1235 = vmatpush1.msra.mxu0 0.0
        %1236 = vmatprep.subr.mxu0 0.0
        %1237 = vmatpush1.msra.mxu0 0.0
        %1238 = vmatprep.subr.mxu0 0.0
        %1239 = vmatpush1.msra.mxu0 0.0
        %1240 = vmatprep.subr.mxu0 0.0
        %1241 = vmatpush1.msra.mxu0 0.0
        %1242 = vmatprep.subr.mxu0 0.0
        %1243 = vmatpush1.msra.mxu0 0.0
        %1244 = vmatprep.subr.mxu0 0.0
        %1245 = vmatpush1.msra.mxu0 0.0
        %1246 = vmatprep.subr.mxu0 0.0
        %1247 = vmatpush1.msra.mxu0 0.0
        %1248 = vmatprep.subr.mxu0 0.0
        %1249 = vmatpush1.msra.mxu0 0.0
        %1250 = vmatprep.subr.mxu0 0.0
        %1251 = vmatpush1.msra.mxu0 0.0
        %1252 = vmatprep.subr.mxu0 0.0
        %1253 = vmatpush1.msra.mxu0 0.0
        %1254 = vmatprep.subr.mxu0 0.0
        %1255 = vmatpush1.msra.mxu0 0.0
        %1256 = vmatprep.subr.mxu0 0.0
        %1257 = vmatpush1.msra.mxu0 0.0
        %1258 = vmatprep.subr.mxu0 0.0
        %1259 = vmatpush1.msra.mxu0 0.0
        %1260 = vmatprep.mubr.f32.mxu0 0.0
        %1261 = vmatmul.mubr.f32.gmra.mrb[0].mxu0 %v1191
        %v1262 = vpop.f32.mrb[0].mxu0
        %v1263 = vadd.f32 0.0, %v1262
        %v1264 = vpop.f32.mrb[0].mxu0
        %1265 = vmatprep.mubr.f32.mxu0 0.0
        %1266 = vmatmul.mubr.f32.gmra.mrb[0].mxu0 %v1194
        %v1267 = vpop.f32.mrb[0].mxu0
        %v1268 = vadd.f32 0.0, %v1267
        %v1269 = vpop.f32.mrb[0].mxu0
        %1270 = vdwg.mxu0
        %1273 = vrot.lane.b32.xlu0 %v1263, 64
        %v1274 = vpop.permute.xlu0 %1273
        %1275 = vrot.lane.b32.xlu0 %v1268, 64
        %v1276 = vpop.permute.xlu0 %1275
        %vm1279 = vcmask 523264
        %v1280 = vsel %vm1279, %v1182, %v1274
        %v1281 = vsel %vm1279, %v1187, %v1276
        %v1282 = vsub.f32 %v1182, %v1263
        %v1283 = vsub.f32 %v1187, %v1268
        %v1284 = vsel %vm1106, %v1282, 0.0
        %v1285 = vsel %vm1106, %v1283, 0.0
        %v1286 = vmul.f32 %v1284, %v1284
        %v1287 = vmul.f32 %v1285, %v1285
        %v1288 = vsel %vm1279, %v1286, 0.0
        %1289 = vadd.xlane.f32.xlu0 %v1288
        %v1290 = vpop.xlane.xlu0 %1289
        %v1291 = vsel %vm1279, %v1287, 0.0
        %1292 = vadd.xlane.f32.xlu0 %v1291
        %v1293 = vpop.xlane.xlu0 %1292
        %v1294 = vld [vmem:[%s9] sm:$0xf]
        %v1295 = vld [vmem:[%s9 + $0x4] sm:$0xf]
        %v1296 = vld [vmem:[%s9 + $0x8] sm:$0xf]
        %v1297 = vld [vmem:[%s9 + $0xc] sm:$0xf]
        %v1298 = vld [vmem:[%s9 + $0x10] sm:$0xf]
        %v1299 = vld [vmem:[%s9 + $0x14] sm:$0xf]
        %v1300 = vld [vmem:[%s9 + $0x18] sm:$0xf]
        %v1301 = vld [vmem:[%s9 + $0x1c] sm:$0xf]
        %v1302 = vld [vmem:[%s9 + $0x20] sm:$0xf]
        %v1303 = vld [vmem:[%s9 + $0x24] sm:$0xf]
        %v1304 = vld [vmem:[%s9 + $0x28] sm:$0xf]
        %v1305 = vld [vmem:[%s9 + $0x2c] sm:$0xf]
        %v1306 = vld [vmem:[%s9 + $0x30] sm:$0xf]
        %v1307 = vld [vmem:[%s9 + $0x34] sm:$0xf]
        %v1308 = vld [vmem:[%s9 + $0x38] sm:$0xf]
        %v1309 = vld [vmem:[%s9 + $0x3c] sm:$0xf]
        %v1310 = vpack.c.bf16 %v1281, %v1280
        %v1311 = vld [vmem:[%s10] sm:$0x1]
        %v1313 = vlaneseq
        %v1314 = vshrl.u32 %v1313, 7
        %v1315 = vsub.s32 0, %v1314
        %v1316 = vrot.slane %v1311, %v1315
        %v1318 = vmul.f32 %v1290, %v1316
        %v1319 = vmul.f32 %v1293, %v1316
        %v1336 = vunpack.c.l.b16 %v1294
        %v1337 = vunpack.c.l.b16 %v1295
        %v1338 = vunpack.c.l.b16 %v1296
        %v1339 = vunpack.c.l.b16 %v1297
        %v1340 = vunpack.c.l.b16 %v1298
        %v1341 = vunpack.c.l.b16 %v1299
        %v1342 = vunpack.c.l.b16 %v1300
        %v1343 = vunpack.c.l.b16 %v1301
        %v1344 = vunpack.c.l.b16 %v1302
        %v1345 = vunpack.c.l.b16 %v1303
        %v1346 = vunpack.c.l.b16 %v1304
        %v1347 = vunpack.c.l.b16 %v1305
        %v1348 = vunpack.c.l.b16 %v1306
        %v1349 = vunpack.c.l.b16 %v1307
        %v1350 = vunpack.c.l.b16 %v1308
        %v1351 = vunpack.c.l.b16 %v1309
        %v1352 = vpack.c.b16 %v1337, %v1336
        %v1353 = vpack.c.b16 %v1339, %v1338
        %v1354 = vpack.c.b16 %v1341, %v1340
        %v1355 = vpack.c.b16 %v1343, %v1342
        %v1356 = vpack.c.b16 %v1345, %v1344
        %v1357 = vpack.c.b16 %v1347, %v1346
        %v1358 = vpack.c.b16 %v1349, %v1348
        %v1359 = vpack.c.b16 %v1351, %v1350
        %1368 = vmatprep.subr.bf16.mxu0 0
        %1369 = vmatpush1.bf16.msra.mxu0 %v1352
        %1370 = vmatprep.subr.bf16.mxu0 0
        %1371 = vmatpush1.bf16.msra.mxu0 %v1353
        %1372 = vmatprep.subr.bf16.mxu0 0
        %1373 = vmatpush1.bf16.msra.mxu0 %v1354
        %1374 = vmatprep.subr.bf16.mxu0 0
        %1375 = vmatpush1.bf16.msra.mxu0 %v1355
        %1376 = vmatprep.subr.bf16.mxu0 0
        %1377 = vmatpush1.bf16.msra.mxu0 %v1356
        %1378 = vmatprep.subr.bf16.mxu0 0
        %1379 = vmatpush1.bf16.msra.mxu0 %v1357
        %1380 = vmatprep.subr.bf16.mxu0 0
        %1381 = vmatpush1.bf16.msra.mxu0 %v1358
        %1382 = vmatprep.subr.bf16.mxu0 0
        %1383 = vmatpush1.bf16.msra.mxu0 %v1359
        %1384 = vmatprep.subr.bf16.mxu0 0
        %1385 = vmatpush1.bf16.msra.mxu0 0
        %1386 = vmatprep.subr.bf16.mxu0 0
        %1387 = vmatpush1.bf16.msra.mxu0 0
        %1388 = vmatprep.subr.bf16.mxu0 0
        %1389 = vmatpush1.bf16.msra.mxu0 0
        %1390 = vmatprep.subr.bf16.mxu0 0
        %1391 = vmatpush1.bf16.msra.mxu0 0
        %1392 = vmatprep.subr.bf16.mxu0 0
        %1393 = vmatpush1.bf16.msra.mxu0 0
        %1394 = vmatprep.subr.bf16.mxu0 0
        %1395 = vmatpush1.bf16.msra.mxu0 0
        %1396 = vmatprep.subr.bf16.mxu0 0
        %1397 = vmatpush1.bf16.msra.mxu0 0
        %1398 = vmatprep.subr.bf16.mxu0 0
        %1399 = vmatpush1.bf16.msra.mxu0 0
        %1400 = vmatprep.mubr.bf16.mxu0 0
        %1401 = vmatmul.mubr.bf16.gmra.mrb[0].mxu0 %v1310
        %v1402 = vpop.f32.mrb[0].mxu0
        %v1403 = vadd.f32 %v1318, %v1402
        %v1404 = vpop.f32.mrb[0].mxu0
        %v1405 = vpop.f32.mrb[0].mxu0
        %v1406 = vadd.f32 %v1319, %v1405
        %v1407 = vpop.f32.mrb[0].mxu0
        %1408 = vdwg.mxu0
        %v1409 = vld [vmem:[%s11] sm:$0x1]
        %1411 = vset.pattern.permute.xlu0 0
        %1412 = vperm.xlu0 %1411, %v1107
        %v1413 = vpop.permute.xlu0 %1412
        %1416 = vset.pattern.permute.xlu0 0
        %1417 = vperm.xlu0 %1416, %v1108
        %v1418 = vpop.permute.xlu0 %1417
        %v1421 = vlaneseq
        %v1422 = vshrl.u32 %v1421, 7
        %v1423 = vsub.s32 0, %v1422
        %v1424 = vrot.slane %v1409, %v1423
        %v1426 = vmul.f32 %v1413, %v1424
        %v1427 = vmul.f32 %v1418, %v1424
        %v1428 = vadd.f32 %v1403, %v1426
        %v1429 = vadd.f32 %v1406, %v1427
        %v1430 = vld [vmem:[%s12] sm:$0x1]
        %v1432 = vlaneseq
        %v1433 = vshrl.u32 %v1432, 7
        %v1434 = vsub.s32 0, %v1433
        %v1435 = vrot.slane %v1430, %v1434
        %v1437 = vadd.f32 %v1428, %v1435
        %v1438 = vadd.f32 %v1429, %v1435
        %v1439 = vxor.u32 %v1437, 2147483648
        %v1440 = vxor.u32 %v1438, 2147483648
        %v1441 = vmul.f32 %v1439, 1.442695
        %v1442 = vpow.pop %v1441
        %v1443 = vmul.f32 %v1440, 1.442695
        %v1444 = vpow.pop %v1443
        %v1445 = vadd.f32 %v1442, 1.0
        %v1446 = vadd.f32 %v1444, 1.0
        %v1447 = vrcp.pop %v1445
        %v1448 = vmul.f32 1.0, %v1447
        %v1449 = vrcp.pop %v1446
        %v1450 = vmul.f32 1.0, %v1449
        %v1451 = vmul.f32 %v1437, %v1448
        %v1452 = vmul.f32 %v1438, %v1450
        %v1453 = vld [vmem:[%s13] sm:$0xf]
        %v1454 = vld [vmem:[%s13 + $0x4] sm:$0xf]
        %v1455 = vld [vmem:[%s13 + $0x8] sm:$0xf]
        %v1456 = vld [vmem:[%s13 + $0xc] sm:$0xf]
        %v1457 = vld [vmem:[%s13 + $0x10] sm:$0xf]
        %v1458 = vld [vmem:[%s13 + $0x14] sm:$0xf]
        %v1459 = vld [vmem:[%s13 + $0x18] sm:$0xf]
        %v1460 = vld [vmem:[%s13 + $0x1c] sm:$0xf]
        %v1461 = vpack.c.bf16 %v1452, %v1451
        %v1462 = vld [vmem:[%s14] sm:$0x1]
        %v1464 = vlaneseq
        %v1465 = vshrl.u32 %v1464, 7
        %v1466 = vsub.s32 0, %v1465
        %v1467 = vrot.slane %v1462, %v1466
        %v1477 = vunpack.c.l.b16 %v1453
        %v1478 = vunpack.c.l.b16 %v1454
        %v1479 = vunpack.c.l.b16 %v1455
        %v1480 = vunpack.c.l.b16 %v1456
        %v1481 = vunpack.c.l.b16 %v1457
        %v1482 = vunpack.c.l.b16 %v1458
        %v1483 = vunpack.c.l.b16 %v1459
        %v1484 = vunpack.c.l.b16 %v1460
        %v1485 = vpack.c.b16 %v1478, %v1477
        %v1486 = vpack.c.b16 %v1480, %v1479
        %v1487 = vpack.c.b16 %v1482, %v1481
        %v1488 = vpack.c.b16 %v1484, %v1483
        %v1494 = vsel %vm1279, %v1461, 0
        %1496 = vmatprep.subr.bf16.mxu0 0
        %1497 = vmatpush1.bf16.msra.mxu0 %v1485
        %1498 = vmatprep.subr.bf16.mxu0 0
        %1499 = vmatpush1.bf16.msra.mxu0 %v1486
        %1500 = vmatprep.subr.bf16.mxu0 0
        %1501 = vmatpush1.bf16.msra.mxu0 %v1487
        %1502 = vmatprep.subr.bf16.mxu0 0
        %1503 = vmatpush1.bf16.msra.mxu0 %v1488
        %1504 = vmatprep.subr.bf16.mxu0 0
        %1505 = vmatpush1.bf16.msra.mxu0 0
        %1506 = vmatprep.subr.bf16.mxu0 0
        %1507 = vmatpush1.bf16.msra.mxu0 0
        %1508 = vmatprep.subr.bf16.mxu0 0
        %1509 = vmatpush1.bf16.msra.mxu0 0
        %1510 = vmatprep.subr.bf16.mxu0 0
        %1511 = vmatpush1.bf16.msra.mxu0 0
        %1512 = vmatprep.subr.bf16.mxu0 0
        %1513 = vmatpush1.bf16.msra.mxu0 0
        %1514 = vmatprep.subr.bf16.mxu0 0
        %1515 = vmatpush1.bf16.msra.mxu0 0
        %1516 = vmatprep.subr.bf16.mxu0 0
        %1517 = vmatpush1.bf16.msra.mxu0 0
        %1518 = vmatprep.subr.bf16.mxu0 0
        %1519 = vmatpush1.bf16.msra.mxu0 0
        %1520 = vmatprep.subr.bf16.mxu0 0
        %1521 = vmatpush1.bf16.msra.mxu0 0
        %1522 = vmatprep.subr.bf16.mxu0 0
        %1523 = vmatpush1.bf16.msra.mxu0 0
        %1524 = vmatprep.subr.bf16.mxu0 0
        %1525 = vmatpush1.bf16.msra.mxu0 0
        %1526 = vmatprep.subr.bf16.mxu0 0
        %1527 = vmatpush1.bf16.msra.mxu0 0
        %1528 = vmatprep.mubr.bf16.mxu0 0
        %1529 = vmatmul.mubr.bf16.gmra.mrb[0].mxu0 %v1494
        %v1530 = vpop.f32.mrb[0].mxu0
        %v1531 = vadd.f32 %v1467, %v1530
        %v1532 = vpop.f32.mrb[0].mxu0
        %v1533 = vpop.f32.mrb[0].mxu0
        %v1534 = vadd.f32 %v1467, %v1533
        %v1535 = vpop.f32.mrb[0].mxu0
        %1536 = vdwg.mxu0
        %v1537 = vxor.u32 %v1531, 2147483648
        %v1538 = vxor.u32 %v1534, 2147483648
        %v1539 = vmul.f32 %v1537, 1.442695
        %v1540 = vpow.pop %v1539
        %v1541 = vmul.f32 %v1538, 1.442695
        %v1542 = vpow.pop %v1541
        %v1543 = vadd.f32 %v1540, 1.0
        %v1544 = vadd.f32 %v1542, 1.0
        %v1545 = vrcp.pop %v1543
        %v1546 = vmul.f32 1.0, %v1545
        %v1547 = vrcp.pop %v1544
        %v1548 = vmul.f32 1.0, %v1547
        %v1549 = vmul.f32 %v1531, %v1546
        %v1550 = vmul.f32 %v1534, %v1548
        %v1551 = vld [vmem:[%s15] sm:$0xf]
        %v1552 = vld [vmem:[%s15 + $0x4] sm:$0xf]
        %v1553 = vld [vmem:[%s15 + $0x8] sm:$0xf]
        %v1554 = vld [vmem:[%s15 + $0xc] sm:$0xf]
        %v1555 = vld [vmem:[%s15 + $0x10] sm:$0xf]
        %v1556 = vld [vmem:[%s15 + $0x14] sm:$0xf]
        %v1557 = vld [vmem:[%s15 + $0x18] sm:$0xf]
        %v1558 = vld [vmem:[%s15 + $0x1c] sm:$0xf]
        %v1559 = vpack.c.bf16 %v1550, %v1549
        %v1560 = vld [vmem:[%s16] sm:$0x1]
        %v1562 = vlaneseq
        %v1563 = vshrl.u32 %v1562, 7
        %v1564 = vsub.s32 0, %v1563
        %v1565 = vrot.slane %v1560, %v1564
        %v1575 = vunpack.c.l.b16 %v1551
        %v1576 = vunpack.c.l.b16 %v1552
        %v1577 = vunpack.c.l.b16 %v1553
        %v1578 = vunpack.c.l.b16 %v1554
        %v1579 = vunpack.c.l.b16 %v1555
        %v1580 = vunpack.c.l.b16 %v1556
        %v1581 = vunpack.c.l.b16 %v1557
        %v1582 = vunpack.c.l.b16 %v1558
        %v1583 = vpack.c.b16 %v1576, %v1575
        %v1584 = vpack.c.b16 %v1578, %v1577
        %v1585 = vpack.c.b16 %v1580, %v1579
        %v1586 = vpack.c.b16 %v1582, %v1581
        %v1592 = vsel %vm1279, %v1559, 0
        %1594 = vmatprep.subr.bf16.mxu0 0
        %1595 = vmatpush1.bf16.msra.mxu0 %v1583
        %1596 = vmatprep.subr.bf16.mxu0 0
        %1597 = vmatpush1.bf16.msra.mxu0 %v1584
        %1598 = vmatprep.subr.bf16.mxu0 0
        %1599 = vmatpush1.bf16.msra.mxu0 %v1585
        %1600 = vmatprep.subr.bf16.mxu0 0
        %1601 = vmatpush1.bf16.msra.mxu0 %v1586
        %1602 = vmatprep.subr.bf16.mxu0 0
        %1603 = vmatpush1.bf16.msra.mxu0 0
        %1604 = vmatprep.subr.bf16.mxu0 0
        %1605 = vmatpush1.bf16.msra.mxu0 0
        %1606 = vmatprep.subr.bf16.mxu0 0
        %1607 = vmatpush1.bf16.msra.mxu0 0
        %1608 = vmatprep.subr.bf16.mxu0 0
        %1609 = vmatpush1.bf16.msra.mxu0 0
        %1610 = vmatprep.subr.bf16.mxu0 0
        %1611 = vmatpush1.bf16.msra.mxu0 0
        %1612 = vmatprep.subr.bf16.mxu0 0
        %1613 = vmatpush1.bf16.msra.mxu0 0
        %1614 = vmatprep.subr.bf16.mxu0 0
        %1615 = vmatpush1.bf16.msra.mxu0 0
        %1616 = vmatprep.subr.bf16.mxu0 0
        %1617 = vmatpush1.bf16.msra.mxu0 0
        %1618 = vmatprep.subr.bf16.mxu0 0
        %1619 = vmatpush1.bf16.msra.mxu0 0
        %1620 = vmatprep.subr.bf16.mxu0 0
        %1621 = vmatpush1.bf16.msra.mxu0 0
        %1622 = vmatprep.subr.bf16.mxu0 0
        %1623 = vmatpush1.bf16.msra.mxu0 0
        %1624 = vmatprep.subr.bf16.mxu0 0
        %1625 = vmatpush1.bf16.msra.mxu0 0
        %1626 = vmatprep.mubr.bf16.mxu0 0
        %1627 = vmatmul.mubr.bf16.gmra.mrb[0].mxu0 %v1592
        %v1628 = vpop.f32.mrb[0].mxu0
        %v1629 = vadd.f32 %v1565, %v1628
        %v1630 = vpop.f32.mrb[0].mxu0
        %v1631 = vpop.f32.mrb[0].mxu0
        %v1632 = vadd.f32 %v1565, %v1631
        %v1633 = vpop.f32.mrb[0].mxu0
        %1634 = vdwg.mxu0
        %v1635 = vxor.u32 %v1629, 2147483648
        %v1636 = vxor.u32 %v1632, 2147483648
        %v1637 = vmul.f32 %v1635, 1.442695
        %v1638 = vpow.pop %v1637
        %v1639 = vmul.f32 %v1636, 1.442695
        %v1640 = vpow.pop %v1639
        %v1641 = vadd.f32 %v1638, 1.0
        %v1642 = vadd.f32 %v1640, 1.0
        %v1643 = vrcp.pop %v1641
        %v1644 = vmul.f32 1.0, %v1643
        %v1645 = vrcp.pop %v1642
        %v1646 = vmul.f32 1.0, %v1645
        %v1647 = vmul.f32 %v1629, %v1644
        %v1648 = vmul.f32 %v1632, %v1646
        %v1649 = vld [vmem:[%s17] sm:$0x1]
        %v1651 = vlaneseq
        %v1652 = vshrl.u32 %v1651, 7
        %v1653 = vsub.s32 0, %v1652
        %v1654 = vrot.slane %v1649, %v1653
        %v1656 = vmul.f32 %v1647, %v1654
        %v1657 = vmul.f32 %v1648, %v1654
        %v1658 = vsel %vm1279, %v1656, 0.0
        %1659 = vadd.xlane.f32.xlu0 %v1658
        %v1660 = vpop.xlane.xlu0 %1659
        %v1661 = vsel %vm1279, %v1657, 0.0
        %1662 = vadd.xlane.f32.xlu0 %v1661
        %v1663 = vpop.xlane.xlu0 %1662
        %v1664 = vld [vmem:[%s18] sm:$0x1]
        %v1666 = vlaneseq
        %v1667 = vshrl.u32 %v1666, 7
        %v1668 = vsub.s32 0, %v1667
        %v1669 = vrot.slane %v1664, %v1668
        %v1671 = vadd.f32 %v1660, %v1669
        %v1672 = vadd.f32 %v1663, %v1669
        %1674 = vset.pattern.permute.xlu0 0
        %1675 = vperm.xlu0 %1674, %v1671
        %v1676 = vpop.permute.xlu0 %1675
        %1679 = vset.pattern.permute.xlu0 0
        %1680 = vperm.xlu0 %1679, %v1672
        %v1681 = vpop.permute.xlu0 %1680
        %v1683 = vmul.f32 %v1284, %v1676
        %v1684 = vmul.f32 %v1285, %v1681
        %v1685 = vadd.f32 %v1683, %v1549
        %v1686 = vadd.f32 %v1684, %v1550
        %vm1687 = vcmask 130048
        %v1689 = vsel %vm1687, %v1105, 0
        %1691 = vmatprep.subr.mxu0 0.0
        %1692 = vmatpush1.msra.mxu0 %v1685
        %1693 = vmatprep.subr.mxu0 0.0
        %1694 = vmatpush1.msra.mxu0 %v1686
        %1695 = vmatprep.subr.mxu0 0.0
        %1696 = vmatpush1.msra.mxu0 0.0
        %1697 = vmatprep.subr.mxu0 0.0
        %1698 = vmatpush1.msra.mxu0 0.0
        %1699 = vmatprep.subr.mxu0 0.0
        %1700 = vmatpush1.msra.mxu0 0.0
        %1701 = vmatprep.subr.mxu0 0.0
        %1702 = vmatpush1.msra.mxu0 0.0
        %1703 = vmatprep.subr.mxu0 0.0
        %1704 = vmatpush1.msra.mxu0 0.0
        %1705 = vmatprep.subr.mxu0 0.0
        %1706 = vmatpush1.msra.mxu0 0.0
        %1707 = vmatprep.subr.mxu0 0.0
        %1708 = vmatpush1.msra.mxu0 0.0
        %1709 = vmatprep.subr.mxu0 0.0
        %1710 = vmatpush1.msra.mxu0 0.0
        %1711 = vmatprep.subr.mxu0 0.0
        %1712 = vmatpush1.msra.mxu0 0.0
        %1713 = vmatprep.subr.mxu0 0.0
        %1714 = vmatpush1.msra.mxu0 0.0
        %1715 = vmatprep.subr.mxu0 0.0
        %1716 = vmatpush1.msra.mxu0 0.0
        %1717 = vmatprep.subr.mxu0 0.0
        %1718 = vmatpush1.msra.mxu0 0.0
        %1719 = vmatprep.subr.mxu0 0.0
        %1720 = vmatpush1.msra.mxu0 0.0
        %1721 = vmatprep.subr.mxu0 0.0
        %1722 = vmatpush1.msra.mxu0 0.0
        %1723 = vmatprep.subr.mxu0 0.0
        %1724 = vmatpush1.msra.mxu0 0.0
        %1725 = vmatprep.subr.mxu0 0.0
        %1726 = vmatpush1.msra.mxu0 0.0
        %1727 = vmatprep.subr.mxu0 0.0
        %1728 = vmatpush1.msra.mxu0 0.0
        %1729 = vmatprep.subr.mxu0 0.0
        %1730 = vmatpush1.msra.mxu0 0.0
        %1731 = vmatprep.subr.mxu0 0.0
        %1732 = vmatpush1.msra.mxu0 0.0
        %1733 = vmatprep.subr.mxu0 0.0
        %1734 = vmatpush1.msra.mxu0 0.0
        %1735 = vmatprep.subr.mxu0 0.0
        %1736 = vmatpush1.msra.mxu0 0.0
        %1737 = vmatprep.subr.mxu0 0.0
        %1738 = vmatpush1.msra.mxu0 0.0
        %1739 = vmatprep.subr.mxu0 0.0
        %1740 = vmatpush1.msra.mxu0 0.0
        %1741 = vmatprep.subr.mxu0 0.0
        %1742 = vmatpush1.msra.mxu0 0.0
        %1743 = vmatprep.subr.mxu0 0.0
        %1744 = vmatpush1.msra.mxu0 0.0
        %1745 = vmatprep.subr.mxu0 0.0
        %1746 = vmatpush1.msra.mxu0 0.0
        %1747 = vmatprep.subr.mxu0 0.0
        %1748 = vmatpush1.msra.mxu0 0.0
        %1749 = vmatprep.subr.mxu0 0.0
        %1750 = vmatpush1.msra.mxu0 0.0
        %1751 = vmatprep.subr.mxu0 0.0
        %1752 = vmatpush1.msra.mxu0 0.0
        %1753 = vmatprep.subr.mxu0 0.0
        %1754 = vmatpush1.msra.mxu0 0.0
        %1755 = vmatprep.mubr.f32.mxu0 0.0
        %1756 = vmatmul.mubr.f32.gmra.mrb[0].mxu0 %v1689
        %v1757 = vpop.f32.mrb[0].mxu0
        %v1758 = vadd.f32 0.0, %v1757
        %v1759 = vpop.f32.mrb[0].mxu0
        %1760 = vdwg.mxu0
        %1762 = vrot.lane.b32.xlu0 %v1758, 64
        %v1763 = vpop.permute.xlu0 %1762
        %v1765 = vsel %vm1279, %v1061, %v1763
        %v1766 = vld [vmem:[%s19] sm:$0xf]
        %v1767 = vld [vmem:[%s19 + $0x4] sm:$0xf]
        %v1768 = vld [vmem:[%s19 + $0x8] sm:$0xf]
        %v1769 = vld [vmem:[%s19 + $0xc] sm:$0xf]
        %v1770 = vld [vmem:[%s19 + $0x10] sm:$0xf]
        %v1771 = vld [vmem:[%s19 + $0x14] sm:$0xf]
        %v1772 = vld [vmem:[%s19 + $0x18] sm:$0xf]
        %v1773 = vld [vmem:[%s19 + $0x1c] sm:$0xf]
        %v1774 = vld [vmem:[%s19 + $0x20] sm:$0xf]
        %v1775 = vld [vmem:[%s19 + $0x24] sm:$0xf]
        %v1776 = vld [vmem:[%s19 + $0x28] sm:$0xf]
        %v1777 = vld [vmem:[%s19 + $0x2c] sm:$0xf]
        %v1778 = vld [vmem:[%s19 + $0x30] sm:$0xf]
        %v1779 = vld [vmem:[%s19 + $0x34] sm:$0xf]
        %v1780 = vld [vmem:[%s19 + $0x38] sm:$0xf]
        %v1781 = vld [vmem:[%s19 + $0x3c] sm:$0xf]
        %v1782 = vpack.c.bf16 %v1765, %v1765
        %v1783 = vld [vmem:[%s20] sm:$0x1]
        %v1785 = vlaneseq
        %v1786 = vshrl.u32 %v1785, 7
        %v1787 = vsub.s32 0, %v1786
        %v1788 = vrot.slane %v1783, %v1787
        %v1806 = vunpack.c.l.b16 %v1766
        %v1807 = vunpack.c.l.b16 %v1767
        %v1808 = vunpack.c.l.b16 %v1768
        %v1809 = vunpack.c.l.b16 %v1769
        %v1810 = vunpack.c.l.b16 %v1770
        %v1811 = vunpack.c.l.b16 %v1771
        %v1812 = vunpack.c.l.b16 %v1772
        %v1813 = vunpack.c.l.b16 %v1773
        %v1814 = vunpack.c.l.b16 %v1774
        %v1815 = vunpack.c.l.b16 %v1775
        %v1816 = vunpack.c.l.b16 %v1776
        %v1817 = vunpack.c.l.b16 %v1777
        %v1818 = vunpack.c.l.b16 %v1778
        %v1819 = vunpack.c.l.b16 %v1779
        %v1820 = vunpack.c.l.b16 %v1780
        %v1821 = vunpack.c.l.b16 %v1781
        %v1822 = vpack.c.b16 %v1807, %v1806
        %v1823 = vpack.c.b16 %v1809, %v1808
        %v1824 = vpack.c.b16 %v1811, %v1810
        %v1825 = vpack.c.b16 %v1813, %v1812
        %v1826 = vpack.c.b16 %v1815, %v1814
        %v1827 = vpack.c.b16 %v1817, %v1816
        %v1828 = vpack.c.b16 %v1819, %v1818
        %v1829 = vpack.c.b16 %v1821, %v1820
        %1838 = vmatprep.subr.bf16.mxu0 0
        %1839 = vmatpush1.bf16.msra.mxu0 %v1822
        %1840 = vmatprep.subr.bf16.mxu0 0
        %1841 = vmatpush1.bf16.msra.mxu0 %v1823
        %1842 = vmatprep.subr.bf16.mxu0 0
        %1843 = vmatpush1.bf16.msra.mxu0 %v1824
        %1844 = vmatprep.subr.bf16.mxu0 0
        %1845 = vmatpush1.bf16.msra.mxu0 %v1825
        %1846 = vmatprep.subr.bf16.mxu0 0
        %1847 = vmatpush1.bf16.msra.mxu0 %v1826
        %1848 = vmatprep.subr.bf16.mxu0 0
        %1849 = vmatpush1.bf16.msra.mxu0 %v1827
        %1850 = vmatprep.subr.bf16.mxu0 0
        %1851 = vmatpush1.bf16.msra.mxu0 %v1828
        %1852 = vmatprep.subr.bf16.mxu0 0
        %1853 = vmatpush1.bf16.msra.mxu0 %v1829
        %1854 = vmatprep.subr.bf16.mxu0 0
        %1855 = vmatpush1.bf16.msra.mxu0 0
        %1856 = vmatprep.subr.bf16.mxu0 0
        %1857 = vmatpush1.bf16.msra.mxu0 0
        %1858 = vmatprep.subr.bf16.mxu0 0
        %1859 = vmatpush1.bf16.msra.mxu0 0
        %1860 = vmatprep.subr.bf16.mxu0 0
        %1861 = vmatpush1.bf16.msra.mxu0 0
        %1862 = vmatprep.subr.bf16.mxu0 0
        %1863 = vmatpush1.bf16.msra.mxu0 0
        %1864 = vmatprep.subr.bf16.mxu0 0
        %1865 = vmatpush1.bf16.msra.mxu0 0
        %1866 = vmatprep.subr.bf16.mxu0 0
        %1867 = vmatpush1.bf16.msra.mxu0 0
        %1868 = vmatprep.subr.bf16.mxu0 0
        %1869 = vmatpush1.bf16.msra.mxu0 0
        %1870 = vmatprep.mubr.bf16.mxu0 0
        %1871 = vmatmul.mubr.bf16.gmra.mrb[0].mxu0 %v1782
        %v1872 = vpop.f32.mrb[0].mxu0
        %v1873 = vadd.f32 %v1788, %v1872
        %v1874 = vpop.f32.mrb[0].mxu0
        %v1875 = vpop.f32.mrb[0].mxu0
        %v1876 = vpop.f32.mrb[0].mxu0
        %1877 = vdwg.mxu0
        %v1878 = vxor.u32 %v1873, 2147483648
        %v1879 = vmul.f32 %v1878, 1.442695
        %v1880 = vpow.pop %v1879
        %v1881 = vadd.f32 %v1880, 1.0
        %v1882 = vrcp.pop %v1881
        %v1883 = vmul.f32 1.0, %v1882
        %v1884 = vmul.f32 %v1873, %v1883
        %v1885 = vld [vmem:[%s21] sm:$0xf]
        %v1886 = vld [vmem:[%s21 + $0x4] sm:$0xf]
        %v1887 = vld [vmem:[%s21 + $0x8] sm:$0xf]
        %v1888 = vld [vmem:[%s21 + $0xc] sm:$0xf]
        %v1889 = vld [vmem:[%s21 + $0x10] sm:$0xf]
        %v1890 = vld [vmem:[%s21 + $0x14] sm:$0xf]
        %v1891 = vld [vmem:[%s21 + $0x18] sm:$0xf]
        %v1892 = vld [vmem:[%s21 + $0x1c] sm:$0xf]
        %v1893 = vpack.c.bf16 %v1884, %v1884
        %v1894 = vld [vmem:[%s22] sm:$0x1]
        %v1896 = vlaneseq
        %v1897 = vshrl.u32 %v1896, 7
        %v1898 = vsub.s32 0, %v1897
        %v1899 = vrot.slane %v1894, %v1898
        %v1909 = vunpack.c.l.b16 %v1885
        %v1910 = vunpack.c.l.b16 %v1886
        %v1911 = vunpack.c.l.b16 %v1887
        %v1912 = vunpack.c.l.b16 %v1888
        %v1913 = vunpack.c.l.b16 %v1889
        %v1914 = vunpack.c.l.b16 %v1890
        %v1915 = vunpack.c.l.b16 %v1891
        %v1916 = vunpack.c.l.b16 %v1892
        %v1917 = vpack.c.b16 %v1910, %v1909
        %v1918 = vpack.c.b16 %v1912, %v1911
        %v1919 = vpack.c.b16 %v1914, %v1913
        %v1920 = vpack.c.b16 %v1916, %v1915
        %v1926 = vsel %vm1279, %v1893, 0
        %1928 = vmatprep.subr.bf16.mxu0 0
        %1929 = vmatpush1.bf16.msra.mxu0 %v1917
        %1930 = vmatprep.subr.bf16.mxu0 0
        %1931 = vmatpush1.bf16.msra.mxu0 %v1918
        %1932 = vmatprep.subr.bf16.mxu0 0
        %1933 = vmatpush1.bf16.msra.mxu0 %v1919
        %1934 = vmatprep.subr.bf16.mxu0 0
        %1935 = vmatpush1.bf16.msra.mxu0 %v1920
        %1936 = vmatprep.subr.bf16.mxu0 0
        %1937 = vmatpush1.bf16.msra.mxu0 0
        %1938 = vmatprep.subr.bf16.mxu0 0
        %1939 = vmatpush1.bf16.msra.mxu0 0
        %1940 = vmatprep.subr.bf16.mxu0 0
        %1941 = vmatpush1.bf16.msra.mxu0 0
        %1942 = vmatprep.subr.bf16.mxu0 0
        %1943 = vmatpush1.bf16.msra.mxu0 0
        %1944 = vmatprep.subr.bf16.mxu0 0
        %1945 = vmatpush1.bf16.msra.mxu0 0
        %1946 = vmatprep.subr.bf16.mxu0 0
        %1947 = vmatpush1.bf16.msra.mxu0 0
        %1948 = vmatprep.subr.bf16.mxu0 0
        %1949 = vmatpush1.bf16.msra.mxu0 0
        %1950 = vmatprep.subr.bf16.mxu0 0
        %1951 = vmatpush1.bf16.msra.mxu0 0
        %1952 = vmatprep.subr.bf16.mxu0 0
        %1953 = vmatpush1.bf16.msra.mxu0 0
        %1954 = vmatprep.subr.bf16.mxu0 0
        %1955 = vmatpush1.bf16.msra.mxu0 0
        %1956 = vmatprep.subr.bf16.mxu0 0
        %1957 = vmatpush1.bf16.msra.mxu0 0
        %1958 = vmatprep.subr.bf16.mxu0 0
        %1959 = vmatpush1.bf16.msra.mxu0 0
        %1960 = vmatprep.mubr.bf16.mxu0 0
        %1961 = vmatmul.mubr.bf16.gmra.mrb[0].mxu0 %v1926
        %v1962 = vpop.f32.mrb[0].mxu0
        %v1963 = vadd.f32 %v1899, %v1962
        %v1964 = vpop.f32.mrb[0].mxu0
        %v1965 = vpop.f32.mrb[0].mxu0
        %v1966 = vpop.f32.mrb[0].mxu0
        %1967 = vdwg.mxu0
        %v1968 = vsel %vm1106, %v1758, 0.0
        %v1969 = vadd.f32 %v1061, %v1968
        %v1970 = vadd.f32 %v1969, %v1963
        %1971 = vmatprep.subr.mxu0 0.0
        %1972 = vmatpush1.msra.mxu0 %v1970
        %1973 = vmatprep.subr.mxu0 0.0
        %1974 = vmatpush1.msra.mxu0 0.0
        %1975 = vmatprep.subr.mxu0 0.0
        %1976 = vmatpush1.msra.mxu0 0.0
        %1977 = vmatprep.subr.mxu0 0.0
        %1978 = vmatpush1.msra.mxu0 0.0
        %1979 = vmatprep.subr.mxu0 0.0
        %1980 = vmatpush1.msra.mxu0 0.0
        %1981 = vmatprep.subr.mxu0 0.0
        %1982 = vmatpush1.msra.mxu0 0.0
        %1983 = vmatprep.subr.mxu0 0.0
        %1984 = vmatpush1.msra.mxu0 0.0
        %1985 = vmatprep.subr.mxu0 0.0
        %1986 = vmatpush1.msra.mxu0 0.0
        %1987 = vmatprep.subr.mxu0 0.0
        %1988 = vmatpush1.msra.mxu0 0.0
        %1989 = vmatprep.subr.mxu0 0.0
        %1990 = vmatpush1.msra.mxu0 0.0
        %1991 = vmatprep.subr.mxu0 0.0
        %1992 = vmatpush1.msra.mxu0 0.0
        %1993 = vmatprep.subr.mxu0 0.0
        %1994 = vmatpush1.msra.mxu0 0.0
        %1995 = vmatprep.subr.mxu0 0.0
        %1996 = vmatpush1.msra.mxu0 0.0
        %1997 = vmatprep.subr.mxu0 0.0
        %1998 = vmatpush1.msra.mxu0 0.0
        %1999 = vmatprep.subr.mxu0 0.0
        %2000 = vmatpush1.msra.mxu0 0.0
        %2001 = vmatprep.subr.mxu0 0.0
        %2002 = vmatpush1.msra.mxu0 0.0
        %2003 = vmatprep.subr.mxu0 0.0
        %2004 = vmatpush1.msra.mxu0 0.0
        %2005 = vmatprep.subr.mxu0 0.0
        %2006 = vmatpush1.msra.mxu0 0.0
        %2007 = vmatprep.subr.mxu0 0.0
        %2008 = vmatpush1.msra.mxu0 0.0
        %2009 = vmatprep.subr.mxu0 0.0
        %2010 = vmatpush1.msra.mxu0 0.0
        %2011 = vmatprep.subr.mxu0 0.0
        %2012 = vmatpush1.msra.mxu0 0.0
        %2013 = vmatprep.subr.mxu0 0.0
        %2014 = vmatpush1.msra.mxu0 0.0
        %2015 = vmatprep.subr.mxu0 0.0
        %2016 = vmatpush1.msra.mxu0 0.0
        %2017 = vmatprep.subr.mxu0 0.0
        %2018 = vmatpush1.msra.mxu0 0.0
        %2019 = vmatprep.subr.mxu0 0.0
        %2020 = vmatpush1.msra.mxu0 0.0
        %2021 = vmatprep.subr.mxu0 0.0
        %2022 = vmatpush1.msra.mxu0 0.0
        %2023 = vmatprep.subr.mxu0 0.0
        %2024 = vmatpush1.msra.mxu0 0.0
        %2025 = vmatprep.subr.mxu0 0.0
        %2026 = vmatpush1.msra.mxu0 0.0
        %2027 = vmatprep.subr.mxu0 0.0
        %2028 = vmatpush1.msra.mxu0 0.0
        %2029 = vmatprep.subr.mxu0 0.0
        %2030 = vmatpush1.msra.mxu0 0.0
        %2031 = vmatprep.subr.mxu0 0.0
        %2032 = vmatpush1.msra.mxu0 0.0
        %2033 = vmatprep.subr.mxu0 0.0
        %2034 = vmatpush1.msra.mxu0 0.0
        %2035 = vmatprep.mubr.f32.mxu0 0.0
        %2036 = vmatmul.mubr.f32.gmra.mrb[0].mxu0 %v1110
        %v2037 = vpop.f32.mrb[0].mxu0
        %v2038 = vadd.f32 0.0, %v2037
        %v2039 = vpop.f32.mrb[0].mxu0
        %2040 = vmatprep.mubr.f32.mxu0 0.0
        %2041 = vmatmul.mubr.f32.gmra.mrb[0].mxu0 %v1113
        %v2042 = vpop.f32.mrb[0].mxu0
        %v2043 = vadd.f32 0.0, %v2042
        %v2044 = vpop.f32.mrb[0].mxu0
        %2045 = vdwg.mxu0
        %2046 = vmatprep.subr.mxu0 0.0
        %2047 = vmatpush1.msra.mxu0 %v1970
        %2048 = vmatprep.subr.mxu0 0.0
        %2049 = vmatpush1.msra.mxu0 0.0
        %2050 = vmatprep.subr.mxu0 0.0
        %2051 = vmatpush1.msra.mxu0 0.0
        %2052 = vmatprep.subr.mxu0 0.0
        %2053 = vmatpush1.msra.mxu0 0.0
        %2054 = vmatprep.subr.mxu0 0.0
        %2055 = vmatpush1.msra.mxu0 0.0
        %2056 = vmatprep.subr.mxu0 0.0
        %2057 = vmatpush1.msra.mxu0 0.0
        %2058 = vmatprep.subr.mxu0 0.0
        %2059 = vmatpush1.msra.mxu0 0.0
        %2060 = vmatprep.subr.mxu0 0.0
        %2061 = vmatpush1.msra.mxu0 0.0
        %2062 = vmatprep.subr.mxu0 0.0
        %2063 = vmatpush1.msra.mxu0 0.0
        %2064 = vmatprep.subr.mxu0 0.0
        %2065 = vmatpush1.msra.mxu0 0.0
        %2066 = vmatprep.subr.mxu0 0.0
        %2067 = vmatpush1.msra.mxu0 0.0
        %2068 = vmatprep.subr.mxu0 0.0
        %2069 = vmatpush1.msra.mxu0 0.0
        %2070 = vmatprep.subr.mxu0 0.0
        %2071 = vmatpush1.msra.mxu0 0.0
        %2072 = vmatprep.subr.mxu0 0.0
        %2073 = vmatpush1.msra.mxu0 0.0
        %2074 = vmatprep.subr.mxu0 0.0
        %2075 = vmatpush1.msra.mxu0 0.0
        %2076 = vmatprep.subr.mxu0 0.0
        %2077 = vmatpush1.msra.mxu0 0.0
        %2078 = vmatprep.subr.mxu0 0.0
        %2079 = vmatpush1.msra.mxu0 0.0
        %2080 = vmatprep.subr.mxu0 0.0
        %2081 = vmatpush1.msra.mxu0 0.0
        %2082 = vmatprep.subr.mxu0 0.0
        %2083 = vmatpush1.msra.mxu0 0.0
        %2084 = vmatprep.subr.mxu0 0.0
        %2085 = vmatpush1.msra.mxu0 0.0
        %2086 = vmatprep.subr.mxu0 0.0
        %2087 = vmatpush1.msra.mxu0 0.0
        %2088 = vmatprep.subr.mxu0 0.0
        %2089 = vmatpush1.msra.mxu0 0.0
        %2090 = vmatprep.subr.mxu0 0.0
        %2091 = vmatpush1.msra.mxu0 0.0
        %2092 = vmatprep.subr.mxu0 0.0
        %2093 = vmatpush1.msra.mxu0 0.0
        %2094 = vmatprep.subr.mxu0 0.0
        %2095 = vmatpush1.msra.mxu0 0.0
        %2096 = vmatprep.subr.mxu0 0.0
        %2097 = vmatpush1.msra.mxu0 0.0
        %2098 = vmatprep.subr.mxu0 0.0
        %2099 = vmatpush1.msra.mxu0 0.0
        %2100 = vmatprep.subr.mxu0 0.0
        %2101 = vmatpush1.msra.mxu0 0.0
        %2102 = vmatprep.subr.mxu0 0.0
        %2103 = vmatpush1.msra.mxu0 0.0
        %2104 = vmatprep.subr.mxu0 0.0
        %2105 = vmatpush1.msra.mxu0 0.0
        %2106 = vmatprep.subr.mxu0 0.0
        %2107 = vmatpush1.msra.mxu0 0.0
        %2108 = vmatprep.subr.mxu0 0.0
        %2109 = vmatpush1.msra.mxu0 0.0
        %2110 = vmatprep.mubr.f32.mxu0 0.0
        %2111 = vmatmul.mubr.f32.gmra.mrb[0].mxu0 %v1191
        %v2112 = vpop.f32.mrb[0].mxu0
        %v2113 = vadd.f32 0.0, %v2112
        %v2114 = vpop.f32.mrb[0].mxu0
        %2115 = vmatprep.mubr.f32.mxu0 0.0
        %2116 = vmatmul.mubr.f32.gmra.mrb[0].mxu0 %v1194
        %v2117 = vpop.f32.mrb[0].mxu0
        %v2118 = vadd.f32 0.0, %v2117
        %v2119 = vpop.f32.mrb[0].mxu0
        %2120 = vdwg.mxu0
        %2123 = vrot.lane.b32.xlu0 %v2113, 64
        %v2124 = vpop.permute.xlu0 %2123
        %2125 = vrot.lane.b32.xlu0 %v2118, 64
        %v2126 = vpop.permute.xlu0 %2125
        %v2129 = vsel %vm1279, %v2038, %v2124
        %v2130 = vsel %vm1279, %v2043, %v2126
        %v2131 = vsub.f32 %v2038, %v2113
        %v2132 = vsub.f32 %v2043, %v2118
        %v2133 = vsel %vm1106, %v2131, 0.0
        %v2134 = vsel %vm1106, %v2132, 0.0
        %v2135 = vmul.f32 %v2133, %v2133
        %v2136 = vmul.f32 %v2134, %v2134
        %v2137 = vsel %vm1279, %v2135, 0.0
        %2138 = vadd.xlane.f32.xlu0 %v2137
        %v2139 = vpop.xlane.xlu0 %2138
        %v2140 = vsel %vm1279, %v2136, 0.0
        %2141 = vadd.xlane.f32.xlu0 %v2140
        %v2142 = vpop.xlane.xlu0 %2141
        %s2143 = scalar_lea.vmem %s9, 64
        %v2144 = vld [vmem:[%s2143] sm:$0xf]
        %v2145 = vld [vmem:[%s2143 + $0x4] sm:$0xf]
        %v2146 = vld [vmem:[%s2143 + $0x8] sm:$0xf]
        %v2147 = vld [vmem:[%s2143 + $0xc] sm:$0xf]
        %v2148 = vld [vmem:[%s2143 + $0x10] sm:$0xf]
        %v2149 = vld [vmem:[%s2143 + $0x14] sm:$0xf]
        %v2150 = vld [vmem:[%s2143 + $0x18] sm:$0xf]
        %v2151 = vld [vmem:[%s2143 + $0x1c] sm:$0xf]
        %v2152 = vld [vmem:[%s2143 + $0x20] sm:$0xf]
        %v2153 = vld [vmem:[%s2143 + $0x24] sm:$0xf]
        %v2154 = vld [vmem:[%s2143 + $0x28] sm:$0xf]
        %v2155 = vld [vmem:[%s2143 + $0x2c] sm:$0xf]
        %v2156 = vld [vmem:[%s2143 + $0x30] sm:$0xf]
        %v2157 = vld [vmem:[%s2143 + $0x34] sm:$0xf]
        %v2158 = vld [vmem:[%s2143 + $0x38] sm:$0xf]
        %v2159 = vld [vmem:[%s2143 + $0x3c] sm:$0xf]
        %v2160 = vpack.c.bf16 %v2130, %v2129
        %s2161 = scalar_lea.vmem %s10, 1
        %v2162 = vld [vmem:[%s2161] sm:$0x1]
        %v2164 = vlaneseq
        %v2165 = vshrl.u32 %v2164, 7
        %v2166 = vsub.s32 0, %v2165
        %v2167 = vrot.slane %v2162, %v2166
        %v2169 = vmul.f32 %v2139, %v2167
        %v2170 = vmul.f32 %v2142, %v2167
        %v2187 = vunpack.c.l.b16 %v2144
        %v2188 = vunpack.c.l.b16 %v2145
        %v2189 = vunpack.c.l.b16 %v2146
        %v2190 = vunpack.c.l.b16 %v2147
        %v2191 = vunpack.c.l.b16 %v2148
        %v2192 = vunpack.c.l.b16 %v2149
        %v2193 = vunpack.c.l.b16 %v2150
        %v2194 = vunpack.c.l.b16 %v2151
        %v2195 = vunpack.c.l.b16 %v2152
        %v2196 = vunpack.c.l.b16 %v2153
        %v2197 = vunpack.c.l.b16 %v2154
        %v2198 = vunpack.c.l.b16 %v2155
        %v2199 = vunpack.c.l.b16 %v2156
        %v2200 = vunpack.c.l.b16 %v2157
        %v2201 = vunpack.c.l.b16 %v2158
        %v2202 = vunpack.c.l.b16 %v2159
        %v2203 = vpack.c.b16 %v2188, %v2187
        %v2204 = vpack.c.b16 %v2190, %v2189
        %v2205 = vpack.c.b16 %v2192, %v2191
        %v2206 = vpack.c.b16 %v2194, %v2193
        %v2207 = vpack.c.b16 %v2196, %v2195
        %v2208 = vpack.c.b16 %v2198, %v2197
        %v2209 = vpack.c.b16 %v2200, %v2199
        %v2210 = vpack.c.b16 %v2202, %v2201
        %2219 = vmatprep.subr.bf16.mxu0 0
        %2220 = vmatpush1.bf16.msra.mxu0 %v2203
        %2221 = vmatprep.subr.bf16.mxu0 0
        %2222 = vmatpush1.bf16.msra.mxu0 %v2204
        %2223 = vmatprep.subr.bf16.mxu0 0
        %2224 = vmatpush1.bf16.msra.mxu0 %v2205
        %2225 = vmatprep.subr.bf16.mxu0 0
        %2226 = vmatpush1.bf16.msra.mxu0 %v2206
        %2227 = vmatprep.subr.bf16.mxu0 0
        %2228 = vmatpush1.bf16.msra.mxu0 %v2207
        %2229 = vmatprep.subr.bf16.mxu0 0
        %2230 = vmatpush1.bf16.msra.mxu0 %v2208
        %2231 = vmatprep.subr.bf16.mxu0 0
        %2232 = vmatpush1.bf16.msra.mxu0 %v2209
        %2233 = vmatprep.subr.bf16.mxu0 0
        %2234 = vmatpush1.bf16.msra.mxu0 %v2210
        %2235 = vmatprep.subr.bf16.mxu0 0
        %2236 = vmatpush1.bf16.msra.mxu0 0
        %2237 = vmatprep.subr.bf16.mxu0 0
        %2238 = vmatpush1.bf16.msra.mxu0 0
        %2239 = vmatprep.subr.bf16.mxu0 0
        %2240 = vmatpush1.bf16.msra.mxu0 0
        %2241 = vmatprep.subr.bf16.mxu0 0
        %2242 = vmatpush1.bf16.msra.mxu0 0
        %2243 = vmatprep.subr.bf16.mxu0 0
        %2244 = vmatpush1.bf16.msra.mxu0 0
        %2245 = vmatprep.subr.bf16.mxu0 0
        %2246 = vmatpush1.bf16.msra.mxu0 0
        %2247 = vmatprep.subr.bf16.mxu0 0
        %2248 = vmatpush1.bf16.msra.mxu0 0
        %2249 = vmatprep.subr.bf16.mxu0 0
        %2250 = vmatpush1.bf16.msra.mxu0 0
        %2251 = vmatprep.mubr.bf16.mxu0 0
        %2252 = vmatmul.mubr.bf16.gmra.mrb[0].mxu0 %v2160
        %v2253 = vpop.f32.mrb[0].mxu0
        %v2254 = vadd.f32 %v2169, %v2253
        %v2255 = vpop.f32.mrb[0].mxu0
        %v2256 = vpop.f32.mrb[0].mxu0
        %v2257 = vadd.f32 %v2170, %v2256
        %v2258 = vpop.f32.mrb[0].mxu0
        %2259 = vdwg.mxu0
        %s2260 = scalar_lea.vmem %s11, 1
        %v2261 = vld [vmem:[%s2260] sm:$0x1]
        %v2263 = vlaneseq
        %v2264 = vshrl.u32 %v2263, 7
        %v2265 = vsub.s32 0, %v2264
        %v2266 = vrot.slane %v2261, %v2265
        %v2268 = vmul.f32 %v1413, %v2266
        %v2269 = vmul.f32 %v1418, %v2266
        %v2270 = vadd.f32 %v2254, %v2268
        %v2271 = vadd.f32 %v2257, %v2269
        %s2272 = scalar_lea.vmem %s12, 1
        %v2273 = vld [vmem:[%s2272] sm:$0x1]
        %v2275 = vlaneseq
        %v2276 = vshrl.u32 %v2275, 7
        %v2277 = vsub.s32 0, %v2276
        %v2278 = vrot.slane %v2273, %v2277
        %v2280 = vadd.f32 %v2270, %v2278
        %v2281 = vadd.f32 %v2271, %v2278
        %v2282 = vxor.u32 %v2280, 2147483648
        %v2283 = vxor.u32 %v2281, 2147483648
        %v2284 = vmul.f32 %v2282, 1.442695
        %v2285 = vpow.pop %v2284
        %v2286 = vmul.f32 %v2283, 1.442695
        %v2287 = vpow.pop %v2286
        %v2288 = vadd.f32 %v2285, 1.0
        %v2289 = vadd.f32 %v2287, 1.0
        %v2290 = vrcp.pop %v2288
        %v2291 = vmul.f32 1.0, %v2290
        %v2292 = vrcp.pop %v2289
        %v2293 = vmul.f32 1.0, %v2292
        %v2294 = vmul.f32 %v2280, %v2291
        %v2295 = vmul.f32 %v2281, %v2293
        %s2296 = scalar_lea.vmem %s13, 32
        %v2297 = vld [vmem:[%s2296] sm:$0xf]
        %v2298 = vld [vmem:[%s2296 + $0x4] sm:$0xf]
        %v2299 = vld [vmem:[%s2296 + $0x8] sm:$0xf]
        %v2300 = vld [vmem:[%s2296 + $0xc] sm:$0xf]
        %v2301 = vld [vmem:[%s2296 + $0x10] sm:$0xf]
        %v2302 = vld [vmem:[%s2296 + $0x14] sm:$0xf]
        %v2303 = vld [vmem:[%s2296 + $0x18] sm:$0xf]
        %v2304 = vld [vmem:[%s2296 + $0x1c] sm:$0xf]
        %v2305 = vpack.c.bf16 %v2295, %v2294
        %s2306 = scalar_lea.vmem %s14, 1
        %v2307 = vld [vmem:[%s2306] sm:$0x1]
        %v2309 = vlaneseq
        %v2310 = vshrl.u32 %v2309, 7
        %v2311 = vsub.s32 0, %v2310
        %v2312 = vrot.slane %v2307, %v2311
        %v2322 = vunpack.c.l.b16 %v2297
        %v2323 = vunpack.c.l.b16 %v2298
        %v2324 = vunpack.c.l.b16 %v2299
        %v2325 = vunpack.c.l.b16 %v2300
        %v2326 = vunpack.c.l.b16 %v2301
        %v2327 = vunpack.c.l.b16 %v2302
        %v2328 = vunpack.c.l.b16 %v2303
        %v2329 = vunpack.c.l.b16 %v2304
        %v2330 = vpack.c.b16 %v2323, %v2322
        %v2331 = vpack.c.b16 %v2325, %v2324
        %v2332 = vpack.c.b16 %v2327, %v2326
        %v2333 = vpack.c.b16 %v2329, %v2328
        %v2339 = vsel %vm1279, %v2305, 0
        %2341 = vmatprep.subr.bf16.mxu0 0
        %2342 = vmatpush1.bf16.msra.mxu0 %v2330
        %2343 = vmatprep.subr.bf16.mxu0 0
        %2344 = vmatpush1.bf16.msra.mxu0 %v2331
        %2345 = vmatprep.subr.bf16.mxu0 0
        %2346 = vmatpush1.bf16.msra.mxu0 %v2332
        %2347 = vmatprep.subr.bf16.mxu0 0
        %2348 = vmatpush1.bf16.msra.mxu0 %v2333
        %2349 = vmatprep.subr.bf16.mxu0 0
        %2350 = vmatpush1.bf16.msra.mxu0 0
        %2351 = vmatprep.subr.bf16.mxu0 0
        %2352 = vmatpush1.bf16.msra.mxu0 0
        %2353 = vmatprep.subr.bf16.mxu0 0
        %2354 = vmatpush1.bf16.msra.mxu0 0
        %2355 = vmatprep.subr.bf16.mxu0 0
        %2356 = vmatpush1.bf16.msra.mxu0 0
        %2357 = vmatprep.subr.bf16.mxu0 0
        %2358 = vmatpush1.bf16.msra.mxu0 0
        %2359 = vmatprep.subr.bf16.mxu0 0
        %2360 = vmatpush1.bf16.msra.mxu0 0
        %2361 = vmatprep.subr.bf16.mxu0 0
        %2362 = vmatpush1.bf16.msra.mxu0 0
        %2363 = vmatprep.subr.bf16.mxu0 0
        %2364 = vmatpush1.bf16.msra.mxu0 0
        %2365 = vmatprep.subr.bf16.mxu0 0
        %2366 = vmatpush1.bf16.msra.mxu0 0
        %2367 = vmatprep.subr.bf16.mxu0 0
        %2368 = vmatpush1.bf16.msra.mxu0 0
        %2369 = vmatprep.subr.bf16.mxu0 0
        %2370 = vmatpush1.bf16.msra.mxu0 0
        %2371 = vmatprep.subr.bf16.mxu0 0
        %2372 = vmatpush1.bf16.msra.mxu0 0
        %2373 = vmatprep.mubr.bf16.mxu0 0
        %2374 = vmatmul.mubr.bf16.gmra.mrb[0].mxu0 %v2339
        %v2375 = vpop.f32.mrb[0].mxu0
        %v2376 = vadd.f32 %v2312, %v2375
        %v2377 = vpop.f32.mrb[0].mxu0
        %v2378 = vpop.f32.mrb[0].mxu0
        %v2379 = vadd.f32 %v2312, %v2378
        %v2380 = vpop.f32.mrb[0].mxu0
        %2381 = vdwg.mxu0
        %v2382 = vxor.u32 %v2376, 2147483648
        %v2383 = vxor.u32 %v2379, 2147483648
        %v2384 = vmul.f32 %v2382, 1.442695
        %v2385 = vpow.pop %v2384
        %v2386 = vmul.f32 %v2383, 1.442695
        %v2387 = vpow.pop %v2386
        %v2388 = vadd.f32 %v2385, 1.0
        %v2389 = vadd.f32 %v2387, 1.0
        %v2390 = vrcp.pop %v2388
        %v2391 = vmul.f32 1.0, %v2390
        %v2392 = vrcp.pop %v2389
        %v2393 = vmul.f32 1.0, %v2392
        %v2394 = vmul.f32 %v2376, %v2391
        %v2395 = vmul.f32 %v2379, %v2393
        %s2396 = scalar_lea.vmem %s15, 32
        %v2397 = vld [vmem:[%s2396] sm:$0xf]
        %v2398 = vld [vmem:[%s2396 + $0x4] sm:$0xf]
        %v2399 = vld [vmem:[%s2396 + $0x8] sm:$0xf]
        %v2400 = vld [vmem:[%s2396 + $0xc] sm:$0xf]
        %v2401 = vld [vmem:[%s2396 + $0x10] sm:$0xf]
        %v2402 = vld [vmem:[%s2396 + $0x14] sm:$0xf]
        %v2403 = vld [vmem:[%s2396 + $0x18] sm:$0xf]
        %v2404 = vld [vmem:[%s2396 + $0x1c] sm:$0xf]
        %v2405 = vpack.c.bf16 %v2395, %v2394
        %s2406 = scalar_lea.vmem %s16, 1
        %v2407 = vld [vmem:[%s2406] sm:$0x1]
        %v2409 = vlaneseq
        %v2410 = vshrl.u32 %v2409, 7
        %v2411 = vsub.s32 0, %v2410
        %v2412 = vrot.slane %v2407, %v2411
        %v2422 = vunpack.c.l.b16 %v2397
        %v2423 = vunpack.c.l.b16 %v2398
        %v2424 = vunpack.c.l.b16 %v2399
        %v2425 = vunpack.c.l.b16 %v2400
        %v2426 = vunpack.c.l.b16 %v2401
        %v2427 = vunpack.c.l.b16 %v2402
        %v2428 = vunpack.c.l.b16 %v2403
        %v2429 = vunpack.c.l.b16 %v2404
        %v2430 = vpack.c.b16 %v2423, %v2422
        %v2431 = vpack.c.b16 %v2425, %v2424
        %v2432 = vpack.c.b16 %v2427, %v2426
        %v2433 = vpack.c.b16 %v2429, %v2428
        %v2439 = vsel %vm1279, %v2405, 0
        %2441 = vmatprep.subr.bf16.mxu0 0
        %2442 = vmatpush1.bf16.msra.mxu0 %v2430
        %2443 = vmatprep.subr.bf16.mxu0 0
        %2444 = vmatpush1.bf16.msra.mxu0 %v2431
        %2445 = vmatprep.subr.bf16.mxu0 0
        %2446 = vmatpush1.bf16.msra.mxu0 %v2432
        %2447 = vmatprep.subr.bf16.mxu0 0
        %2448 = vmatpush1.bf16.msra.mxu0 %v2433
        %2449 = vmatprep.subr.bf16.mxu0 0
        %2450 = vmatpush1.bf16.msra.mxu0 0
        %2451 = vmatprep.subr.bf16.mxu0 0
        %2452 = vmatpush1.bf16.msra.mxu0 0
        %2453 = vmatprep.subr.bf16.mxu0 0
        %2454 = vmatpush1.bf16.msra.mxu0 0
        %2455 = vmatprep.subr.bf16.mxu0 0
        %2456 = vmatpush1.bf16.msra.mxu0 0
        %2457 = vmatprep.subr.bf16.mxu0 0
        %2458 = vmatpush1.bf16.msra.mxu0 0
        %2459 = vmatprep.subr.bf16.mxu0 0
        %2460 = vmatpush1.bf16.msra.mxu0 0
        %2461 = vmatprep.subr.bf16.mxu0 0
        %2462 = vmatpush1.bf16.msra.mxu0 0
        %2463 = vmatprep.subr.bf16.mxu0 0
        %2464 = vmatpush1.bf16.msra.mxu0 0
        %2465 = vmatprep.subr.bf16.mxu0 0
        %2466 = vmatpush1.bf16.msra.mxu0 0
        %2467 = vmatprep.subr.bf16.mxu0 0
        %2468 = vmatpush1.bf16.msra.mxu0 0
        %2469 = vmatprep.subr.bf16.mxu0 0
        %2470 = vmatpush1.bf16.msra.mxu0 0
        %2471 = vmatprep.subr.bf16.mxu0 0
        %2472 = vmatpush1.bf16.msra.mxu0 0
        %2473 = vmatprep.mubr.bf16.mxu0 0
        %2474 = vmatmul.mubr.bf16.gmra.mrb[0].mxu0 %v2439
        %v2475 = vpop.f32.mrb[0].mxu0
        %v2476 = vadd.f32 %v2412, %v2475
        %v2477 = vpop.f32.mrb[0].mxu0
        %v2478 = vpop.f32.mrb[0].mxu0
        %v2479 = vadd.f32 %v2412, %v2478
        %v2480 = vpop.f32.mrb[0].mxu0
        %2481 = vdwg.mxu0
        %v2482 = vxor.u32 %v2476, 2147483648
        %v2483 = vxor.u32 %v2479, 2147483648
        %v2484 = vmul.f32 %v2482, 1.442695
        %v2485 = vpow.pop %v2484
        %v2486 = vmul.f32 %v2483, 1.442695
        %v2487 = vpow.pop %v2486
        %v2488 = vadd.f32 %v2485, 1.0
        %v2489 = vadd.f32 %v2487, 1.0
        %v2490 = vrcp.pop %v2488
        %v2491 = vmul.f32 1.0, %v2490
        %v2492 = vrcp.pop %v2489
        %v2493 = vmul.f32 1.0, %v2492
        %v2494 = vmul.f32 %v2476, %v2491
        %v2495 = vmul.f32 %v2479, %v2493
        %s2496 = scalar_lea.vmem %s17, 1
        %v2497 = vld [vmem:[%s2496] sm:$0x1]
        %v2499 = vlaneseq
        %v2500 = vshrl.u32 %v2499, 7
        %v2501 = vsub.s32 0, %v2500
        %v2502 = vrot.slane %v2497, %v2501
        %v2504 = vmul.f32 %v2494, %v2502
        %v2505 = vmul.f32 %v2495, %v2502
        %v2506 = vsel %vm1279, %v2504, 0.0
        %2507 = vadd.xlane.f32.xlu0 %v2506
        %v2508 = vpop.xlane.xlu0 %2507
        %v2509 = vsel %vm1279, %v2505, 0.0
        %2510 = vadd.xlane.f32.xlu0 %v2509
        %v2511 = vpop.xlane.xlu0 %2510
        %s2512 = scalar_lea.vmem %s18, 1
        %v2513 = vld [vmem:[%s2512] sm:$0x1]
        %v2515 = vlaneseq
        %v2516 = vshrl.u32 %v2515, 7
        %v2517 = vsub.s32 0, %v2516
        %v2518 = vrot.slane %v2513, %v2517
        %v2520 = vadd.f32 %v2508, %v2518
        %v2521 = vadd.f32 %v2511, %v2518
        %2523 = vset.pattern.permute.xlu0 0
        %2524 = vperm.xlu0 %2523, %v2520
        %v2525 = vpop.permute.xlu0 %2524
        %2528 = vset.pattern.permute.xlu0 0
        %2529 = vperm.xlu0 %2528, %v2521
        %v2530 = vpop.permute.xlu0 %2529
        %v2532 = vmul.f32 %v2133, %v2525
        %v2533 = vmul.f32 %v2134, %v2530
        %v2534 = vadd.f32 %v2532, %v2394
        %v2535 = vadd.f32 %v2533, %v2395
        %2536 = vmatprep.subr.mxu0 0.0
        %2537 = vmatpush1.msra.mxu0 %v2534
        %2538 = vmatprep.subr.mxu0 0.0
        %2539 = vmatpush1.msra.mxu0 %v2535
        %2540 = vmatprep.subr.mxu0 0.0
        %2541 = vmatpush1.msra.mxu0 0.0
        %2542 = vmatprep.subr.mxu0 0.0
        %2543 = vmatpush1.msra.mxu0 0.0
        %2544 = vmatprep.subr.mxu0 0.0
        %2545 = vmatpush1.msra.mxu0 0.0
        %2546 = vmatprep.subr.mxu0 0.0
        %2547 = vmatpush1.msra.mxu0 0.0
        %2548 = vmatprep.subr.mxu0 0.0
        %2549 = vmatpush1.msra.mxu0 0.0
        %2550 = vmatprep.subr.mxu0 0.0
        %2551 = vmatpush1.msra.mxu0 0.0
        %2552 = vmatprep.subr.mxu0 0.0
        %2553 = vmatpush1.msra.mxu0 0.0
        %2554 = vmatprep.subr.mxu0 0.0
        %2555 = vmatpush1.msra.mxu0 0.0
        %2556 = vmatprep.subr.mxu0 0.0
        %2557 = vmatpush1.msra.mxu0 0.0
        %2558 = vmatprep.subr.mxu0 0.0
        %2559 = vmatpush1.msra.mxu0 0.0
        %2560 = vmatprep.subr.mxu0 0.0
        %2561 = vmatpush1.msra.mxu0 0.0
        %2562 = vmatprep.subr.mxu0 0.0
        %2563 = vmatpush1.msra.mxu0 0.0
        %2564 = vmatprep.subr.mxu0 0.0
        %2565 = vmatpush1.msra.mxu0 0.0
        %2566 = vmatprep.subr.mxu0 0.0
        %2567 = vmatpush1.msra.mxu0 0.0
        %2568 = vmatprep.subr.mxu0 0.0
        %2569 = vmatpush1.msra.mxu0 0.0
        %2570 = vmatprep.subr.mxu0 0.0
        %2571 = vmatpush1.msra.mxu0 0.0
        %2572 = vmatprep.subr.mxu0 0.0
        %2573 = vmatpush1.msra.mxu0 0.0
        %2574 = vmatprep.subr.mxu0 0.0
        %2575 = vmatpush1.msra.mxu0 0.0
        %2576 = vmatprep.subr.mxu0 0.0
        %2577 = vmatpush1.msra.mxu0 0.0
        %2578 = vmatprep.subr.mxu0 0.0
        %2579 = vmatpush1.msra.mxu0 0.0
        %2580 = vmatprep.subr.mxu0 0.0
        %2581 = vmatpush1.msra.mxu0 0.0
        %2582 = vmatprep.subr.mxu0 0.0
        %2583 = vmatpush1.msra.mxu0 0.0
        %2584 = vmatprep.subr.mxu0 0.0
        %2585 = vmatpush1.msra.mxu0 0.0
        %2586 = vmatprep.subr.mxu0 0.0
        %2587 = vmatpush1.msra.mxu0 0.0
        %2588 = vmatprep.subr.mxu0 0.0
        %2589 = vmatpush1.msra.mxu0 0.0
        %2590 = vmatprep.subr.mxu0 0.0
        %2591 = vmatpush1.msra.mxu0 0.0
        %2592 = vmatprep.subr.mxu0 0.0
        %2593 = vmatpush1.msra.mxu0 0.0
        %2594 = vmatprep.subr.mxu0 0.0
        %2595 = vmatpush1.msra.mxu0 0.0
        %2596 = vmatprep.subr.mxu0 0.0
        %2597 = vmatpush1.msra.mxu0 0.0
        %2598 = vmatprep.subr.mxu0 0.0
        %2599 = vmatpush1.msra.mxu0 0.0
        %2600 = vmatprep.mubr.f32.mxu0 0.0
        %2601 = vmatmul.mubr.f32.gmra.mrb[0].mxu0 %v1689
        %v2602 = vpop.f32.mrb[0].mxu0
        %v2603 = vadd.f32 0.0, %v2602
        %v2604 = vpop.f32.mrb[0].mxu0
        %2605 = vdwg.mxu0
        %2607 = vrot.lane.b32.xlu0 %v2603, 64
        %v2608 = vpop.permute.xlu0 %2607
        %v2610 = vsel %vm1279, %v1970, %v2608
        %s2611 = scalar_lea.vmem %s19, 64
        %v2612 = vld [vmem:[%s2611] sm:$0xf]
        %v2613 = vld [vmem:[%s2611 + $0x4] sm:$0xf]
        %v2614 = vld [vmem:[%s2611 + $0x8] sm:$0xf]
        %v2615 = vld [vmem:[%s2611 + $0xc] sm:$0xf]
        %v2616 = vld [vmem:[%s2611 + $0x10] sm:$0xf]
        %v2617 = vld [vmem:[%s2611 + $0x14] sm:$0xf]
        %v2618 = vld [vmem:[%s2611 + $0x18] sm:$0xf]
        %v2619 = vld [vmem:[%s2611 + $0x1c] sm:$0xf]
        %v2620 = vld [vmem:[%s2611 + $0x20] sm:$0xf]
        %v2621 = vld [vmem:[%s2611 + $0x24] sm:$0xf]
        %v2622 = vld [vmem:[%s2611 + $0x28] sm:$0xf]
        %v2623 = vld [vmem:[%s2611 + $0x2c] sm:$0xf]
        %v2624 = vld [vmem:[%s2611 + $0x30] sm:$0xf]
        %v2625 = vld [vmem:[%s2611 + $0x34] sm:$0xf]
        %v2626 = vld [vmem:[%s2611 + $0x38] sm:$0xf]
        %v2627 = vld [vmem:[%s2611 + $0x3c] sm:$0xf]
        %v2628 = vpack.c.bf16 %v2610, %v2610
        %s2629 = scalar_lea.vmem %s20, 1
        %v2630 = vld [vmem:[%s2629] sm:$0x1]
        %v2632 = vlaneseq
        %v2633 = vshrl.u32 %v2632, 7
        %v2634 = vsub.s32 0, %v2633
        %v2635 = vrot.slane %v2630, %v2634
        %v2653 = vunpack.c.l.b16 %v2612
        %v2654 = vunpack.c.l.b16 %v2613
        %v2655 = vunpack.c.l.b16 %v2614
        %v2656 = vunpack.c.l.b16 %v2615
        %v2657 = vunpack.c.l.b16 %v2616
        %v2658 = vunpack.c.l.b16 %v2617
        %v2659 = vunpack.c.l.b16 %v2618
        %v2660 = vunpack.c.l.b16 %v2619
        %v2661 = vunpack.c.l.b16 %v2620
        %v2662 = vunpack.c.l.b16 %v2621
        %v2663 = vunpack.c.l.b16 %v2622
        %v2664 = vunpack.c.l.b16 %v2623
        %v2665 = vunpack.c.l.b16 %v2624
        %v2666 = vunpack.c.l.b16 %v2625
        %v2667 = vunpack.c.l.b16 %v2626
        %v2668 = vunpack.c.l.b16 %v2627
        %v2669 = vpack.c.b16 %v2654, %v2653
        %v2670 = vpack.c.b16 %v2656, %v2655
        %v2671 = vpack.c.b16 %v2658, %v2657
        %v2672 = vpack.c.b16 %v2660, %v2659
        %v2673 = vpack.c.b16 %v2662, %v2661
        %v2674 = vpack.c.b16 %v2664, %v2663
        %v2675 = vpack.c.b16 %v2666, %v2665
        %v2676 = vpack.c.b16 %v2668, %v2667
        %2685 = vmatprep.subr.bf16.mxu0 0
        %2686 = vmatpush1.bf16.msra.mxu0 %v2669
        %2687 = vmatprep.subr.bf16.mxu0 0
        %2688 = vmatpush1.bf16.msra.mxu0 %v2670
        %2689 = vmatprep.subr.bf16.mxu0 0
        %2690 = vmatpush1.bf16.msra.mxu0 %v2671
        %2691 = vmatprep.subr.bf16.mxu0 0
        %2692 = vmatpush1.bf16.msra.mxu0 %v2672
        %2693 = vmatprep.subr.bf16.mxu0 0
        %2694 = vmatpush1.bf16.msra.mxu0 %v2673
        %2695 = vmatprep.subr.bf16.mxu0 0
        %2696 = vmatpush1.bf16.msra.mxu0 %v2674
        %2697 = vmatprep.subr.bf16.mxu0 0
        %2698 = vmatpush1.bf16.msra.mxu0 %v2675
        %2699 = vmatprep.subr.bf16.mxu0 0
        %2700 = vmatpush1.bf16.msra.mxu0 %v2676
        %2701 = vmatprep.subr.bf16.mxu0 0
        %2702 = vmatpush1.bf16.msra.mxu0 0
        %2703 = vmatprep.subr.bf16.mxu0 0
        %2704 = vmatpush1.bf16.msra.mxu0 0
        %2705 = vmatprep.subr.bf16.mxu0 0
        %2706 = vmatpush1.bf16.msra.mxu0 0
        %2707 = vmatprep.subr.bf16.mxu0 0
        %2708 = vmatpush1.bf16.msra.mxu0 0
        %2709 = vmatprep.subr.bf16.mxu0 0
        %2710 = vmatpush1.bf16.msra.mxu0 0
        %2711 = vmatprep.subr.bf16.mxu0 0
        %2712 = vmatpush1.bf16.msra.mxu0 0
        %2713 = vmatprep.subr.bf16.mxu0 0
        %2714 = vmatpush1.bf16.msra.mxu0 0
        %2715 = vmatprep.subr.bf16.mxu0 0
        %2716 = vmatpush1.bf16.msra.mxu0 0
        %2717 = vmatprep.mubr.bf16.mxu0 0
        %2718 = vmatmul.mubr.bf16.gmra.mrb[0].mxu0 %v2628
        %v2719 = vpop.f32.mrb[0].mxu0
        %v2720 = vadd.f32 %v2635, %v2719
        %v2721 = vpop.f32.mrb[0].mxu0
        %v2722 = vpop.f32.mrb[0].mxu0
        %v2723 = vpop.f32.mrb[0].mxu0
        %2724 = vdwg.mxu0
        %v2725 = vxor.u32 %v2720, 2147483648
        %v2726 = vmul.f32 %v2725, 1.442695
        %v2727 = vpow.pop %v2726
        %v2728 = vadd.f32 %v2727, 1.0
        %v2729 = vrcp.pop %v2728
        %v2730 = vmul.f32 1.0, %v2729
        %v2731 = vmul.f32 %v2720, %v2730
        %s2732 = scalar_lea.vmem %s21, 32
        %v2733 = vld [vmem:[%s2732] sm:$0xf]
        %v2734 = vld [vmem:[%s2732 + $0x4] sm:$0xf]
        %v2735 = vld [vmem:[%s2732 + $0x8] sm:$0xf]
        %v2736 = vld [vmem:[%s2732 + $0xc] sm:$0xf]
        %v2737 = vld [vmem:[%s2732 + $0x10] sm:$0xf]
        %v2738 = vld [vmem:[%s2732 + $0x14] sm:$0xf]
        %v2739 = vld [vmem:[%s2732 + $0x18] sm:$0xf]
        %v2740 = vld [vmem:[%s2732 + $0x1c] sm:$0xf]
        %v2741 = vpack.c.bf16 %v2731, %v2731
        %s2742 = scalar_lea.vmem %s22, 1
        %v2743 = vld [vmem:[%s2742] sm:$0x1]
        %v2745 = vlaneseq
        %v2746 = vshrl.u32 %v2745, 7
        %v2747 = vsub.s32 0, %v2746
        %v2748 = vrot.slane %v2743, %v2747
        %v2758 = vunpack.c.l.b16 %v2733
        %v2759 = vunpack.c.l.b16 %v2734
        %v2760 = vunpack.c.l.b16 %v2735
        %v2761 = vunpack.c.l.b16 %v2736
        %v2762 = vunpack.c.l.b16 %v2737
        %v2763 = vunpack.c.l.b16 %v2738
        %v2764 = vunpack.c.l.b16 %v2739
        %v2765 = vunpack.c.l.b16 %v2740
        %v2766 = vpack.c.b16 %v2759, %v2758
        %v2767 = vpack.c.b16 %v2761, %v2760
        %v2768 = vpack.c.b16 %v2763, %v2762
        %v2769 = vpack.c.b16 %v2765, %v2764
        %v2775 = vsel %vm1279, %v2741, 0
        %2777 = vmatprep.subr.bf16.mxu0 0
        %2778 = vmatpush1.bf16.msra.mxu0 %v2766
        %2779 = vmatprep.subr.bf16.mxu0 0
        %2780 = vmatpush1.bf16.msra.mxu0 %v2767
        %2781 = vmatprep.subr.bf16.mxu0 0
        %2782 = vmatpush1.bf16.msra.mxu0 %v2768
        %2783 = vmatprep.subr.bf16.mxu0 0
        %2784 = vmatpush1.bf16.msra.mxu0 %v2769
        %2785 = vmatprep.subr.bf16.mxu0 0
        %2786 = vmatpush1.bf16.msra.mxu0 0
        %2787 = vmatprep.subr.bf16.mxu0 0
        %2788 = vmatpush1.bf16.msra.mxu0 0
        %2789 = vmatprep.subr.bf16.mxu0 0
        %2790 = vmatpush1.bf16.msra.mxu0 0
        %2791 = vmatprep.subr.bf16.mxu0 0
        %2792 = vmatpush1.bf16.msra.mxu0 0
        %2793 = vmatprep.subr.bf16.mxu0 0
        %2794 = vmatpush1.bf16.msra.mxu0 0
        %2795 = vmatprep.subr.bf16.mxu0 0
        %2796 = vmatpush1.bf16.msra.mxu0 0
        %2797 = vmatprep.subr.bf16.mxu0 0
        %2798 = vmatpush1.bf16.msra.mxu0 0
        %2799 = vmatprep.subr.bf16.mxu0 0
        %2800 = vmatpush1.bf16.msra.mxu0 0
        %2801 = vmatprep.subr.bf16.mxu0 0
        %2802 = vmatpush1.bf16.msra.mxu0 0
        %2803 = vmatprep.subr.bf16.mxu0 0
        %2804 = vmatpush1.bf16.msra.mxu0 0
        %2805 = vmatprep.subr.bf16.mxu0 0
        %2806 = vmatpush1.bf16.msra.mxu0 0
        %2807 = vmatprep.subr.bf16.mxu0 0
        %2808 = vmatpush1.bf16.msra.mxu0 0
        %2809 = vmatprep.mubr.bf16.mxu0 0
        %2810 = vmatmul.mubr.bf16.gmra.mrb[0].mxu0 %v2775
        %v2811 = vpop.f32.mrb[0].mxu0
        %v2812 = vadd.f32 %v2748, %v2811
        %v2813 = vpop.f32.mrb[0].mxu0
        %v2814 = vpop.f32.mrb[0].mxu0
        %v2815 = vpop.f32.mrb[0].mxu0
        %2816 = vdwg.mxu0
        %v2817 = vsel %vm1106, %v2603, 0.0
        %v2818 = vadd.f32 %v1970, %v2817
        %v2819 = vadd.f32 %v2818, %v2812
        %2820 = vmatprep.subr.mxu0 0.0
        %2821 = vmatpush1.msra.mxu0 %v2819
        %2822 = vmatprep.subr.mxu0 0.0
        %2823 = vmatpush1.msra.mxu0 0.0
        %2824 = vmatprep.subr.mxu0 0.0
        %2825 = vmatpush1.msra.mxu0 0.0
        %2826 = vmatprep.subr.mxu0 0.0
        %2827 = vmatpush1.msra.mxu0 0.0
        %2828 = vmatprep.subr.mxu0 0.0
        %2829 = vmatpush1.msra.mxu0 0.0
        %2830 = vmatprep.subr.mxu0 0.0
        %2831 = vmatpush1.msra.mxu0 0.0
        %2832 = vmatprep.subr.mxu0 0.0
        %2833 = vmatpush1.msra.mxu0 0.0
        %2834 = vmatprep.subr.mxu0 0.0
        %2835 = vmatpush1.msra.mxu0 0.0
        %2836 = vmatprep.subr.mxu0 0.0
        %2837 = vmatpush1.msra.mxu0 0.0
        %2838 = vmatprep.subr.mxu0 0.0
        %2839 = vmatpush1.msra.mxu0 0.0
        %2840 = vmatprep.subr.mxu0 0.0
        %2841 = vmatpush1.msra.mxu0 0.0
        %2842 = vmatprep.subr.mxu0 0.0
        %2843 = vmatpush1.msra.mxu0 0.0
        %2844 = vmatprep.subr.mxu0 0.0
        %2845 = vmatpush1.msra.mxu0 0.0
        %2846 = vmatprep.subr.mxu0 0.0
        %2847 = vmatpush1.msra.mxu0 0.0
        %2848 = vmatprep.subr.mxu0 0.0
        %2849 = vmatpush1.msra.mxu0 0.0
        %2850 = vmatprep.subr.mxu0 0.0
        %2851 = vmatpush1.msra.mxu0 0.0
        %2852 = vmatprep.subr.mxu0 0.0
        %2853 = vmatpush1.msra.mxu0 0.0
        %2854 = vmatprep.subr.mxu0 0.0
        %2855 = vmatpush1.msra.mxu0 0.0
        %2856 = vmatprep.subr.mxu0 0.0
        %2857 = vmatpush1.msra.mxu0 0.0
        %2858 = vmatprep.subr.mxu0 0.0
        %2859 = vmatpush1.msra.mxu0 0.0
        %2860 = vmatprep.subr.mxu0 0.0
        %2861 = vmatpush1.msra.mxu0 0.0
        %2862 = vmatprep.subr.mxu0 0.0
        %2863 = vmatpush1.msra.mxu0 0.0
        %2864 = vmatprep.subr.mxu0 0.0
        %2865 = vmatpush1.msra.mxu0 0.0
        %2866 = vmatprep.subr.mxu0 0.0
        %2867 = vmatpush1.msra.mxu0 0.0
        %2868 = vmatprep.subr.mxu0 0.0
        %2869 = vmatpush1.msra.mxu0 0.0
        %2870 = vmatprep.subr.mxu0 0.0
        %2871 = vmatpush1.msra.mxu0 0.0
        %2872 = vmatprep.subr.mxu0 0.0
        %2873 = vmatpush1.msra.mxu0 0.0
        %2874 = vmatprep.subr.mxu0 0.0
        %2875 = vmatpush1.msra.mxu0 0.0
        %2876 = vmatprep.subr.mxu0 0.0
        %2877 = vmatpush1.msra.mxu0 0.0
        %2878 = vmatprep.subr.mxu0 0.0
        %2879 = vmatpush1.msra.mxu0 0.0
        %2880 = vmatprep.subr.mxu0 0.0
        %2881 = vmatpush1.msra.mxu0 0.0
        %2882 = vmatprep.subr.mxu0 0.0
        %2883 = vmatpush1.msra.mxu0 0.0
        %2884 = vmatprep.mubr.f32.mxu0 0.0
        %2885 = vmatmul.mubr.f32.gmra.mrb[0].mxu0 %v1110
        %v2886 = vpop.f32.mrb[0].mxu0
        %v2887 = vadd.f32 0.0, %v2886
        %v2888 = vpop.f32.mrb[0].mxu0
        %2889 = vmatprep.mubr.f32.mxu0 0.0
        %2890 = vmatmul.mubr.f32.gmra.mrb[0].mxu0 %v1113
        %v2891 = vpop.f32.mrb[0].mxu0
        %v2892 = vadd.f32 0.0, %v2891
        %v2893 = vpop.f32.mrb[0].mxu0
        %2894 = vdwg.mxu0
        %2895 = vmatprep.subr.mxu0 0.0
        %2896 = vmatpush1.msra.mxu0 %v2819
        %2897 = vmatprep.subr.mxu0 0.0
        %2898 = vmatpush1.msra.mxu0 0.0
        %2899 = vmatprep.subr.mxu0 0.0
        %2900 = vmatpush1.msra.mxu0 0.0
        %2901 = vmatprep.subr.mxu0 0.0
        %2902 = vmatpush1.msra.mxu0 0.0
        %2903 = vmatprep.subr.mxu0 0.0
        %2904 = vmatpush1.msra.mxu0 0.0
        %2905 = vmatprep.subr.mxu0 0.0
        %2906 = vmatpush1.msra.mxu0 0.0
        %2907 = vmatprep.subr.mxu0 0.0
        %2908 = vmatpush1.msra.mxu0 0.0
        %2909 = vmatprep.subr.mxu0 0.0
        %2910 = vmatpush1.msra.mxu0 0.0
        %2911 = vmatprep.subr.mxu0 0.0
        %2912 = vmatpush1.msra.mxu0 0.0
        %2913 = vmatprep.subr.mxu0 0.0
        %2914 = vmatpush1.msra.mxu0 0.0
        %2915 = vmatprep.subr.mxu0 0.0
        %2916 = vmatpush1.msra.mxu0 0.0
        %2917 = vmatprep.subr.mxu0 0.0
        %2918 = vmatpush1.msra.mxu0 0.0
        %2919 = vmatprep.subr.mxu0 0.0
        %2920 = vmatpush1.msra.mxu0 0.0
        %2921 = vmatprep.subr.mxu0 0.0
        %2922 = vmatpush1.msra.mxu0 0.0
        %2923 = vmatprep.subr.mxu0 0.0
        %2924 = vmatpush1.msra.mxu0 0.0
        %2925 = vmatprep.subr.mxu0 0.0
        %2926 = vmatpush1.msra.mxu0 0.0
        %2927 = vmatprep.subr.mxu0 0.0
        %2928 = vmatpush1.msra.mxu0 0.0
        %2929 = vmatprep.subr.mxu0 0.0
        %2930 = vmatpush1.msra.mxu0 0.0
        %2931 = vmatprep.subr.mxu0 0.0
        %2932 = vmatpush1.msra.mxu0 0.0
        %2933 = vmatprep.subr.mxu0 0.0
        %2934 = vmatpush1.msra.mxu0 0.0
        %2935 = vmatprep.subr.mxu0 0.0
        %2936 = vmatpush1.msra.mxu0 0.0
        %2937 = vmatprep.subr.mxu0 0.0
        %2938 = vmatpush1.msra.mxu0 0.0
        %2939 = vmatprep.subr.mxu0 0.0
        %2940 = vmatpush1.msra.mxu0 0.0
        %2941 = vmatprep.subr.mxu0 0.0
        %2942 = vmatpush1.msra.mxu0 0.0
        %2943 = vmatprep.subr.mxu0 0.0
        %2944 = vmatpush1.msra.mxu0 0.0
        %2945 = vmatprep.subr.mxu0 0.0
        %2946 = vmatpush1.msra.mxu0 0.0
        %2947 = vmatprep.subr.mxu0 0.0
        %2948 = vmatpush1.msra.mxu0 0.0
        %2949 = vmatprep.subr.mxu0 0.0
        %2950 = vmatpush1.msra.mxu0 0.0
        %2951 = vmatprep.subr.mxu0 0.0
        %2952 = vmatpush1.msra.mxu0 0.0
        %2953 = vmatprep.subr.mxu0 0.0
        %2954 = vmatpush1.msra.mxu0 0.0
        %2955 = vmatprep.subr.mxu0 0.0
        %2956 = vmatpush1.msra.mxu0 0.0
        %2957 = vmatprep.subr.mxu0 0.0
        %2958 = vmatpush1.msra.mxu0 0.0
        %2959 = vmatprep.mubr.f32.mxu0 0.0
        %2960 = vmatmul.mubr.f32.gmra.mrb[0].mxu0 %v1191
        %v2961 = vpop.f32.mrb[0].mxu0
        %v2962 = vadd.f32 0.0, %v2961
        %v2963 = vpop.f32.mrb[0].mxu0
        %2964 = vmatprep.mubr.f32.mxu0 0.0
        %2965 = vmatmul.mubr.f32.gmra.mrb[0].mxu0 %v1194
        %v2966 = vpop.f32.mrb[0].mxu0
        %v2967 = vadd.f32 0.0, %v2966
        %v2968 = vpop.f32.mrb[0].mxu0
        %2969 = vdwg.mxu0
        %2972 = vrot.lane.b32.xlu0 %v2962, 64
        %v2973 = vpop.permute.xlu0 %2972
        %2974 = vrot.lane.b32.xlu0 %v2967, 64
        %v2975 = vpop.permute.xlu0 %2974
        %v2978 = vsel %vm1279, %v2887, %v2973
        %v2979 = vsel %vm1279, %v2892, %v2975
        %v2980 = vsub.f32 %v2887, %v2962
        %v2981 = vsub.f32 %v2892, %v2967
        %v2982 = vsel %vm1106, %v2980, 0.0
        %v2983 = vsel %vm1106, %v2981, 0.0
        %v2984 = vmul.f32 %v2982, %v2982
        %v2985 = vmul.f32 %v2983, %v2983
        %v2986 = vsel %vm1279, %v2984, 0.0
        %2987 = vadd.xlane.f32.xlu0 %v2986
        %v2988 = vpop.xlane.xlu0 %2987
        %v2989 = vsel %vm1279, %v2985, 0.0
        %2990 = vadd.xlane.f32.xlu0 %v2989
        %v2991 = vpop.xlane.xlu0 %2990
        %s2992 = scalar_lea.vmem %s9, 128
        %v2993 = vld [vmem:[%s2992] sm:$0xf]
        %v2994 = vld [vmem:[%s2992 + $0x4] sm:$0xf]
        %v2995 = vld [vmem:[%s2992 + $0x8] sm:$0xf]
        %v2996 = vld [vmem:[%s2992 + $0xc] sm:$0xf]
        %v2997 = vld [vmem:[%s2992 + $0x10] sm:$0xf]
        %v2998 = vld [vmem:[%s2992 + $0x14] sm:$0xf]
        %v2999 = vld [vmem:[%s2992 + $0x18] sm:$0xf]
        %v3000 = vld [vmem:[%s2992 + $0x1c] sm:$0xf]
        %v3001 = vld [vmem:[%s2992 + $0x20] sm:$0xf]
        %v3002 = vld [vmem:[%s2992 + $0x24] sm:$0xf]
        %v3003 = vld [vmem:[%s2992 + $0x28] sm:$0xf]
        %v3004 = vld [vmem:[%s2992 + $0x2c] sm:$0xf]
        %v3005 = vld [vmem:[%s2992 + $0x30] sm:$0xf]
        %v3006 = vld [vmem:[%s2992 + $0x34] sm:$0xf]
        %v3007 = vld [vmem:[%s2992 + $0x38] sm:$0xf]
        %v3008 = vld [vmem:[%s2992 + $0x3c] sm:$0xf]
        %v3009 = vpack.c.bf16 %v2979, %v2978
        %s3010 = scalar_lea.vmem %s10, 2
        %v3011 = vld [vmem:[%s3010] sm:$0x1]
        %v3013 = vlaneseq
        %v3014 = vshrl.u32 %v3013, 7
        %v3015 = vsub.s32 0, %v3014
        %v3016 = vrot.slane %v3011, %v3015
        %v3018 = vmul.f32 %v2988, %v3016
        %v3019 = vmul.f32 %v2991, %v3016
        %v3036 = vunpack.c.l.b16 %v2993
        %v3037 = vunpack.c.l.b16 %v2994
        %v3038 = vunpack.c.l.b16 %v2995
        %v3039 = vunpack.c.l.b16 %v2996
        %v3040 = vunpack.c.l.b16 %v2997
        %v3041 = vunpack.c.l.b16 %v2998
        %v3042 = vunpack.c.l.b16 %v2999
        %v3043 = vunpack.c.l.b16 %v3000
        %v3044 = vunpack.c.l.b16 %v3001
        %v3045 = vunpack.c.l.b16 %v3002
        %v3046 = vunpack.c.l.b16 %v3003
        %v3047 = vunpack.c.l.b16 %v3004
        %v3048 = vunpack.c.l.b16 %v3005
        %v3049 = vunpack.c.l.b16 %v3006
        %v3050 = vunpack.c.l.b16 %v3007
        %v3051 = vunpack.c.l.b16 %v3008
        %v3052 = vpack.c.b16 %v3037, %v3036
        %v3053 = vpack.c.b16 %v3039, %v3038
        %v3054 = vpack.c.b16 %v3041, %v3040
        %v3055 = vpack.c.b16 %v3043, %v3042
        %v3056 = vpack.c.b16 %v3045, %v3044
        %v3057 = vpack.c.b16 %v3047, %v3046
        %v3058 = vpack.c.b16 %v3049, %v3048
        %v3059 = vpack.c.b16 %v3051, %v3050
        %3068 = vmatprep.subr.bf16.mxu0 0
        %3069 = vmatpush1.bf16.msra.mxu0 %v3052
        %3070 = vmatprep.subr.bf16.mxu0 0
        %3071 = vmatpush1.bf16.msra.mxu0 %v3053
        %3072 = vmatprep.subr.bf16.mxu0 0
        %3073 = vmatpush1.bf16.msra.mxu0 %v3054
        %3074 = vmatprep.subr.bf16.mxu0 0
        %3075 = vmatpush1.bf16.msra.mxu0 %v3055
        %3076 = vmatprep.subr.bf16.mxu0 0
        %3077 = vmatpush1.bf16.msra.mxu0 %v3056
        %3078 = vmatprep.subr.bf16.mxu0 0
        %3079 = vmatpush1.bf16.msra.mxu0 %v3057
        %3080 = vmatprep.subr.bf16.mxu0 0
        %3081 = vmatpush1.bf16.msra.mxu0 %v3058
        %3082 = vmatprep.subr.bf16.mxu0 0
        %3083 = vmatpush1.bf16.msra.mxu0 %v3059
        %3084 = vmatprep.subr.bf16.mxu0 0
        %3085 = vmatpush1.bf16.msra.mxu0 0
        %3086 = vmatprep.subr.bf16.mxu0 0
        %3087 = vmatpush1.bf16.msra.mxu0 0
        %3088 = vmatprep.subr.bf16.mxu0 0
        %3089 = vmatpush1.bf16.msra.mxu0 0
        %3090 = vmatprep.subr.bf16.mxu0 0
        %3091 = vmatpush1.bf16.msra.mxu0 0
        %3092 = vmatprep.subr.bf16.mxu0 0
        %3093 = vmatpush1.bf16.msra.mxu0 0
        %3094 = vmatprep.subr.bf16.mxu0 0
        %3095 = vmatpush1.bf16.msra.mxu0 0
        %3096 = vmatprep.subr.bf16.mxu0 0
        %3097 = vmatpush1.bf16.msra.mxu0 0
        %3098 = vmatprep.subr.bf16.mxu0 0
        %3099 = vmatpush1.bf16.msra.mxu0 0
        %3100 = vmatprep.mubr.bf16.mxu0 0
        %3101 = vmatmul.mubr.bf16.gmra.mrb[0].mxu0 %v3009
        %v3102 = vpop.f32.mrb[0].mxu0
        %v3103 = vadd.f32 %v3018, %v3102
        %v3104 = vpop.f32.mrb[0].mxu0
        %v3105 = vpop.f32.mrb[0].mxu0
        %v3106 = vadd.f32 %v3019, %v3105
        %v3107 = vpop.f32.mrb[0].mxu0
        %3108 = vdwg.mxu0
        %s3109 = scalar_lea.vmem %s11, 2
        %v3110 = vld [vmem:[%s3109] sm:$0x1]
        %v3112 = vlaneseq
        %v3113 = vshrl.u32 %v3112, 7
        %v3114 = vsub.s32 0, %v3113
        %v3115 = vrot.slane %v3110, %v3114
        %v3117 = vmul.f32 %v1413, %v3115
        %v3118 = vmul.f32 %v1418, %v3115
        %v3119 = vadd.f32 %v3103, %v3117
        %v3120 = vadd.f32 %v3106, %v3118
        %s3121 = scalar_lea.vmem %s12, 2
        %v3122 = vld [vmem:[%s3121] sm:$0x1]
        %v3124 = vlaneseq
        %v3125 = vshrl.u32 %v3124, 7
        %v3126 = vsub.s32 0, %v3125
        %v3127 = vrot.slane %v3122, %v3126
        %v3129 = vadd.f32 %v3119, %v3127
        %v3130 = vadd.f32 %v3120, %v3127
        %v3131 = vxor.u32 %v3129, 2147483648
        %v3132 = vxor.u32 %v3130, 2147483648
        %v3133 = vmul.f32 %v3131, 1.442695
        %v3134 = vpow.pop %v3133
        %v3135 = vmul.f32 %v3132, 1.442695
        %v3136 = vpow.pop %v3135
        %v3137 = vadd.f32 %v3134, 1.0
        %v3138 = vadd.f32 %v3136, 1.0
        %v3139 = vrcp.pop %v3137
        %v3140 = vmul.f32 1.0, %v3139
        %v3141 = vrcp.pop %v3138
        %v3142 = vmul.f32 1.0, %v3141
        %v3143 = vmul.f32 %v3129, %v3140
        %v3144 = vmul.f32 %v3130, %v3142
        %s3145 = scalar_lea.vmem %s13, 64
        %v3146 = vld [vmem:[%s3145] sm:$0xf]
        %v3147 = vld [vmem:[%s3145 + $0x4] sm:$0xf]
        %v3148 = vld [vmem:[%s3145 + $0x8] sm:$0xf]
        %v3149 = vld [vmem:[%s3145 + $0xc] sm:$0xf]
        %v3150 = vld [vmem:[%s3145 + $0x10] sm:$0xf]
        %v3151 = vld [vmem:[%s3145 + $0x14] sm:$0xf]
        %v3152 = vld [vmem:[%s3145 + $0x18] sm:$0xf]
        %v3153 = vld [vmem:[%s3145 + $0x1c] sm:$0xf]
        %v3154 = vpack.c.bf16 %v3144, %v3143
        %s3155 = scalar_lea.vmem %s14, 2
        %v3156 = vld [vmem:[%s3155] sm:$0x1]
        %v3158 = vlaneseq
        %v3159 = vshrl.u32 %v3158, 7
        %v3160 = vsub.s32 0, %v3159
        %v3161 = vrot.slane %v3156, %v3160
        %v3171 = vunpack.c.l.b16 %v3146
        %v3172 = vunpack.c.l.b16 %v3147
        %v3173 = vunpack.c.l.b16 %v3148
        %v3174 = vunpack.c.l.b16 %v3149
        %v3175 = vunpack.c.l.b16 %v3150
        %v3176 = vunpack.c.l.b16 %v3151
        %v3177 = vunpack.c.l.b16 %v3152
        %v3178 = vunpack.c.l.b16 %v3153
        %v3179 = vpack.c.b16 %v3172, %v3171
        %v3180 = vpack.c.b16 %v3174, %v3173
        %v3181 = vpack.c.b16 %v3176, %v3175
        %v3182 = vpack.c.b16 %v3178, %v3177
        %v3188 = vsel %vm1279, %v3154, 0
        %3190 = vmatprep.subr.bf16.mxu0 0
        %3191 = vmatpush1.bf16.msra.mxu0 %v3179
        %3192 = vmatprep.subr.bf16.mxu0 0
        %3193 = vmatpush1.bf16.msra.mxu0 %v3180
        %3194 = vmatprep.subr.bf16.mxu0 0
        %3195 = vmatpush1.bf16.msra.mxu0 %v3181
        %3196 = vmatprep.subr.bf16.mxu0 0
        %3197 = vmatpush1.bf16.msra.mxu0 %v3182
        %3198 = vmatprep.subr.bf16.mxu0 0
        %3199 = vmatpush1.bf16.msra.mxu0 0
        %3200 = vmatprep.subr.bf16.mxu0 0
        %3201 = vmatpush1.bf16.msra.mxu0 0
        %3202 = vmatprep.subr.bf16.mxu0 0
        %3203 = vmatpush1.bf16.msra.mxu0 0
        %3204 = vmatprep.subr.bf16.mxu0 0
        %3205 = vmatpush1.bf16.msra.mxu0 0
        %3206 = vmatprep.subr.bf16.mxu0 0
        %3207 = vmatpush1.bf16.msra.mxu0 0
        %3208 = vmatprep.subr.bf16.mxu0 0
        %3209 = vmatpush1.bf16.msra.mxu0 0
        %3210 = vmatprep.subr.bf16.mxu0 0
        %3211 = vmatpush1.bf16.msra.mxu0 0
        %3212 = vmatprep.subr.bf16.mxu0 0
        %3213 = vmatpush1.bf16.msra.mxu0 0
        %3214 = vmatprep.subr.bf16.mxu0 0
        %3215 = vmatpush1.bf16.msra.mxu0 0
        %3216 = vmatprep.subr.bf16.mxu0 0
        %3217 = vmatpush1.bf16.msra.mxu0 0
        %3218 = vmatprep.subr.bf16.mxu0 0
        %3219 = vmatpush1.bf16.msra.mxu0 0
        %3220 = vmatprep.subr.bf16.mxu0 0
        %3221 = vmatpush1.bf16.msra.mxu0 0
        %3222 = vmatprep.mubr.bf16.mxu0 0
        %3223 = vmatmul.mubr.bf16.gmra.mrb[0].mxu0 %v3188
        %v3224 = vpop.f32.mrb[0].mxu0
        %v3225 = vadd.f32 %v3161, %v3224
        %v3226 = vpop.f32.mrb[0].mxu0
        %v3227 = vpop.f32.mrb[0].mxu0
        %v3228 = vadd.f32 %v3161, %v3227
        %v3229 = vpop.f32.mrb[0].mxu0
        %3230 = vdwg.mxu0
        %v3231 = vxor.u32 %v3225, 2147483648
        %v3232 = vxor.u32 %v3228, 2147483648
        %v3233 = vmul.f32 %v3231, 1.442695
        %v3234 = vpow.pop %v3233
        %v3235 = vmul.f32 %v3232, 1.442695
        %v3236 = vpow.pop %v3235
        %v3237 = vadd.f32 %v3234, 1.0
        %v3238 = vadd.f32 %v3236, 1.0
        %v3239 = vrcp.pop %v3237
        %v3240 = vmul.f32 1.0, %v3239
        %v3241 = vrcp.pop %v3238
        %v3242 = vmul.f32 1.0, %v3241
        %v3243 = vmul.f32 %v3225, %v3240
        %v3244 = vmul.f32 %v3228, %v3242
        %s3245 = scalar_lea.vmem %s15, 64
        %v3246 = vld [vmem:[%s3245] sm:$0xf]
        %v3247 = vld [vmem:[%s3245 + $0x4] sm:$0xf]
        %v3248 = vld [vmem:[%s3245 + $0x8] sm:$0xf]
        %v3249 = vld [vmem:[%s3245 + $0xc] sm:$0xf]
        %v3250 = vld [vmem:[%s3245 + $0x10] sm:$0xf]
        %v3251 = vld [vmem:[%s3245 + $0x14] sm:$0xf]
        %v3252 = vld [vmem:[%s3245 + $0x18] sm:$0xf]
        %v3253 = vld [vmem:[%s3245 + $0x1c] sm:$0xf]
        %v3254 = vpack.c.bf16 %v3244, %v3243
        %s3255 = scalar_lea.vmem %s16, 2
        %v3256 = vld [vmem:[%s3255] sm:$0x1]
        %v3258 = vlaneseq
        %v3259 = vshrl.u32 %v3258, 7
        %v3260 = vsub.s32 0, %v3259
        %v3261 = vrot.slane %v3256, %v3260
        %v3271 = vunpack.c.l.b16 %v3246
        %v3272 = vunpack.c.l.b16 %v3247
        %v3273 = vunpack.c.l.b16 %v3248
        %v3274 = vunpack.c.l.b16 %v3249
        %v3275 = vunpack.c.l.b16 %v3250
        %v3276 = vunpack.c.l.b16 %v3251
        %v3277 = vunpack.c.l.b16 %v3252
        %v3278 = vunpack.c.l.b16 %v3253
        %v3279 = vpack.c.b16 %v3272, %v3271
        %v3280 = vpack.c.b16 %v3274, %v3273
        %v3281 = vpack.c.b16 %v3276, %v3275
        %v3282 = vpack.c.b16 %v3278, %v3277
        %v3288 = vsel %vm1279, %v3254, 0
        %3290 = vmatprep.subr.bf16.mxu0 0
        %3291 = vmatpush1.bf16.msra.mxu0 %v3279
        %3292 = vmatprep.subr.bf16.mxu0 0
        %3293 = vmatpush1.bf16.msra.mxu0 %v3280
        %3294 = vmatprep.subr.bf16.mxu0 0
        %3295 = vmatpush1.bf16.msra.mxu0 %v3281
        %3296 = vmatprep.subr.bf16.mxu0 0
        %3297 = vmatpush1.bf16.msra.mxu0 %v3282
        %3298 = vmatprep.subr.bf16.mxu0 0
        %3299 = vmatpush1.bf16.msra.mxu0 0
        %3300 = vmatprep.subr.bf16.mxu0 0
        %3301 = vmatpush1.bf16.msra.mxu0 0
        %3302 = vmatprep.subr.bf16.mxu0 0
        %3303 = vmatpush1.bf16.msra.mxu0 0
        %3304 = vmatprep.subr.bf16.mxu0 0
        %3305 = vmatpush1.bf16.msra.mxu0 0
        %3306 = vmatprep.subr.bf16.mxu0 0
        %3307 = vmatpush1.bf16.msra.mxu0 0
        %3308 = vmatprep.subr.bf16.mxu0 0
        %3309 = vmatpush1.bf16.msra.mxu0 0
        %3310 = vmatprep.subr.bf16.mxu0 0
        %3311 = vmatpush1.bf16.msra.mxu0 0
        %3312 = vmatprep.subr.bf16.mxu0 0
        %3313 = vmatpush1.bf16.msra.mxu0 0
        %3314 = vmatprep.subr.bf16.mxu0 0
        %3315 = vmatpush1.bf16.msra.mxu0 0
        %3316 = vmatprep.subr.bf16.mxu0 0
        %3317 = vmatpush1.bf16.msra.mxu0 0
        %3318 = vmatprep.subr.bf16.mxu0 0
        %3319 = vmatpush1.bf16.msra.mxu0 0
        %3320 = vmatprep.subr.bf16.mxu0 0
        %3321 = vmatpush1.bf16.msra.mxu0 0
        %3322 = vmatprep.mubr.bf16.mxu0 0
        %3323 = vmatmul.mubr.bf16.gmra.mrb[0].mxu0 %v3288
        %v3324 = vpop.f32.mrb[0].mxu0
        %v3325 = vadd.f32 %v3261, %v3324
        %v3326 = vpop.f32.mrb[0].mxu0
        %v3327 = vpop.f32.mrb[0].mxu0
        %v3328 = vadd.f32 %v3261, %v3327
        %v3329 = vpop.f32.mrb[0].mxu0
        %3330 = vdwg.mxu0
        %v3331 = vxor.u32 %v3325, 2147483648
        %v3332 = vxor.u32 %v3328, 2147483648
        %v3333 = vmul.f32 %v3331, 1.442695
        %v3334 = vpow.pop %v3333
        %v3335 = vmul.f32 %v3332, 1.442695
        %v3336 = vpow.pop %v3335
        %v3337 = vadd.f32 %v3334, 1.0
        %v3338 = vadd.f32 %v3336, 1.0
        %v3339 = vrcp.pop %v3337
        %v3340 = vmul.f32 1.0, %v3339
        %v3341 = vrcp.pop %v3338
        %v3342 = vmul.f32 1.0, %v3341
        %v3343 = vmul.f32 %v3325, %v3340
        %v3344 = vmul.f32 %v3328, %v3342
        %s3345 = scalar_lea.vmem %s17, 2
        %v3346 = vld [vmem:[%s3345] sm:$0x1]
        %v3348 = vlaneseq
        %v3349 = vshrl.u32 %v3348, 7
        %v3350 = vsub.s32 0, %v3349
        %v3351 = vrot.slane %v3346, %v3350
        %v3353 = vmul.f32 %v3343, %v3351
        %v3354 = vmul.f32 %v3344, %v3351
        %v3355 = vsel %vm1279, %v3353, 0.0
        %3356 = vadd.xlane.f32.xlu0 %v3355
        %v3357 = vpop.xlane.xlu0 %3356
        %v3358 = vsel %vm1279, %v3354, 0.0
        %3359 = vadd.xlane.f32.xlu0 %v3358
        %v3360 = vpop.xlane.xlu0 %3359
        %s3361 = scalar_lea.vmem %s18, 2
        %v3362 = vld [vmem:[%s3361] sm:$0x1]
        %v3364 = vlaneseq
        %v3365 = vshrl.u32 %v3364, 7
        %v3366 = vsub.s32 0, %v3365
        %v3367 = vrot.slane %v3362, %v3366
        %v3369 = vadd.f32 %v3357, %v3367
        %v3370 = vadd.f32 %v3360, %v3367
        %3372 = vset.pattern.permute.xlu0 0
        %3373 = vperm.xlu0 %3372, %v3369
        %v3374 = vpop.permute.xlu0 %3373
        %3377 = vset.pattern.permute.xlu0 0
        %3378 = vperm.xlu0 %3377, %v3370
        %v3379 = vpop.permute.xlu0 %3378
        %v3381 = vmul.f32 %v2982, %v3374
        %v3382 = vmul.f32 %v2983, %v3379
        %v3383 = vadd.f32 %v3381, %v3243
        %v3384 = vadd.f32 %v3382, %v3244
        %3385 = vmatprep.subr.mxu0 0.0
        %3386 = vmatpush1.msra.mxu0 %v3383
        %3387 = vmatprep.subr.mxu0 0.0
        %3388 = vmatpush1.msra.mxu0 %v3384
        %3389 = vmatprep.subr.mxu0 0.0
        %3390 = vmatpush1.msra.mxu0 0.0
        %3391 = vmatprep.subr.mxu0 0.0
        %3392 = vmatpush1.msra.mxu0 0.0
        %3393 = vmatprep.subr.mxu0 0.0
        %3394 = vmatpush1.msra.mxu0 0.0
        %3395 = vmatprep.subr.mxu0 0.0
        %3396 = vmatpush1.msra.mxu0 0.0
        %3397 = vmatprep.subr.mxu0 0.0
        %3398 = vmatpush1.msra.mxu0 0.0
        %3399 = vmatprep.subr.mxu0 0.0
        %3400 = vmatpush1.msra.mxu0 0.0
        %3401 = vmatprep.subr.mxu0 0.0
        %3402 = vmatpush1.msra.mxu0 0.0
        %3403 = vmatprep.subr.mxu0 0.0
        %3404 = vmatpush1.msra.mxu0 0.0
        %3405 = vmatprep.subr.mxu0 0.0
        %3406 = vmatpush1.msra.mxu0 0.0
        %3407 = vmatprep.subr.mxu0 0.0
        %3408 = vmatpush1.msra.mxu0 0.0
        %3409 = vmatprep.subr.mxu0 0.0
        %3410 = vmatpush1.msra.mxu0 0.0
        %3411 = vmatprep.subr.mxu0 0.0
        %3412 = vmatpush1.msra.mxu0 0.0
        %3413 = vmatprep.subr.mxu0 0.0
        %3414 = vmatpush1.msra.mxu0 0.0
        %3415 = vmatprep.subr.mxu0 0.0
        %3416 = vmatpush1.msra.mxu0 0.0
        %3417 = vmatprep.subr.mxu0 0.0
        %3418 = vmatpush1.msra.mxu0 0.0
        %3419 = vmatprep.subr.mxu0 0.0
        %3420 = vmatpush1.msra.mxu0 0.0
        %3421 = vmatprep.subr.mxu0 0.0
        %3422 = vmatpush1.msra.mxu0 0.0
        %3423 = vmatprep.subr.mxu0 0.0
        %3424 = vmatpush1.msra.mxu0 0.0
        %3425 = vmatprep.subr.mxu0 0.0
        %3426 = vmatpush1.msra.mxu0 0.0
        %3427 = vmatprep.subr.mxu0 0.0
        %3428 = vmatpush1.msra.mxu0 0.0
        %3429 = vmatprep.subr.mxu0 0.0
        %3430 = vmatpush1.msra.mxu0 0.0
        %3431 = vmatprep.subr.mxu0 0.0
        %3432 = vmatpush1.msra.mxu0 0.0
        %3433 = vmatprep.subr.mxu0 0.0
        %3434 = vmatpush1.msra.mxu0 0.0
        %3435 = vmatprep.subr.mxu0 0.0
        %3436 = vmatpush1.msra.mxu0 0.0
        %3437 = vmatprep.subr.mxu0 0.0
        %3438 = vmatpush1.msra.mxu0 0.0
        %3439 = vmatprep.subr.mxu0 0.0
        %3440 = vmatpush1.msra.mxu0 0.0
        %3441 = vmatprep.subr.mxu0 0.0
        %3442 = vmatpush1.msra.mxu0 0.0
        %3443 = vmatprep.subr.mxu0 0.0
        %3444 = vmatpush1.msra.mxu0 0.0
        %3445 = vmatprep.subr.mxu0 0.0
        %3446 = vmatpush1.msra.mxu0 0.0
        %3447 = vmatprep.subr.mxu0 0.0
        %3448 = vmatpush1.msra.mxu0 0.0
        %3449 = vmatprep.mubr.f32.mxu0 0.0
        %3450 = vmatmul.mubr.f32.gmra.mrb[0].mxu0 %v1689
        %v3451 = vpop.f32.mrb[0].mxu0
        %v3452 = vadd.f32 0.0, %v3451
        %v3453 = vpop.f32.mrb[0].mxu0
        %3454 = vdwg.mxu0
        %3456 = vrot.lane.b32.xlu0 %v3452, 64
        %v3457 = vpop.permute.xlu0 %3456
        %v3459 = vsel %vm1279, %v2819, %v3457
        %s3460 = scalar_lea.vmem %s19, 128
        %v3461 = vld [vmem:[%s3460] sm:$0xf]
        %v3462 = vld [vmem:[%s3460 + $0x4] sm:$0xf]
        %v3463 = vld [vmem:[%s3460 + $0x8] sm:$0xf]
        %v3464 = vld [vmem:[%s3460 + $0xc] sm:$0xf]
        %v3465 = vld [vmem:[%s3460 + $0x10] sm:$0xf]
        %v3466 = vld [vmem:[%s3460 + $0x14] sm:$0xf]
        %v3467 = vld [vmem:[%s3460 + $0x18] sm:$0xf]
        %v3468 = vld [vmem:[%s3460 + $0x1c] sm:$0xf]
        %v3469 = vld [vmem:[%s3460 + $0x20] sm:$0xf]
        %v3470 = vld [vmem:[%s3460 + $0x24] sm:$0xf]
        %v3471 = vld [vmem:[%s3460 + $0x28] sm:$0xf]
        %v3472 = vld [vmem:[%s3460 + $0x2c] sm:$0xf]
        %v3473 = vld [vmem:[%s3460 + $0x30] sm:$0xf]
        %v3474 = vld [vmem:[%s3460 + $0x34] sm:$0xf]
        %v3475 = vld [vmem:[%s3460 + $0x38] sm:$0xf]
        %v3476 = vld [vmem:[%s3460 + $0x3c] sm:$0xf]
        %v3477 = vpack.c.bf16 %v3459, %v3459
        %s3478 = scalar_lea.vmem %s20, 2
        %v3479 = vld [vmem:[%s3478] sm:$0x1]
        %v3481 = vlaneseq
        %v3482 = vshrl.u32 %v3481, 7
        %v3483 = vsub.s32 0, %v3482
        %v3484 = vrot.slane %v3479, %v3483
        %v3502 = vunpack.c.l.b16 %v3461
        %v3503 = vunpack.c.l.b16 %v3462
        %v3504 = vunpack.c.l.b16 %v3463
        %v3505 = vunpack.c.l.b16 %v3464
        %v3506 = vunpack.c.l.b16 %v3465
        %v3507 = vunpack.c.l.b16 %v3466
        %v3508 = vunpack.c.l.b16 %v3467
        %v3509 = vunpack.c.l.b16 %v3468
        %v3510 = vunpack.c.l.b16 %v3469
        %v3511 = vunpack.c.l.b16 %v3470
        %v3512 = vunpack.c.l.b16 %v3471
        %v3513 = vunpack.c.l.b16 %v3472
        %v3514 = vunpack.c.l.b16 %v3473
        %v3515 = vunpack.c.l.b16 %v3474
        %v3516 = vunpack.c.l.b16 %v3475
        %v3517 = vunpack.c.l.b16 %v3476
        %v3518 = vpack.c.b16 %v3503, %v3502
        %v3519 = vpack.c.b16 %v3505, %v3504
        %v3520 = vpack.c.b16 %v3507, %v3506
        %v3521 = vpack.c.b16 %v3509, %v3508
        %v3522 = vpack.c.b16 %v3511, %v3510
        %v3523 = vpack.c.b16 %v3513, %v3512
        %v3524 = vpack.c.b16 %v3515, %v3514
        %v3525 = vpack.c.b16 %v3517, %v3516
        %3534 = vmatprep.subr.bf16.mxu0 0
        %3535 = vmatpush1.bf16.msra.mxu0 %v3518
        %3536 = vmatprep.subr.bf16.mxu0 0
        %3537 = vmatpush1.bf16.msra.mxu0 %v3519
        %3538 = vmatprep.subr.bf16.mxu0 0
        %3539 = vmatpush1.bf16.msra.mxu0 %v3520
        %3540 = vmatprep.subr.bf16.mxu0 0
        %3541 = vmatpush1.bf16.msra.mxu0 %v3521
        %3542 = vmatprep.subr.bf16.mxu0 0
        %3543 = vmatpush1.bf16.msra.mxu0 %v3522
        %3544 = vmatprep.subr.bf16.mxu0 0
        %3545 = vmatpush1.bf16.msra.mxu0 %v3523
        %3546 = vmatprep.subr.bf16.mxu0 0
        %3547 = vmatpush1.bf16.msra.mxu0 %v3524
        %3548 = vmatprep.subr.bf16.mxu0 0
        %3549 = vmatpush1.bf16.msra.mxu0 %v3525
        %3550 = vmatprep.subr.bf16.mxu0 0
        %3551 = vmatpush1.bf16.msra.mxu0 0
        %3552 = vmatprep.subr.bf16.mxu0 0
        %3553 = vmatpush1.bf16.msra.mxu0 0
        %3554 = vmatprep.subr.bf16.mxu0 0
        %3555 = vmatpush1.bf16.msra.mxu0 0
        %3556 = vmatprep.subr.bf16.mxu0 0
        %3557 = vmatpush1.bf16.msra.mxu0 0
        %3558 = vmatprep.subr.bf16.mxu0 0
        %3559 = vmatpush1.bf16.msra.mxu0 0
        %3560 = vmatprep.subr.bf16.mxu0 0
        %3561 = vmatpush1.bf16.msra.mxu0 0
        %3562 = vmatprep.subr.bf16.mxu0 0
        %3563 = vmatpush1.bf16.msra.mxu0 0
        %3564 = vmatprep.subr.bf16.mxu0 0
        %3565 = vmatpush1.bf16.msra.mxu0 0
        %3566 = vmatprep.mubr.bf16.mxu0 0
        %3567 = vmatmul.mubr.bf16.gmra.mrb[0].mxu0 %v3477
        %v3568 = vpop.f32.mrb[0].mxu0
        %v3569 = vadd.f32 %v3484, %v3568
        %v3570 = vpop.f32.mrb[0].mxu0
        %v3571 = vpop.f32.mrb[0].mxu0
        %v3572 = vpop.f32.mrb[0].mxu0
        %3573 = vdwg.mxu0
        %v3574 = vxor.u32 %v3569, 2147483648
        %v3575 = vmul.f32 %v3574, 1.442695
        %v3576 = vpow.pop %v3575
        %v3577 = vadd.f32 %v3576, 1.0
        %v3578 = vrcp.pop %v3577
        %v3579 = vmul.f32 1.0, %v3578
        %v3580 = vmul.f32 %v3569, %v3579
        %s3581 = scalar_lea.vmem %s21, 64
        %v3582 = vld [vmem:[%s3581] sm:$0xf]
        %v3583 = vld [vmem:[%s3581 + $0x4] sm:$0xf]
        %v3584 = vld [vmem:[%s3581 + $0x8] sm:$0xf]
        %v3585 = vld [vmem:[%s3581 + $0xc] sm:$0xf]
        %v3586 = vld [vmem:[%s3581 + $0x10] sm:$0xf]
        %v3587 = vld [vmem:[%s3581 + $0x14] sm:$0xf]
        %v3588 = vld [vmem:[%s3581 + $0x18] sm:$0xf]
        %v3589 = vld [vmem:[%s3581 + $0x1c] sm:$0xf]
        %v3590 = vpack.c.bf16 %v3580, %v3580
        %s3591 = scalar_lea.vmem %s22, 2
        %v3592 = vld [vmem:[%s3591] sm:$0x1]
        %v3594 = vlaneseq
        %v3595 = vshrl.u32 %v3594, 7
        %v3596 = vsub.s32 0, %v3595
        %v3597 = vrot.slane %v3592, %v3596
        %v3607 = vunpack.c.l.b16 %v3582
        %v3608 = vunpack.c.l.b16 %v3583
        %v3609 = vunpack.c.l.b16 %v3584
        %v3610 = vunpack.c.l.b16 %v3585
        %v3611 = vunpack.c.l.b16 %v3586
        %v3612 = vunpack.c.l.b16 %v3587
        %v3613 = vunpack.c.l.b16 %v3588
        %v3614 = vunpack.c.l.b16 %v3589
        %v3615 = vpack.c.b16 %v3608, %v3607
        %v3616 = vpack.c.b16 %v3610, %v3609
        %v3617 = vpack.c.b16 %v3612, %v3611
        %v3618 = vpack.c.b16 %v3614, %v3613
        %v3624 = vsel %vm1279, %v3590, 0
        %3626 = vmatprep.subr.bf16.mxu0 0
        %3627 = vmatpush1.bf16.msra.mxu0 %v3615
        %3628 = vmatprep.subr.bf16.mxu0 0
        %3629 = vmatpush1.bf16.msra.mxu0 %v3616
        %3630 = vmatprep.subr.bf16.mxu0 0
        %3631 = vmatpush1.bf16.msra.mxu0 %v3617
        %3632 = vmatprep.subr.bf16.mxu0 0
        %3633 = vmatpush1.bf16.msra.mxu0 %v3618
        %3634 = vmatprep.subr.bf16.mxu0 0
        %3635 = vmatpush1.bf16.msra.mxu0 0
        %3636 = vmatprep.subr.bf16.mxu0 0
        %3637 = vmatpush1.bf16.msra.mxu0 0
        %3638 = vmatprep.subr.bf16.mxu0 0
        %3639 = vmatpush1.bf16.msra.mxu0 0
        %3640 = vmatprep.subr.bf16.mxu0 0
        %3641 = vmatpush1.bf16.msra.mxu0 0
        %3642 = vmatprep.subr.bf16.mxu0 0
        %3643 = vmatpush1.bf16.msra.mxu0 0
        %3644 = vmatprep.subr.bf16.mxu0 0
        %3645 = vmatpush1.bf16.msra.mxu0 0
        %3646 = vmatprep.subr.bf16.mxu0 0
        %3647 = vmatpush1.bf16.msra.mxu0 0
        %3648 = vmatprep.subr.bf16.mxu0 0
        %3649 = vmatpush1.bf16.msra.mxu0 0
        %3650 = vmatprep.subr.bf16.mxu0 0
        %3651 = vmatpush1.bf16.msra.mxu0 0
        %3652 = vmatprep.subr.bf16.mxu0 0
        %3653 = vmatpush1.bf16.msra.mxu0 0
        %3654 = vmatprep.subr.bf16.mxu0 0
        %3655 = vmatpush1.bf16.msra.mxu0 0
        %3656 = vmatprep.subr.bf16.mxu0 0
        %3657 = vmatpush1.bf16.msra.mxu0 0
        %3658 = vmatprep.mubr.bf16.mxu0 0
        %3659 = vmatmul.mubr.bf16.gmra.mrb[0].mxu0 %v3624
        %v3660 = vpop.f32.mrb[0].mxu0
        %v3661 = vadd.f32 %v3597, %v3660
        %v3662 = vpop.f32.mrb[0].mxu0
        %v3663 = vpop.f32.mrb[0].mxu0
        %v3664 = vpop.f32.mrb[0].mxu0
        %3665 = vdwg.mxu0
        %v3666 = vsel %vm1106, %v3452, 0.0
        %v3667 = vadd.f32 %v2819, %v3666
        %v3668 = vadd.f32 %v3667, %v3661
        %v3669 = vld [vmem:[%s23] sm:$0xf]
        %v3670 = vld [vmem:[%s23 + $0x4] sm:$0xf]
        %v3671 = vld [vmem:[%s23 + $0x8] sm:$0xf]
        %v3672 = vld [vmem:[%s23 + $0xc] sm:$0xf]
        %v3673 = vld [vmem:[%s23 + $0x10] sm:$0xf]
        %v3674 = vld [vmem:[%s23 + $0x14] sm:$0xf]
        %v3675 = vld [vmem:[%s23 + $0x18] sm:$0xf]
        %v3676 = vld [vmem:[%s23 + $0x1c] sm:$0xf]
        %v3677 = vpack.c.bf16 %v3668, %v3668
        %v3678 = vld [vmem:[%s24] sm:$0x1]
        %v3680 = vlaneseq
        %v3681 = vshrl.u32 %v3680, 7
        %v3682 = vsub.s32 0, %v3681
        %v3683 = vrot.slane %v3678, %v3682
        %v3693 = vunpack.c.l.b16 %v3669
        %v3694 = vunpack.c.l.b16 %v3670
        %v3695 = vunpack.c.l.b16 %v3671
        %v3696 = vunpack.c.l.b16 %v3672
        %v3697 = vunpack.c.l.b16 %v3673
        %v3698 = vunpack.c.l.b16 %v3674
        %v3699 = vunpack.c.l.b16 %v3675
        %v3700 = vunpack.c.l.b16 %v3676
        %v3701 = vpack.c.b16 %v3694, %v3693
        %v3702 = vpack.c.b16 %v3696, %v3695
        %v3703 = vpack.c.b16 %v3698, %v3697
        %v3704 = vpack.c.b16 %v3700, %v3699
        %v3710 = vsel %vm1279, %v3677, 0
        %3712 = vmatprep.subr.bf16.mxu0 0
        %3713 = vmatpush1.bf16.msra.mxu0 %v3701
        %3714 = vmatprep.subr.bf16.mxu0 0
        %3715 = vmatpush1.bf16.msra.mxu0 %v3702
        %3716 = vmatprep.subr.bf16.mxu0 0
        %3717 = vmatpush1.bf16.msra.mxu0 %v3703
        %3718 = vmatprep.subr.bf16.mxu0 0
        %3719 = vmatpush1.bf16.msra.mxu0 %v3704
        %3720 = vmatprep.subr.bf16.mxu0 0
        %3721 = vmatpush1.bf16.msra.mxu0 0
        %3722 = vmatprep.subr.bf16.mxu0 0
        %3723 = vmatpush1.bf16.msra.mxu0 0
        %3724 = vmatprep.subr.bf16.mxu0 0
        %3725 = vmatpush1.bf16.msra.mxu0 0
        %3726 = vmatprep.subr.bf16.mxu0 0
        %3727 = vmatpush1.bf16.msra.mxu0 0
        %3728 = vmatprep.subr.bf16.mxu0 0
        %3729 = vmatpush1.bf16.msra.mxu0 0
        %3730 = vmatprep.subr.bf16.mxu0 0
        %3731 = vmatpush1.bf16.msra.mxu0 0
        %3732 = vmatprep.subr.bf16.mxu0 0
        %3733 = vmatpush1.bf16.msra.mxu0 0
        %3734 = vmatprep.subr.bf16.mxu0 0
        %3735 = vmatpush1.bf16.msra.mxu0 0
        %3736 = vmatprep.subr.bf16.mxu0 0
        %3737 = vmatpush1.bf16.msra.mxu0 0
        %3738 = vmatprep.subr.bf16.mxu0 0
        %3739 = vmatpush1.bf16.msra.mxu0 0
        %3740 = vmatprep.subr.bf16.mxu0 0
        %3741 = vmatpush1.bf16.msra.mxu0 0
        %3742 = vmatprep.subr.bf16.mxu0 0
        %3743 = vmatpush1.bf16.msra.mxu0 0
        %3744 = vmatprep.mubr.bf16.mxu0 0
        %3745 = vmatmul.mubr.bf16.gmra.mrb[0].mxu0 %v3710
        %v3746 = vpop.f32.mrb[0].mxu0
        %v3747 = vadd.f32 %v3683, %v3746
        %v3748 = vpop.f32.mrb[0].mxu0
        %v3749 = vpop.f32.mrb[0].mxu0
        %v3750 = vpop.f32.mrb[0].mxu0
        %3751 = vdwg.mxu0
        %v3752 = vxor.u32 %v3747, 2147483648
        %v3753 = vmul.f32 %v3752, 1.442695
        %v3754 = vpow.pop %v3753
        %v3755 = vadd.f32 %v3754, 1.0
        %v3756 = vrcp.pop %v3755
        %v3757 = vmul.f32 1.0, %v3756
        %v3758 = vmul.f32 %v3747, %v3757
        %v3759 = vld [vmem:[%s25] sm:$0xf]
        %v3760 = vld [vmem:[%s25 + $0x4] sm:$0xf]
        %v3761 = vld [vmem:[%s25 + $0x8] sm:$0xf]
        %v3762 = vld [vmem:[%s25 + $0xc] sm:$0xf]
        %v3763 = vld [vmem:[%s25 + $0x10] sm:$0xf]
        %v3764 = vld [vmem:[%s25 + $0x14] sm:$0xf]
        %v3765 = vld [vmem:[%s25 + $0x18] sm:$0xf]
        %v3766 = vld [vmem:[%s25 + $0x1c] sm:$0xf]
        %v3767 = vpack.c.bf16 %v3758, %v3758
        %v3768 = vld [vmem:[%s26] sm:$0x1]
        %v3770 = vlaneseq
        %v3771 = vshrl.u32 %v3770, 7
        %v3772 = vsub.s32 0, %v3771
        %v3773 = vrot.slane %v3768, %v3772
        %v3783 = vunpack.c.l.b16 %v3759
        %v3784 = vunpack.c.l.b16 %v3760
        %v3785 = vunpack.c.l.b16 %v3761
        %v3786 = vunpack.c.l.b16 %v3762
        %v3787 = vunpack.c.l.b16 %v3763
        %v3788 = vunpack.c.l.b16 %v3764
        %v3789 = vunpack.c.l.b16 %v3765
        %v3790 = vunpack.c.l.b16 %v3766
        %v3791 = vpack.c.b16 %v3784, %v3783
        %v3792 = vpack.c.b16 %v3786, %v3785
        %v3793 = vpack.c.b16 %v3788, %v3787
        %v3794 = vpack.c.b16 %v3790, %v3789
        %v3800 = vsel %vm1279, %v3767, 0
        %3802 = vmatprep.subr.bf16.mxu0 0
        %3803 = vmatpush1.bf16.msra.mxu0 %v3791
        %3804 = vmatprep.subr.bf16.mxu0 0
        %3805 = vmatpush1.bf16.msra.mxu0 %v3792
        %3806 = vmatprep.subr.bf16.mxu0 0
        %3807 = vmatpush1.bf16.msra.mxu0 %v3793
        %3808 = vmatprep.subr.bf16.mxu0 0
        %3809 = vmatpush1.bf16.msra.mxu0 %v3794
        %3810 = vmatprep.subr.bf16.mxu0 0
        %3811 = vmatpush1.bf16.msra.mxu0 0
        %3812 = vmatprep.subr.bf16.mxu0 0
        %3813 = vmatpush1.bf16.msra.mxu0 0
        %3814 = vmatprep.subr.bf16.mxu0 0
        %3815 = vmatpush1.bf16.msra.mxu0 0
        %3816 = vmatprep.subr.bf16.mxu0 0
        %3817 = vmatpush1.bf16.msra.mxu0 0
        %3818 = vmatprep.subr.bf16.mxu0 0
        %3819 = vmatpush1.bf16.msra.mxu0 0
        %3820 = vmatprep.subr.bf16.mxu0 0
        %3821 = vmatpush1.bf16.msra.mxu0 0
        %3822 = vmatprep.subr.bf16.mxu0 0
        %3823 = vmatpush1.bf16.msra.mxu0 0
        %3824 = vmatprep.subr.bf16.mxu0 0
        %3825 = vmatpush1.bf16.msra.mxu0 0
        %3826 = vmatprep.subr.bf16.mxu0 0
        %3827 = vmatpush1.bf16.msra.mxu0 0
        %3828 = vmatprep.subr.bf16.mxu0 0
        %3829 = vmatpush1.bf16.msra.mxu0 0
        %3830 = vmatprep.subr.bf16.mxu0 0
        %3831 = vmatpush1.bf16.msra.mxu0 0
        %3832 = vmatprep.subr.bf16.mxu0 0
        %3833 = vmatpush1.bf16.msra.mxu0 0
        %3834 = vmatprep.mubr.bf16.mxu0 0
        %3835 = vmatmul.mubr.bf16.gmra.mrb[0].mxu0 %v3800
        %v3836 = vpop.f32.mrb[0].mxu0
        %v3837 = vadd.f32 %v3773, %v3836
        %v3838 = vpop.f32.mrb[0].mxu0
        %v3839 = vpop.f32.mrb[0].mxu0
        %v3840 = vpop.f32.mrb[0].mxu0
        %3841 = vdwg.mxu0
        %vm3842 = vcmask 195584
        %3843 = vst.msk [vmem:[%s865] sm:$0xff] %vm3842, %v3837
        %s3844 = sand.u32 %s641, 1
        %s3845 = scalar_lea.sflag [#allocation3], %s3844
        %s3846 = sand.u32 %s641, 1
        %s3847 = smul.addr %s3846, 8
        %s3848 = scalar_lea.vmem [#allocation2], %s3847
        // Predicated region
        $region129: #{tpu_custom_call.1} parent=127 // pred_check
          %p3849 = pneg %p651
        $region130: #{tpu_custom_call.1} parent=127 // pred_check_branch
          %3851 = sbr.rel (%p3849) target = $region132
        $region131: #{tpu_custom_call.1} parent=127 // pred_region
          %s3853 = ssub.s32 128, 128
          %3854 = vsyncadd %s3845, %s3853
          %s3855 = smul.addr %s41, 128
          %s3856 = scalar_lea.hbm %s27, %s3855
          %s3858 = sshll.u32 %s3848, 4
          %s3859 = int_to_ptr.vmem [resolvable:$true] %s3858
          %3861 = dma.vmem_to_hbm [thread:$0]  %s3859, 128, %s3856, %s3845
        $region132: #{tpu_custom_call.1} parent=127 // pred_fallthru
          _
      $region128: #{tpu_custom_call.1} parent=5 // pred_fallthru
        _
      %p3862 = scmp.le.s32.totalorder 2, %s36
      // Predicated region
      $region133: #{tpu_custom_call.1} parent=5 // pred_check
        %p3863 = pneg %p3862
      $region134: #{tpu_custom_call.1} parent=5 // pred_check_branch
        %3865 = sbr.rel (%p3863) target = $region136
      $region135: #{tpu_custom_call.1} parent=5 // pred_region
        %s3866 = ssub.s32 %s36, 2
        // Predicated region
        $region137: #{tpu_custom_call.1} parent=135 // pred_check
          %p3867 = pneg %p657
        $region138: #{tpu_custom_call.1} parent=135 // pred_check_branch
          %3869 = sbr.rel (%p3867) target = $region140
        $region139: #{tpu_custom_call.1} parent=135 // pred_region
          %s3870 = sand.u32 %s642, 1
          %s3871 = scalar_lea.sflag [#allocation3], %s3870
          %s3872 = sand.u32 %s642, 1
          %s3873 = smul.addr %s3872, 8
          %s3874 = scalar_lea.vmem [#allocation2], %s3873
          %3875 = dma.done %s3871, 128
        $region140: #{tpu_custom_call.1} parent=135 // pred_fallthru
          _
      $region136: #{tpu_custom_call.1} parent=5 // pred_fallthru
        _
    $region6: #{tpu_custom_call.1} parent=1 // loop_footer
      %s40 = sadd.s32 1, %s36
    $region7: #{tpu_custom_call.1} parent=1 // loop_footer_branch
      %35 = sbr.rel target = $region3
    $region8: #{tpu_custom_call.1} parent=1 // loop_exit
      _
    %3876 = vsyncpa [#allocation3], 1
    %s3877 = scalar_lea.sflag [#allocation3], 1
    %3878 = vsyncpa %s3877, 1

</llo_original>
